<compile_context>
chip_gen: v7x
topology: tpu7x:2x2x1
jax: 0.10.0
libtpu: 0.0.40
codegen_flags: <defaults>
</compile_context>

<pallas_src>
import functools

import jax
import jax.numpy as jnp
from jax.experimental import pallas as pl
from jax.experimental.pallas import tpu as pltpu


def _round_up(x, m):
    return (x + m - 1) // m * m


def _vq_kernel(compute_dists, x_ref, cb_ref, c2_ref, embed_ref, idx_ref, *rest):
    # x_ref:     (tn, D)   input token tile (f32)
    # cb_ref:    (Vp, D)   codebook, V padded to a multiple of 128 with zero rows
    # c2_ref:    (1, Vp)   precomputed ||c||^2 (padded rows hold a huge value)
    # embed_ref: (tn, D)   quantized embeddings
    # idx_ref:   (tn, 1)   argmin code indices (int32)
    # rest[0]:   (tn, Vp)  euclidean distances, only when compute_dists
    x = x_ref[...]
    cb = cb_ref[...]
    c2 = c2_ref[...]

    # Cross term on the MXU, contracting the shared D axis of (tn, D) and
    # (Vp, D) directly -- no in-kernel codebook transpose.
    xc = jax.lax.dot_general(
        x, cb,
        dimension_numbers=(((1,), (1,)), ((), ())),
        preferred_element_type=jnp.float32)                  # (tn, Vp)

    # argmin over the monotone surrogate ||c||^2 - 2 x.c (invariant to adding
    # ||x||^2 and to sqrt); padded codebook rows carry a huge c2 so they never
    # win.  First-minimum index, like torch.argmin.
    sur = c2 - 2.0 * xc                                      # (tn, Vp)
    vp = sur.shape[-1]
    col = jax.lax.broadcasted_iota(jnp.int32, sur.shape, 1)  # (tn, Vp)
    smin = jnp.min(sur, axis=-1, keepdims=True)              # (tn, 1)
    idx = jnp.min(jnp.where(sur == smin, col, vp), axis=-1, keepdims=True)
    idx_ref[...] = idx.astype(jnp.int32)

    # Codebook gather expressed as one-hot @ codebook (MXU).
    onehot = (col == idx).astype(jnp.float32)                # (tn, Vp)
    embed_ref[...] = jnp.dot(
        onehot, cb, preferred_element_type=jnp.float32).astype(embed_ref.dtype)

    if compute_dists:
        dist_ref = rest[0]
        x2 = jnp.sum(x * x, axis=-1, keepdims=True)          # (tn, 1)
        d = jnp.sqrt(jnp.maximum(sur + x2, 0.0))             # torch.cdist, p=2
        dist_ref[...] = d.astype(dist_ref.dtype)


def _vq_flat(x_flat, codebook, *, return_dists=False, tile_n=1024):
    """x_flat: (N, D) float32, codebook: (V, D) float32."""
    N, D = x_flat.shape
    V, Dc = codebook.shape
    assert D == Dc

    # Pad the vocab axis to a lane multiple so the (tn, Vp) distance tile, the
    # MXU N-dimension and the one-hot K-dimension stay 128-aligned.  Padded
    # rows are zero in the codebook and get a huge squared norm so the argmin
    # never selects them; outputs are sliced back to V / N below.
    Vp = _round_up(V, 128)
    cb_p = jnp.zeros((Vp, D), jnp.float32).at[:V, :].set(codebook.astype(jnp.float32))
    c2 = jnp.sum(cb_p * cb_p, axis=-1)
    c2 = jnp.where(jnp.arange(Vp) < V, c2, jnp.float32(1e30)).reshape(1, Vp)

    # Large token tile to amortize the ~0.35us/grid-step overhead, clamped so
    # the double-buffered working set fits the tightest scoped-VMEM budget
    # (v5e 16 MiB default / v7x 64 MiB physical).  Note: for tiny demo inputs
    # the grid may collapse to one step; on v7x a >=2-step grid keeps both
    # TensorCores busy for realistic N.
    tile_n = max(256, min(tile_n, _round_up(N, 256)))

    def vmem_est(tn):
        per_step = 2 * (2 * tn * D + tn) * 4                 # x, embed, idx (dbl-buffered)
        if return_dists:
            per_step += 2 * tn * Vp * 4                      # dists tile
        return per_step + 2 * (Vp * D + Vp) * 4              # codebook + c2

    while vmem_est(tile_n) > 48 * 1024 * 1024 and tile_n > 256:
        tile_n //= 2

    N_pad = _round_up(N, tile_n)
    if N_pad != N:
        x_flat = jnp.zeros((N_pad, D), jnp.float32).at[:N, :].set(x_flat)
    grid = (N_pad // tile_n,)

    out_shape = [
        jax.ShapeDtypeStruct((N_pad, D), jnp.float32),       # embed
        jax.ShapeDtypeStruct((N_pad, 1), jnp.int32),         # idx
    ]
    out_specs = [
        pl.BlockSpec((tile_n, D), lambda i: (i, 0)),
        pl.BlockSpec((tile_n, 1), lambda i: (i, 0)),
    ]
    if return_dists:
        out_shape.append(jax.ShapeDtypeStruct((N_pad, Vp), jnp.float32))
        out_specs.append(pl.BlockSpec((tile_n, Vp), lambda i: (i, 0)))

    est = vmem_est(tile_n)
    vmem_limit = None
    if est > 12 * 1024 * 1024:
        vmem_limit = int(min(2 * est, 64 * 1024 * 1024))

    outs = pl.pallas_call(
        functools.partial(_vq_kernel, return_dists),
        out_shape=tuple(out_shape),
        grid_spec=pltpu.PrefetchScalarGridSpec(
            num_scalar_prefetch=0,
            grid=grid,
            in_specs=[
                pl.BlockSpec((tile_n, D), lambda i: (i, 0)),
                # constant index_maps: codebook + norms are fetched once and
                # stay resident across the whole grid.
                pl.BlockSpec((Vp, D), lambda i: (0, 0)),
                pl.BlockSpec((1, Vp), lambda i: (0, 0)),
            ],
            out_specs=out_specs,
        ),
        compiler_params=pltpu.CompilerParams(
            dimension_semantics=("parallel",),
            vmem_limit_bytes=vmem_limit,
        ),
    )(x_flat.astype(jnp.float32), cb_p, c2)

    embed = outs[0][:N]
    idx = outs[1][:N, 0]
    if return_dists:
        return embed, idx, outs[2][:N, :V]
    return embed, idx, None


class VQLayer:
    """JAX/Pallas port of rsrch.nn.vq.VQLayer (inference forward)."""

    def __init__(self, vocab_size, embed_dim, dim=-1, replace_after=32, key=None):
        assert dim < 0
        self.vocab_size = vocab_size
        self.embed_dim = embed_dim
        self.dim = dim
        self.replace_after = replace_after
        if key is None:
            key = jax.random.PRNGKey(0)
        # Deterministic synthetic codebook (module's nn.Parameter(empty(V, D))).
        self.codebook = jax.random.normal(
            key, (vocab_size, embed_dim), dtype=jnp.float32)
        if replace_after is not None:
            self._no_use_streak = jnp.zeros((vocab_size,), dtype=jnp.int32)
            self._is_used = jnp.zeros((vocab_size,), dtype=jnp.bool_)
        # TODO(synk): k-means codebook init (_init) and random code replacement
        # (_replace_hook) are training-time, data-dependent host-side logic with
        # no clean Pallas equivalent; forward here matches the post-init path
        # (streak buffer starts at zero so no replacement would occur anyway).

    def __call__(self, x, return_dists=False):
        # moveaxis(dim, -1) + flatten(0, -2)
        x_cl = jnp.moveaxis(x, self.dim, -1)
        batch_shape = x_cl.shape[:-1]
        x_flat = x_cl.reshape(-1, self.embed_dim).astype(jnp.float32)

        embed_flat, idx_flat, dists_flat = _vq_flat(
            x_flat, self.codebook, return_dists=return_dists)

        # Usage-tracking buffers.  The torch module does
        #   _is_used.fill_(False); _is_used[idxes] = True
        # i.e. a fresh per-call mask, so overwriting (not OR-ing) is correct.
        if self.replace_after is not None:
            is_used = jnp.zeros((self.vocab_size,), jnp.bool_).at[idx_flat].set(True)
            self._is_used = is_used
            self._no_use_streak = jnp.where(is_used, 0, self._no_use_streak + 1)

        idxes = idx_flat.reshape(batch_shape)
        embed = jnp.moveaxis(
            embed_flat.reshape(*batch_shape, self.embed_dim), -1, self.dim)
        if return_dists:
            dists = dists_flat.reshape(*batch_shape, self.vocab_size)
            return embed, idxes, dists
        return embed, idxes

    def gather(self, idx):
        return jnp.moveaxis(self.codebook[idx], -1, self.dim)


def _check(layer, x, dim):
    """Run both kernel variants and compare against a pure-JAX reference."""
    embed, idxes, dists = layer(x, return_dists=True)
    jax.block_until_ready((embed, idxes, dists))

    x_flat = jnp.moveaxis(x, dim, -1).reshape(-1, layer.embed_dim)
    n = x_flat.shape[0]
    ref_d = jnp.sqrt(jnp.maximum(
        jnp.sum((x_flat[:, None, :] - layer.codebook[None, :, :]) ** 2, -1), 0.0))
    idx_flat = idxes.reshape(-1)

    # chosen code achieves the minimum distance (robust to fp near-ties)
    picked = ref_d[jnp.arange(n), idx_flat]
    assert bool(jnp.all(picked <= ref_d.min(-1) + 1e-5))
    assert bool(jnp.allclose(dists.reshape(-1, layer.vocab_size), ref_d, atol=1e-4))
    ref_embed = layer.codebook[idx_flat]
    got_embed = jnp.moveaxis(embed, dim, -1).reshape(-1, layer.embed_dim)
    assert bool(jnp.allclose(got_embed, ref_embed, atol=1e-5))

    # no-dists fast path must agree with the dists path
    embed2, idxes2 = layer(x)
    jax.block_until_ready((embed2, idxes2))
    assert bool(jnp.array_equal(idxes2, idxes))
    assert bool(jnp.allclose(embed2, embed, atol=1e-6))
    return embed, idxes, dists


if __name__ == "__main__":
    key = jax.random.PRNGKey(0)
    k_cb, k_x, k_x2 = jax.random.split(key, 3)

    # NCHW-style input: batch=2, channels(embed_dim)=4, spatial=16x16, dim=-3
    vocab_size, embed_dim = 16, 4
    layer = VQLayer(vocab_size, embed_dim, dim=-3, replace_after=32, key=k_cb)

    x = jax.random.normal(k_x, (2, 4, 16, 16), dtype=jnp.float32)
    embed, idxes, dists = _check(layer, x, dim=-3)
    assert embed.shape == (2, 4, 16, 16)
    assert idxes.shape == (2, 16, 16)
    assert dists.shape == (2, 16, 16, vocab_size)
    assert 0 <= int(idxes.min()) and int(idxes.max()) < vocab_size

    # Non-tile-divisible token count exercises the N-padding / masking path
    # (replaces the old `assert N % tile_n == 0`).
    x_odd = jax.random.normal(k_x2, (2, 4, 15, 15), dtype=jnp.float32)
    embed_o, idxes_o, dists_o = _check(layer, x_odd, dim=-3)
    assert embed_o.shape == (2, 4, 15, 15)
    assert idxes_o.shape == (2, 15, 15)
    assert dists_o.shape == (2, 15, 15, vocab_size)

    print("KERNEL_OK")
</pallas_src>

<mosaic_0001>
module attributes {stable_mosaic.version = 11 : i64} {
  func.func @_vq_kernel(%arg0: i32, %arg1: memref<512x4xf32, #tpu.memory_space<vmem>>, %arg2: memref<128x4xf32, #tpu.memory_space<vmem>>, %arg3: memref<1x128xf32, #tpu.memory_space<vmem>>, %arg4: memref<512x4xf32, #tpu.memory_space<vmem>>, %arg5: memref<512x1xi32, #tpu.memory_space<vmem>>, %arg6: memref<512x128xf32, #tpu.memory_space<vmem>>) attributes {dimension_semantics = [#tpu.dimension_semantics<parallel>], iteration_bounds = array<i64: 1>, scalar_prefetch = 0 : i64, scratch_operands = 0 : i64, tpu.core_type = #tpu.core_type<tc>, window_params = [{transform_indices = @transform_0, window_bounds = array<i64: 512, 4>}, {pipeline_mode = #tpu.pipeline_mode<synchronous>, transform_indices = @transform_1, window_bounds = array<i64: 128, 4>}, {pipeline_mode = #tpu.pipeline_mode<synchronous>, transform_indices = @transform_2, window_bounds = array<i64: 1, 128>}, {transform_indices = @transform_3, window_bounds = array<i64: 512, 4>}, {transform_indices = @transform_4, window_bounds = array<i64: 512, 1>}, {transform_indices = @transform_5, window_bounds = array<i64: 512, 128>}]} {
    %c0 = arith.constant 0 : index
    %c0_0 = arith.constant 0 : index
    %0 = vector.load %arg1[%c0, %c0_0] : memref<512x4xf32, #tpu.memory_space<vmem>>, vector<512x4xf32>
    %c0_1 = arith.constant 0 : index
    %c0_2 = arith.constant 0 : index
    %1 = vector.load %arg2[%c0_1, %c0_2] : memref<128x4xf32, #tpu.memory_space<vmem>>, vector<128x4xf32>
    %c0_3 = arith.constant 0 : index
    %c0_4 = arith.constant 0 : index
    %2 = vector.load %arg3[%c0_3, %c0_4] : memref<1x128xf32, #tpu.memory_space<vmem>>, vector<1x128xf32>
    %cst = arith.constant dense<0.000000e+00> : vector<512x128xf32>
    %3 = tpu.matmul %0, %1, %cst {dimension_numbers = #tpu.dot_dimension_numbers<[1], [1], [0], [0], [0, 0, 1, 0], [], []>} : vector<512x4xf32>, vector<128x4xf32>, vector<512x128xf32> -> vector<512x128xf32>
    %cst_5 = arith.constant 2.000000e+00 : f32
    %4 = vector.broadcast %cst_5 : f32 to vector<512x128xf32>
    %5 = arith.mulf %4, %3 : vector<512x128xf32>
    %6 = vector.broadcast %2 : vector<1x128xf32> to vector<512x128xf32>
    %7 = arith.subf %6, %5 : vector<512x128xf32>
    %8 = tpu.iota {dimensions = array<i32: 1>} : vector<512x128xi32>
    %cst_6 = arith.constant dense<0x7F800000> : vector<512xf32>
    %9 = vector.multi_reduction <minimumf>, %7, %cst_6 [1] : vector<512x128xf32> to vector<512xf32>
    %10 = vector.shape_cast %9 : vector<512xf32> to vector<512x1xf32>
    %11 = vector.broadcast %10 : vector<512x1xf32> to vector<512x128xf32>
    %12 = arith.cmpf oeq, %7, %11 : vector<512x128xf32>
    %c128_i32 = arith.constant 128 : i32
    %13 = vector.broadcast %c128_i32 : i32 to vector<512x128xi32>
    %14 = arith.select %12, %8, %13 : vector<512x128xi1>, vector<512x128xi32>
    %cst_7 = arith.constant dense<2147483647> : vector<512xi32>
    %15 = vector.multi_reduction <minsi>, %14, %cst_7 [1] : vector<512x128xi32> to vector<512xi32>
    %16 = vector.shape_cast %15 : vector<512xi32> to vector<512x1xi32>
    %c0_8 = arith.constant 0 : index
    %c0_9 = arith.constant 0 : index
    %17 = vector.load %arg5[%c0_8, %c0_9] : memref<512x1xi32, #tpu.memory_space<vmem>>, vector<512x1xi32>
    tpu.vector_store %arg5[%c0_8, %c0_9], %16 {strides = array<i32>} : memref<512x1xi32, #tpu.memory_space<vmem>>, vector<512x1xi32>,
    %18 = vector.broadcast %16 : vector<512x1xi32> to vector<512x128xi32>
    %19 = arith.cmpi eq, %8, %18 : vector<512x128xi32>
    %20 = arith.extui %19 : vector<512x128xi1> to vector<512x128xi32>
    %21 = arith.sitofp %20 : vector<512x128xi32> to vector<512x128xf32>
    %cst_10 = arith.constant dense<0.000000e+00> : vector<512x4xf32>
    %22 = tpu.matmul %21, %1, %cst_10 {dimension_numbers = #tpu.dot_dimension_numbers<[1], [0], [0], [1], [0, 0, 1, 1], [], []>} : vector<512x128xf32>, vector<128x4xf32>, vector<512x4xf32> -> vector<512x4xf32>
    %c0_11 = arith.constant 0 : index
    %c0_12 = arith.constant 0 : index
    %23 = vector.load %arg4[%c0_11, %c0_12] : memref<512x4xf32, #tpu.memory_space<vmem>>, vector<512x4xf32>
    tpu.vector_store %arg4[%c0_11, %c0_12], %22 {strides = array<i32>} : memref<512x4xf32, #tpu.memory_space<vmem>>, vector<512x4xf32>,
    %24 = arith.mulf %0, %0 : vector<512x4xf32>
    %cst_13 = arith.constant dense<0.000000e+00> : vector<512xf32>
    %25 = vector.multi_reduction <add>, %24, %cst_13 [1] : vector<512x4xf32> to vector<512xf32>
    %26 = vector.shape_cast %25 : vector<512xf32> to vector<512x1xf32>
    %27 = vector.broadcast %26 : vector<512x1xf32> to vector<512x128xf32>
    %28 = arith.addf %7, %27 : vector<512x128xf32>
    %cst_14 = arith.constant 0.000000e+00 : f32
    %29 = vector.broadcast %cst_14 : f32 to vector<512x128xf32>
    %30 = arith.maximumf %28, %29 : vector<512x128xf32>
    %31 = math.sqrt %30 : vector<512x128xf32>
    %c0_15 = arith.constant 0 : index
    %c0_16 = arith.constant 0 : index
    %32 = vector.load %arg6[%c0_15, %c0_16] : memref<512x128xf32, #tpu.memory_space<vmem>>, vector<512x128xf32>
    tpu.vector_store %arg6[%c0_15, %c0_16], %31 {strides = array<i32>} : memref<512x128xf32, #tpu.memory_space<vmem>>, vector<512x128xf32>,
    return
  }
  func.func @transform_0(%arg0: i32) -> (i32, i32) {
    %c0_i32 = arith.constant 0 : i32
    %c0_i32_0 = arith.constant 0 : i32
    return %arg0, %c0_i32 : i32, i32
  }
  func.func @transform_1(%arg0: i32) -> (i32, i32) {
    %c0_i32 = arith.constant 0 : i32
    %c0_i32_0 = arith.constant 0 : i32
    %c0_i32_1 = arith.constant 0 : i32
    return %c0_i32, %c0_i32_0 : i32, i32
  }
  func.func @transform_2(%arg0: i32) -> (i32, i32) {
    %c0_i32 = arith.constant 0 : i32
    %c0_i32_0 = arith.constant 0 : i32
    %c0_i32_1 = arith.constant 0 : i32
    return %c0_i32, %c0_i32_0 : i32, i32
  }
  func.func @transform_3(%arg0: i32) -> (i32, i32) {
    %c0_i32 = arith.constant 0 : i32
    %c0_i32_0 = arith.constant 0 : i32
    return %arg0, %c0_i32 : i32, i32
  }
  func.func @transform_4(%arg0: i32) -> (i32, i32) {
    %c0_i32 = arith.constant 0 : i32
    %c0_i32_0 = arith.constant 0 : i32
    return %arg0, %c0_i32 : i32, i32
  }
  func.func @transform_5(%arg0: i32) -> (i32, i32) {
    %c0_i32 = arith.constant 0 : i32
    %c0_i32_0 = arith.constant 0 : i32
    return %arg0, %c0_i32 : i32, i32
  }
}

</mosaic_0001>

<llo_original>
// kernel: tpu_custom_call.1
$region0: #{tpu_custom_call.1}
  #allocation0 [shape = 'u32[]', space=smem, size = 0x4, offset = 0x4, fixed_abs, tag = 'smem constant byte address 0x4 - core index']
  #allocation1 [shape = 'u32[144,128]{1,0:T(1,128)}', space=vmem, size = 0x12000, scoped, tag = 'internal scratch']
  %s0 = inlined_call_operand.vmem [shape: f32[512,4], index: 0, kind: input, shape index: {}]
  %s1 = inlined_call_operand.vmem [shape: f32[128,4], index: 1, kind: input, shape index: {}]
  %s2 = inlined_call_operand.vmem [shape: f32[1,128], index: 2, kind: input, shape index: {}]
  %s3 = inlined_call_operand.vmem [shape: f32[512,4], index: 3, kind: output, shape index: {0}]
  %s4 = inlined_call_operand.vmem [shape: s32[512,1], index: 4, kind: output, shape index: {1}]
  %s5 = inlined_call_operand.hbm [shape: f32[512,128], index: 5, kind: output, shape index: {2}]
  %6 = xla_tuple %s3, %s4, %s5
  %s7 = sld [smem:[#allocation0]]
  $region38: #{tpu_custom_call.1} parent=0
    _
  %s9 = ssub.s32 1, %s7
  %s10 = scalar_select 0, %s9, %s7
  $region1: #{tpu_custom_call.1} parent=0
    #allocation2 [shape = 'u8[262144]{0}', space=vmem, size = 0x40000, scoped, tag = 'output window, operand 2, single buffered']
    #allocation3 [shape = 's32[1]{0}', space=sflag, size = 0x4, scoped, tag = 'scoped memory for tpu_custom_call.1']
    %11 = vsyncpa [#allocation3], 0
    // Predicated region
    $region2: #{tpu_custom_call.1} parent=1 // pred_check
      _
    $region3: #{tpu_custom_call.1} parent=1 // pred_check_branch
      %13 = sbr.rel (0) target = $region5
    $region4: #{tpu_custom_call.1} parent=1 // pred_region
      _
    $region5: #{tpu_custom_call.1} parent=1 // pred_fallthru
      _
    // Predicated region
    $region6: #{tpu_custom_call.1} parent=1 // pred_check
      _
    $region7: #{tpu_custom_call.1} parent=1 // pred_check_branch
      %15 = sbr.rel (0) target = $region9
    $region8: #{tpu_custom_call.1} parent=1 // pred_region
      _
    $region9: #{tpu_custom_call.1} parent=1 // pred_fallthru
      _
    // Predicated region
    $region10: #{tpu_custom_call.1} parent=1 // pred_check
      _
    $region11: #{tpu_custom_call.1} parent=1 // pred_check_branch
      %17 = sbr.rel (0) target = $region13
    $region12: #{tpu_custom_call.1} parent=1 // pred_region
      _
    $region13: #{tpu_custom_call.1} parent=1 // pred_fallthru
      _
    %v18 = vld [vmem:[%s0] sm:$0xff]
    %v19 = vld [vmem:[%s0 + $0x8] sm:$0xff]
    %v20 = vld [vmem:[%s0 + $0x10] sm:$0xff]
    %v21 = vld [vmem:[%s0 + $0x18] sm:$0xff]
    %v22 = vld [vmem:[%s0 + $0x20] sm:$0xff]
    %v23 = vld [vmem:[%s0 + $0x28] sm:$0xff]
    %v24 = vld [vmem:[%s0 + $0x30] sm:$0xff]
    %v25 = vld [vmem:[%s0 + $0x38] sm:$0xff]
    %v26 = vld [vmem:[%s0 + $0x40] sm:$0xff]
    %v27 = vld [vmem:[%s0 + $0x48] sm:$0xff]
    %v28 = vld [vmem:[%s0 + $0x50] sm:$0xff]
    %v29 = vld [vmem:[%s0 + $0x58] sm:$0xff]
    %v30 = vld [vmem:[%s0 + $0x60] sm:$0xff]
    %v31 = vld [vmem:[%s0 + $0x68] sm:$0xff]
    %v32 = vld [vmem:[%s0 + $0x70] sm:$0xff]
    %v33 = vld [vmem:[%s0 + $0x78] sm:$0xff]
    %v34 = vld [vmem:[%s0 + $0x80] sm:$0xff]
    %v35 = vld [vmem:[%s0 + $0x88] sm:$0xff]
    %v36 = vld [vmem:[%s0 + $0x90] sm:$0xff]
    %v37 = vld [vmem:[%s0 + $0x98] sm:$0xff]
    %v38 = vld [vmem:[%s0 + $0xa0] sm:$0xff]
    %v39 = vld [vmem:[%s0 + $0xa8] sm:$0xff]
    %v40 = vld [vmem:[%s0 + $0xb0] sm:$0xff]
    %v41 = vld [vmem:[%s0 + $0xb8] sm:$0xff]
    %v42 = vld [vmem:[%s0 + $0xc0] sm:$0xff]
    %v43 = vld [vmem:[%s0 + $0xc8] sm:$0xff]
    %v44 = vld [vmem:[%s0 + $0xd0] sm:$0xff]
    %v45 = vld [vmem:[%s0 + $0xd8] sm:$0xff]
    %v46 = vld [vmem:[%s0 + $0xe0] sm:$0xff]
    %v47 = vld [vmem:[%s0 + $0xe8] sm:$0xff]
    %v48 = vld [vmem:[%s0 + $0xf0] sm:$0xff]
    %v49 = vld [vmem:[%s0 + $0xf8] sm:$0xff]
    %v50 = vld [vmem:[%s0 + $0x100] sm:$0xff]
    %v51 = vld [vmem:[%s0 + $0x108] sm:$0xff]
    %v52 = vld [vmem:[%s0 + $0x110] sm:$0xff]
    %v53 = vld [vmem:[%s0 + $0x118] sm:$0xff]
    %v54 = vld [vmem:[%s0 + $0x120] sm:$0xff]
    %v55 = vld [vmem:[%s0 + $0x128] sm:$0xff]
    %v56 = vld [vmem:[%s0 + $0x130] sm:$0xff]
    %v57 = vld [vmem:[%s0 + $0x138] sm:$0xff]
    %v58 = vld [vmem:[%s0 + $0x140] sm:$0xff]
    %v59 = vld [vmem:[%s0 + $0x148] sm:$0xff]
    %v60 = vld [vmem:[%s0 + $0x150] sm:$0xff]
    %v61 = vld [vmem:[%s0 + $0x158] sm:$0xff]
    %v62 = vld [vmem:[%s0 + $0x160] sm:$0xff]
    %v63 = vld [vmem:[%s0 + $0x168] sm:$0xff]
    %v64 = vld [vmem:[%s0 + $0x170] sm:$0xff]
    %v65 = vld [vmem:[%s0 + $0x178] sm:$0xff]
    %v66 = vld [vmem:[%s0 + $0x180] sm:$0xff]
    %v67 = vld [vmem:[%s0 + $0x188] sm:$0xff]
    %v68 = vld [vmem:[%s0 + $0x190] sm:$0xff]
    %v69 = vld [vmem:[%s0 + $0x198] sm:$0xff]
    %v70 = vld [vmem:[%s0 + $0x1a0] sm:$0xff]
    %v71 = vld [vmem:[%s0 + $0x1a8] sm:$0xff]
    %v72 = vld [vmem:[%s0 + $0x1b0] sm:$0xff]
    %v73 = vld [vmem:[%s0 + $0x1b8] sm:$0xff]
    %v74 = vld [vmem:[%s0 + $0x1c0] sm:$0xff]
    %v75 = vld [vmem:[%s0 + $0x1c8] sm:$0xff]
    %v76 = vld [vmem:[%s0 + $0x1d0] sm:$0xff]
    %v77 = vld [vmem:[%s0 + $0x1d8] sm:$0xff]
    %v78 = vld [vmem:[%s0 + $0x1e0] sm:$0xff]
    %v79 = vld [vmem:[%s0 + $0x1e8] sm:$0xff]
    %v80 = vld [vmem:[%s0 + $0x1f0] sm:$0xff]
    %v81 = vld [vmem:[%s0 + $0x1f8] sm:$0xff]
    %v82 = vld [vmem:[%s1] sm:$0xff]
    %v83 = vld [vmem:[%s1 + $0x8] sm:$0xff]
    %v84 = vld [vmem:[%s1 + $0x10] sm:$0xff]
    %v85 = vld [vmem:[%s1 + $0x18] sm:$0xff]
    %v86 = vld [vmem:[%s1 + $0x20] sm:$0xff]
    %v87 = vld [vmem:[%s1 + $0x28] sm:$0xff]
    %v88 = vld [vmem:[%s1 + $0x30] sm:$0xff]
    %v89 = vld [vmem:[%s1 + $0x38] sm:$0xff]
    %v90 = vld [vmem:[%s1 + $0x40] sm:$0xff]
    %v91 = vld [vmem:[%s1 + $0x48] sm:$0xff]
    %v92 = vld [vmem:[%s1 + $0x50] sm:$0xff]
    %v93 = vld [vmem:[%s1 + $0x58] sm:$0xff]
    %v94 = vld [vmem:[%s1 + $0x60] sm:$0xff]
    %v95 = vld [vmem:[%s1 + $0x68] sm:$0xff]
    %v96 = vld [vmem:[%s1 + $0x70] sm:$0xff]
    %v97 = vld [vmem:[%s1 + $0x78] sm:$0xff]
    %v98 = vld [vmem:[%s2] sm:$0x1]
    %vm99 = vcmask 31744
    %v101 = vsel %vm99, %v18, 0
    %v104 = vsel %vm99, %v19, 0
    %v107 = vsel %vm99, %v20, 0
    %v110 = vsel %vm99, %v21, 0
    %v113 = vsel %vm99, %v22, 0
    %v116 = vsel %vm99, %v23, 0
    %v119 = vsel %vm99, %v24, 0
    %v122 = vsel %vm99, %v25, 0
    %v125 = vsel %vm99, %v26, 0
    %v128 = vsel %vm99, %v27, 0
    %v131 = vsel %vm99, %v28, 0
    %v134 = vsel %vm99, %v29, 0
    %v137 = vsel %vm99, %v30, 0
    %v140 = vsel %vm99, %v31, 0
    %v143 = vsel %vm99, %v32, 0
    %v146 = vsel %vm99, %v33, 0
    %v149 = vsel %vm99, %v34, 0
    %v152 = vsel %vm99, %v35, 0
    %v155 = vsel %vm99, %v36, 0
    %v158 = vsel %vm99, %v37, 0
    %v161 = vsel %vm99, %v38, 0
    %v164 = vsel %vm99, %v39, 0
    %v167 = vsel %vm99, %v40, 0
    %v170 = vsel %vm99, %v41, 0
    %v173 = vsel %vm99, %v42, 0
    %v176 = vsel %vm99, %v43, 0
    %v179 = vsel %vm99, %v44, 0
    %v182 = vsel %vm99, %v45, 0
    %v185 = vsel %vm99, %v46, 0
    %v188 = vsel %vm99, %v47, 0
    %v191 = vsel %vm99, %v48, 0
    %v194 = vsel %vm99, %v49, 0
    %v197 = vsel %vm99, %v50, 0
    %v200 = vsel %vm99, %v51, 0
    %v203 = vsel %vm99, %v52, 0
    %v206 = vsel %vm99, %v53, 0
    %v209 = vsel %vm99, %v54, 0
    %v212 = vsel %vm99, %v55, 0
    %v215 = vsel %vm99, %v56, 0
    %v218 = vsel %vm99, %v57, 0
    %v221 = vsel %vm99, %v58, 0
    %v224 = vsel %vm99, %v59, 0
    %v227 = vsel %vm99, %v60, 0
    %v230 = vsel %vm99, %v61, 0
    %v233 = vsel %vm99, %v62, 0
    %v236 = vsel %vm99, %v63, 0
    %v239 = vsel %vm99, %v64, 0
    %v242 = vsel %vm99, %v65, 0
    %v245 = vsel %vm99, %v66, 0
    %v248 = vsel %vm99, %v67, 0
    %v251 = vsel %vm99, %v68, 0
    %v254 = vsel %vm99, %v69, 0
    %v257 = vsel %vm99, %v70, 0
    %v260 = vsel %vm99, %v71, 0
    %v263 = vsel %vm99, %v72, 0
    %v266 = vsel %vm99, %v73, 0
    %v269 = vsel %vm99, %v74, 0
    %v272 = vsel %vm99, %v75, 0
    %v275 = vsel %vm99, %v76, 0
    %v278 = vsel %vm99, %v77, 0
    %v281 = vsel %vm99, %v78, 0
    %v284 = vsel %vm99, %v79, 0
    %v287 = vsel %vm99, %v80, 0
    %v290 = vsel %vm99, %v81, 0
    %v293 = vsel %vm99, %v82, 0
    %v296 = vsel %vm99, %v83, 0
    %v299 = vsel %vm99, %v84, 0
    %v302 = vsel %vm99, %v85, 0
    %v305 = vsel %vm99, %v86, 0
    %v308 = vsel %vm99, %v87, 0
    %v311 = vsel %vm99, %v88, 0
    %v314 = vsel %vm99, %v89, 0
    %v317 = vsel %vm99, %v90, 0
    %v320 = vsel %vm99, %v91, 0
    %v323 = vsel %vm99, %v92, 0
    %v326 = vsel %vm99, %v93, 0
    %v329 = vsel %vm99, %v94, 0
    %v332 = vsel %vm99, %v95, 0
    %v335 = vsel %vm99, %v96, 0
    %v338 = vsel %vm99, %v97, 0
    %340 = vmatprep.subr.mxu0 0.0
    %341 = vmatpush1.xpose.msra.mxu0 %v293
    %342 = vmatprep.subr.mxu0 0.0
    %343 = vmatpush1.xpose.msra.mxu0 %v296
    %344 = vmatprep.subr.mxu0 0.0
    %345 = vmatpush1.xpose.msra.mxu0 %v299
    %346 = vmatprep.subr.mxu0 0.0
    %347 = vmatpush1.xpose.msra.mxu0 %v302
    %348 = vmatprep.subr.mxu0 0.0
    %349 = vmatpush1.xpose.msra.mxu0 %v305
    %350 = vmatprep.subr.mxu0 0.0
    %351 = vmatpush1.xpose.msra.mxu0 %v308
    %352 = vmatprep.subr.mxu0 0.0
    %353 = vmatpush1.xpose.msra.mxu0 %v311
    %354 = vmatprep.subr.mxu0 0.0
    %355 = vmatpush1.xpose.msra.mxu0 %v314
    %356 = vmatprep.subr.mxu0 0.0
    %357 = vmatpush1.xpose.msra.mxu0 %v317
    %358 = vmatprep.subr.mxu0 0.0
    %359 = vmatpush1.xpose.msra.mxu0 %v320
    %360 = vmatprep.subr.mxu0 0.0
    %361 = vmatpush1.xpose.msra.mxu0 %v323
    %362 = vmatprep.subr.mxu0 0.0
    %363 = vmatpush1.xpose.msra.mxu0 %v326
    %364 = vmatprep.subr.mxu0 0.0
    %365 = vmatpush1.xpose.msra.mxu0 %v329
    %366 = vmatprep.subr.mxu0 0.0
    %367 = vmatpush1.xpose.msra.mxu0 %v332
    %368 = vmatprep.subr.mxu0 0.0
    %369 = vmatpush1.xpose.msra.mxu0 %v335
    %370 = vmatprep.subr.mxu0 0.0
    %371 = vmatpush1.xpose.msra.mxu0 %v338
    %372 = vmatprep.subr.mxu0 0.0
    %373 = vmatpush1.xpose.msra.mxu0 0.0
    %374 = vmatprep.subr.mxu0 0.0
    %375 = vmatpush1.xpose.msra.mxu0 0.0
    %376 = vmatprep.subr.mxu0 0.0
    %377 = vmatpush1.xpose.msra.mxu0 0.0
    %378 = vmatprep.subr.mxu0 0.0
    %379 = vmatpush1.xpose.msra.mxu0 0.0
    %380 = vmatprep.subr.mxu0 0.0
    %381 = vmatpush1.xpose.msra.mxu0 0.0
    %382 = vmatprep.subr.mxu0 0.0
    %383 = vmatpush1.xpose.msra.mxu0 0.0
    %384 = vmatprep.subr.mxu0 0.0
    %385 = vmatpush1.xpose.msra.mxu0 0.0
    %386 = vmatprep.subr.mxu0 0.0
    %387 = vmatpush1.xpose.msra.mxu0 0.0
    %388 = vmatprep.subr.mxu0 0.0
    %389 = vmatpush1.xpose.msra.mxu0 0.0
    %390 = vmatprep.subr.mxu0 0.0
    %391 = vmatpush1.xpose.msra.mxu0 0.0
    %392 = vmatprep.subr.mxu0 0.0
    %393 = vmatpush1.xpose.msra.mxu0 0.0
    %394 = vmatprep.subr.mxu0 0.0
    %395 = vmatpush1.xpose.msra.mxu0 0.0
    %396 = vmatprep.subr.mxu0 0.0
    %397 = vmatpush1.xpose.msra.mxu0 0.0
    %398 = vmatprep.subr.mxu0 0.0
    %399 = vmatpush1.xpose.msra.mxu0 0.0
    %400 = vmatprep.subr.mxu0 0.0
    %401 = vmatpush1.xpose.msra.mxu0 0.0
    %402 = vmatprep.subr.mxu0 0.0
    %403 = vmatpush1.xpose.msra.mxu0 0.0
    %404 = vmatprep.mubr.f32.mxu0 0.0
    %405 = vmatmul.mubr.f32.gmra.mrb[0].mxu0 %v101
    %v406 = vpop.f32.mrb[0].mxu0
    %v407 = vadd.f32 0.0, %v406
    %v408 = vpop.f32.mrb[0].mxu0
    %409 = vmatprep.mubr.f32.mxu0 0.0
    %410 = vmatmul.mubr.f32.gmra.mrb[0].mxu0 %v104
    %v411 = vpop.f32.mrb[0].mxu0
    %v412 = vadd.f32 0.0, %v411
    %v413 = vpop.f32.mrb[0].mxu0
    %414 = vmatprep.mubr.f32.mxu0 0.0
    %415 = vmatmul.mubr.f32.gmra.mrb[0].mxu0 %v107
    %v416 = vpop.f32.mrb[0].mxu0
    %v417 = vadd.f32 0.0, %v416
    %v418 = vpop.f32.mrb[0].mxu0
    %419 = vmatprep.mubr.f32.mxu0 0.0
    %420 = vmatmul.mubr.f32.gmra.mrb[0].mxu0 %v110
    %v421 = vpop.f32.mrb[0].mxu0
    %v422 = vadd.f32 0.0, %v421
    %v423 = vpop.f32.mrb[0].mxu0
    %424 = vmatprep.mubr.f32.mxu0 0.0
    %425 = vmatmul.mubr.f32.gmra.mrb[0].mxu0 %v113
    %v426 = vpop.f32.mrb[0].mxu0
    %v427 = vadd.f32 0.0, %v426
    %v428 = vpop.f32.mrb[0].mxu0
    %429 = vmatprep.mubr.f32.mxu0 0.0
    %430 = vmatmul.mubr.f32.gmra.mrb[0].mxu0 %v116
    %v431 = vpop.f32.mrb[0].mxu0
    %v432 = vadd.f32 0.0, %v431
    %v433 = vpop.f32.mrb[0].mxu0
    %434 = vmatprep.mubr.f32.mxu0 0.0
    %435 = vmatmul.mubr.f32.gmra.mrb[0].mxu0 %v119
    %v436 = vpop.f32.mrb[0].mxu0
    %v437 = vadd.f32 0.0, %v436
    %v438 = vpop.f32.mrb[0].mxu0
    %439 = vmatprep.mubr.f32.mxu0 0.0
    %440 = vmatmul.mubr.f32.gmra.mrb[0].mxu0 %v122
    %v441 = vpop.f32.mrb[0].mxu0
    %v442 = vadd.f32 0.0, %v441
    %v443 = vpop.f32.mrb[0].mxu0
    %444 = vmatprep.mubr.f32.mxu0 0.0
    %445 = vmatmul.mubr.f32.gmra.mrb[0].mxu0 %v125
    %v446 = vpop.f32.mrb[0].mxu0
    %v447 = vadd.f32 0.0, %v446
    %v448 = vpop.f32.mrb[0].mxu0
    %449 = vmatprep.mubr.f32.mxu0 0.0
    %450 = vmatmul.mubr.f32.gmra.mrb[0].mxu0 %v128
    %v451 = vpop.f32.mrb[0].mxu0
    %v452 = vadd.f32 0.0, %v451
    %v453 = vpop.f32.mrb[0].mxu0
    %454 = vmatprep.mubr.f32.mxu0 0.0
    %455 = vmatmul.mubr.f32.gmra.mrb[0].mxu0 %v131
    %v456 = vpop.f32.mrb[0].mxu0
    %v457 = vadd.f32 0.0, %v456
    %v458 = vpop.f32.mrb[0].mxu0
    %459 = vmatprep.mubr.f32.mxu0 0.0
    %460 = vmatmul.mubr.f32.gmra.mrb[0].mxu0 %v134
    %v461 = vpop.f32.mrb[0].mxu0
    %v462 = vadd.f32 0.0, %v461
    %v463 = vpop.f32.mrb[0].mxu0
    %464 = vmatprep.mubr.f32.mxu0 0.0
    %465 = vmatmul.mubr.f32.gmra.mrb[0].mxu0 %v137
    %v466 = vpop.f32.mrb[0].mxu0
    %v467 = vadd.f32 0.0, %v466
    %v468 = vpop.f32.mrb[0].mxu0
    %469 = vmatprep.mubr.f32.mxu0 0.0
    %470 = vmatmul.mubr.f32.gmra.mrb[0].mxu0 %v140
    %v471 = vpop.f32.mrb[0].mxu0
    %v472 = vadd.f32 0.0, %v471
    %v473 = vpop.f32.mrb[0].mxu0
    %474 = vmatprep.mubr.f32.mxu0 0.0
    %475 = vmatmul.mubr.f32.gmra.mrb[0].mxu0 %v143
    %v476 = vpop.f32.mrb[0].mxu0
    %v477 = vadd.f32 0.0, %v476
    %v478 = vpop.f32.mrb[0].mxu0
    %479 = vmatprep.mubr.f32.mxu0 0.0
    %480 = vmatmul.mubr.f32.gmra.mrb[0].mxu0 %v146
    %v481 = vpop.f32.mrb[0].mxu0
    %v482 = vadd.f32 0.0, %v481
    %v483 = vpop.f32.mrb[0].mxu0
    %484 = vmatprep.mubr.f32.mxu0 0.0
    %485 = vmatmul.mubr.f32.gmra.mrb[0].mxu0 %v149
    %v486 = vpop.f32.mrb[0].mxu0
    %v487 = vadd.f32 0.0, %v486
    %v488 = vpop.f32.mrb[0].mxu0
    %489 = vmatprep.mubr.f32.mxu0 0.0
    %490 = vmatmul.mubr.f32.gmra.mrb[0].mxu0 %v152
    %v491 = vpop.f32.mrb[0].mxu0
    %v492 = vadd.f32 0.0, %v491
    %v493 = vpop.f32.mrb[0].mxu0
    %494 = vmatprep.mubr.f32.mxu0 0.0
    %495 = vmatmul.mubr.f32.gmra.mrb[0].mxu0 %v155
    %v496 = vpop.f32.mrb[0].mxu0
    %v497 = vadd.f32 0.0, %v496
    %v498 = vpop.f32.mrb[0].mxu0
    %499 = vmatprep.mubr.f32.mxu0 0.0
    %500 = vmatmul.mubr.f32.gmra.mrb[0].mxu0 %v158
    %v501 = vpop.f32.mrb[0].mxu0
    %v502 = vadd.f32 0.0, %v501
    %v503 = vpop.f32.mrb[0].mxu0
    %504 = vmatprep.mubr.f32.mxu0 0.0
    %505 = vmatmul.mubr.f32.gmra.mrb[0].mxu0 %v161
    %v506 = vpop.f32.mrb[0].mxu0
    %v507 = vadd.f32 0.0, %v506
    %v508 = vpop.f32.mrb[0].mxu0
    %509 = vmatprep.mubr.f32.mxu0 0.0
    %510 = vmatmul.mubr.f32.gmra.mrb[0].mxu0 %v164
    %v511 = vpop.f32.mrb[0].mxu0
    %v512 = vadd.f32 0.0, %v511
    %v513 = vpop.f32.mrb[0].mxu0
    %514 = vmatprep.mubr.f32.mxu0 0.0
    %515 = vmatmul.mubr.f32.gmra.mrb[0].mxu0 %v167
    %v516 = vpop.f32.mrb[0].mxu0
    %v517 = vadd.f32 0.0, %v516
    %v518 = vpop.f32.mrb[0].mxu0
    %519 = vmatprep.mubr.f32.mxu0 0.0
    %520 = vmatmul.mubr.f32.gmra.mrb[0].mxu0 %v170
    %v521 = vpop.f32.mrb[0].mxu0
    %v522 = vadd.f32 0.0, %v521
    %v523 = vpop.f32.mrb[0].mxu0
    %524 = vmatprep.mubr.f32.mxu0 0.0
    %525 = vmatmul.mubr.f32.gmra.mrb[0].mxu0 %v173
    %v526 = vpop.f32.mrb[0].mxu0
    %v527 = vadd.f32 0.0, %v526
    %v528 = vpop.f32.mrb[0].mxu0
    %529 = vmatprep.mubr.f32.mxu0 0.0
    %530 = vmatmul.mubr.f32.gmra.mrb[0].mxu0 %v176
    %v531 = vpop.f32.mrb[0].mxu0
    %v532 = vadd.f32 0.0, %v531
    %v533 = vpop.f32.mrb[0].mxu0
    %534 = vmatprep.mubr.f32.mxu0 0.0
    %535 = vmatmul.mubr.f32.gmra.mrb[0].mxu0 %v179
    %v536 = vpop.f32.mrb[0].mxu0
    %v537 = vadd.f32 0.0, %v536
    %v538 = vpop.f32.mrb[0].mxu0
    %539 = vmatprep.mubr.f32.mxu0 0.0
    %540 = vmatmul.mubr.f32.gmra.mrb[0].mxu0 %v182
    %v541 = vpop.f32.mrb[0].mxu0
    %v542 = vadd.f32 0.0, %v541
    %v543 = vpop.f32.mrb[0].mxu0
    %544 = vmatprep.mubr.f32.mxu0 0.0
    %545 = vmatmul.mubr.f32.gmra.mrb[0].mxu0 %v185
    %v546 = vpop.f32.mrb[0].mxu0
    %v547 = vadd.f32 0.0, %v546
    %v548 = vpop.f32.mrb[0].mxu0
    %549 = vmatprep.mubr.f32.mxu0 0.0
    %550 = vmatmul.mubr.f32.gmra.mrb[0].mxu0 %v188
    %v551 = vpop.f32.mrb[0].mxu0
    %v552 = vadd.f32 0.0, %v551
    %v553 = vpop.f32.mrb[0].mxu0
    %554 = vmatprep.mubr.f32.mxu0 0.0
    %555 = vmatmul.mubr.f32.gmra.mrb[0].mxu0 %v191
    %v556 = vpop.f32.mrb[0].mxu0
    %v557 = vadd.f32 0.0, %v556
    %v558 = vpop.f32.mrb[0].mxu0
    %559 = vmatprep.mubr.f32.mxu0 0.0
    %560 = vmatmul.mubr.f32.gmra.mrb[0].mxu0 %v194
    %v561 = vpop.f32.mrb[0].mxu0
    %v562 = vadd.f32 0.0, %v561
    %v563 = vpop.f32.mrb[0].mxu0
    %564 = vmatprep.mubr.f32.mxu0 0.0
    %565 = vmatmul.mubr.f32.gmra.mrb[0].mxu0 %v197
    %v566 = vpop.f32.mrb[0].mxu0
    %v567 = vadd.f32 0.0, %v566
    %v568 = vpop.f32.mrb[0].mxu0
    %569 = vmatprep.mubr.f32.mxu0 0.0
    %570 = vmatmul.mubr.f32.gmra.mrb[0].mxu0 %v200
    %v571 = vpop.f32.mrb[0].mxu0
    %v572 = vadd.f32 0.0, %v571
    %v573 = vpop.f32.mrb[0].mxu0
    %574 = vmatprep.mubr.f32.mxu0 0.0
    %575 = vmatmul.mubr.f32.gmra.mrb[0].mxu0 %v203
    %v576 = vpop.f32.mrb[0].mxu0
    %v577 = vadd.f32 0.0, %v576
    %v578 = vpop.f32.mrb[0].mxu0
    %579 = vmatprep.mubr.f32.mxu0 0.0
    %580 = vmatmul.mubr.f32.gmra.mrb[0].mxu0 %v206
    %v581 = vpop.f32.mrb[0].mxu0
    %v582 = vadd.f32 0.0, %v581
    %v583 = vpop.f32.mrb[0].mxu0
    %584 = vmatprep.mubr.f32.mxu0 0.0
    %585 = vmatmul.mubr.f32.gmra.mrb[0].mxu0 %v209
    %v586 = vpop.f32.mrb[0].mxu0
    %v587 = vadd.f32 0.0, %v586
    %v588 = vpop.f32.mrb[0].mxu0
    %589 = vmatprep.mubr.f32.mxu0 0.0
    %590 = vmatmul.mubr.f32.gmra.mrb[0].mxu0 %v212
    %v591 = vpop.f32.mrb[0].mxu0
    %v592 = vadd.f32 0.0, %v591
    %v593 = vpop.f32.mrb[0].mxu0
    %594 = vmatprep.mubr.f32.mxu0 0.0
    %595 = vmatmul.mubr.f32.gmra.mrb[0].mxu0 %v215
    %v596 = vpop.f32.mrb[0].mxu0
    %v597 = vadd.f32 0.0, %v596
    %v598 = vpop.f32.mrb[0].mxu0
    %599 = vmatprep.mubr.f32.mxu0 0.0
    %600 = vmatmul.mubr.f32.gmra.mrb[0].mxu0 %v218
    %v601 = vpop.f32.mrb[0].mxu0
    %v602 = vadd.f32 0.0, %v601
    %v603 = vpop.f32.mrb[0].mxu0
    %604 = vmatprep.mubr.f32.mxu0 0.0
    %605 = vmatmul.mubr.f32.gmra.mrb[0].mxu0 %v221
    %v606 = vpop.f32.mrb[0].mxu0
    %v607 = vadd.f32 0.0, %v606
    %v608 = vpop.f32.mrb[0].mxu0
    %609 = vmatprep.mubr.f32.mxu0 0.0
    %610 = vmatmul.mubr.f32.gmra.mrb[0].mxu0 %v224
    %v611 = vpop.f32.mrb[0].mxu0
    %v612 = vadd.f32 0.0, %v611
    %v613 = vpop.f32.mrb[0].mxu0
    %614 = vmatprep.mubr.f32.mxu0 0.0
    %615 = vmatmul.mubr.f32.gmra.mrb[0].mxu0 %v227
    %v616 = vpop.f32.mrb[0].mxu0
    %v617 = vadd.f32 0.0, %v616
    %v618 = vpop.f32.mrb[0].mxu0
    %619 = vmatprep.mubr.f32.mxu0 0.0
    %620 = vmatmul.mubr.f32.gmra.mrb[0].mxu0 %v230
    %v621 = vpop.f32.mrb[0].mxu0
    %v622 = vadd.f32 0.0, %v621
    %v623 = vpop.f32.mrb[0].mxu0
    %624 = vmatprep.mubr.f32.mxu0 0.0
    %625 = vmatmul.mubr.f32.gmra.mrb[0].mxu0 %v233
    %v626 = vpop.f32.mrb[0].mxu0
    %v627 = vadd.f32 0.0, %v626
    %v628 = vpop.f32.mrb[0].mxu0
    %629 = vmatprep.mubr.f32.mxu0 0.0
    %630 = vmatmul.mubr.f32.gmra.mrb[0].mxu0 %v236
    %v631 = vpop.f32.mrb[0].mxu0
    %v632 = vadd.f32 0.0, %v631
    %v633 = vpop.f32.mrb[0].mxu0
    %634 = vmatprep.mubr.f32.mxu0 0.0
    %635 = vmatmul.mubr.f32.gmra.mrb[0].mxu0 %v239
    %v636 = vpop.f32.mrb[0].mxu0
    %v637 = vadd.f32 0.0, %v636
    %v638 = vpop.f32.mrb[0].mxu0
    %639 = vmatprep.mubr.f32.mxu0 0.0
    %640 = vmatmul.mubr.f32.gmra.mrb[0].mxu0 %v242
    %v641 = vpop.f32.mrb[0].mxu0
    %v642 = vadd.f32 0.0, %v641
    %v643 = vpop.f32.mrb[0].mxu0
    %644 = vmatprep.mubr.f32.mxu0 0.0
    %645 = vmatmul.mubr.f32.gmra.mrb[0].mxu0 %v245
    %v646 = vpop.f32.mrb[0].mxu0
    %v647 = vadd.f32 0.0, %v646
    %v648 = vpop.f32.mrb[0].mxu0
    %649 = vmatprep.mubr.f32.mxu0 0.0
    %650 = vmatmul.mubr.f32.gmra.mrb[0].mxu0 %v248
    %v651 = vpop.f32.mrb[0].mxu0
    %v652 = vadd.f32 0.0, %v651
    %v653 = vpop.f32.mrb[0].mxu0
    %654 = vmatprep.mubr.f32.mxu0 0.0
    %655 = vmatmul.mubr.f32.gmra.mrb[0].mxu0 %v251
    %v656 = vpop.f32.mrb[0].mxu0
    %v657 = vadd.f32 0.0, %v656
    %v658 = vpop.f32.mrb[0].mxu0
    %659 = vmatprep.mubr.f32.mxu0 0.0
    %660 = vmatmul.mubr.f32.gmra.mrb[0].mxu0 %v254
    %v661 = vpop.f32.mrb[0].mxu0
    %v662 = vadd.f32 0.0, %v661
    %v663 = vpop.f32.mrb[0].mxu0
    %664 = vmatprep.mubr.f32.mxu0 0.0
    %665 = vmatmul.mubr.f32.gmra.mrb[0].mxu0 %v257
    %v666 = vpop.f32.mrb[0].mxu0
    %v667 = vadd.f32 0.0, %v666
    %v668 = vpop.f32.mrb[0].mxu0
    %669 = vmatprep.mubr.f32.mxu0 0.0
    %670 = vmatmul.mubr.f32.gmra.mrb[0].mxu0 %v260
    %v671 = vpop.f32.mrb[0].mxu0
    %v672 = vadd.f32 0.0, %v671
    %v673 = vpop.f32.mrb[0].mxu0
    %674 = vmatprep.mubr.f32.mxu0 0.0
    %675 = vmatmul.mubr.f32.gmra.mrb[0].mxu0 %v263
    %v676 = vpop.f32.mrb[0].mxu0
    %v677 = vadd.f32 0.0, %v676
    %v678 = vpop.f32.mrb[0].mxu0
    %679 = vmatprep.mubr.f32.mxu0 0.0
    %680 = vmatmul.mubr.f32.gmra.mrb[0].mxu0 %v266
    %v681 = vpop.f32.mrb[0].mxu0
    %v682 = vadd.f32 0.0, %v681
    %v683 = vpop.f32.mrb[0].mxu0
    %684 = vmatprep.mubr.f32.mxu0 0.0
    %685 = vmatmul.mubr.f32.gmra.mrb[0].mxu0 %v269
    %v686 = vpop.f32.mrb[0].mxu0
    %v687 = vadd.f32 0.0, %v686
    %v688 = vpop.f32.mrb[0].mxu0
    %689 = vmatprep.mubr.f32.mxu0 0.0
    %690 = vmatmul.mubr.f32.gmra.mrb[0].mxu0 %v272
    %v691 = vpop.f32.mrb[0].mxu0
    %v692 = vadd.f32 0.0, %v691
    %v693 = vpop.f32.mrb[0].mxu0
    %694 = vmatprep.mubr.f32.mxu0 0.0
    %695 = vmatmul.mubr.f32.gmra.mrb[0].mxu0 %v275
    %v696 = vpop.f32.mrb[0].mxu0
    %v697 = vadd.f32 0.0, %v696
    %v698 = vpop.f32.mrb[0].mxu0
    %699 = vmatprep.mubr.f32.mxu0 0.0
    %700 = vmatmul.mubr.f32.gmra.mrb[0].mxu0 %v278
    %v701 = vpop.f32.mrb[0].mxu0
    %v702 = vadd.f32 0.0, %v701
    %v703 = vpop.f32.mrb[0].mxu0
    %704 = vmatprep.mubr.f32.mxu0 0.0
    %705 = vmatmul.mubr.f32.gmra.mrb[0].mxu0 %v281
    %v706 = vpop.f32.mrb[0].mxu0
    %v707 = vadd.f32 0.0, %v706
    %v708 = vpop.f32.mrb[0].mxu0
    %709 = vmatprep.mubr.f32.mxu0 0.0
    %710 = vmatmul.mubr.f32.gmra.mrb[0].mxu0 %v284
    %v711 = vpop.f32.mrb[0].mxu0
    %v712 = vadd.f32 0.0, %v711
    %v713 = vpop.f32.mrb[0].mxu0
    %714 = vmatprep.mubr.f32.mxu0 0.0
    %715 = vmatmul.mubr.f32.gmra.mrb[0].mxu0 %v287
    %v716 = vpop.f32.mrb[0].mxu0
    %v717 = vadd.f32 0.0, %v716
    %v718 = vpop.f32.mrb[0].mxu0
    %719 = vmatprep.mubr.f32.mxu0 0.0
    %720 = vmatmul.mubr.f32.gmra.mrb[0].mxu0 %v290
    %v721 = vpop.f32.mrb[0].mxu0
    %v722 = vadd.f32 0.0, %v721
    %v723 = vpop.f32.mrb[0].mxu0
    %724 = vdwg.mxu0
    %v725 = vmul.f32 %v407, 2.0
    %v726 = vmul.f32 %v412, 2.0
    %v727 = vmul.f32 %v417, 2.0
    %v728 = vmul.f32 %v422, 2.0
    %v729 = vmul.f32 %v427, 2.0
    %v730 = vmul.f32 %v432, 2.0
    %v731 = vmul.f32 %v437, 2.0
    %v732 = vmul.f32 %v442, 2.0
    %v733 = vmul.f32 %v447, 2.0
    %v734 = vmul.f32 %v452, 2.0
    %v735 = vmul.f32 %v457, 2.0
    %v736 = vmul.f32 %v462, 2.0
    %v737 = vmul.f32 %v467, 2.0
    %v738 = vmul.f32 %v472, 2.0
    %v739 = vmul.f32 %v477, 2.0
    %v740 = vmul.f32 %v482, 2.0
    %v741 = vmul.f32 %v487, 2.0
    %v742 = vmul.f32 %v492, 2.0
    %v743 = vmul.f32 %v497, 2.0
    %v744 = vmul.f32 %v502, 2.0
    %v745 = vmul.f32 %v507, 2.0
    %v746 = vmul.f32 %v512, 2.0
    %v747 = vmul.f32 %v517, 2.0
    %v748 = vmul.f32 %v522, 2.0
    %v749 = vmul.f32 %v527, 2.0
    %v750 = vmul.f32 %v532, 2.0
    %v751 = vmul.f32 %v537, 2.0
    %v752 = vmul.f32 %v542, 2.0
    %v753 = vmul.f32 %v547, 2.0
    %v754 = vmul.f32 %v552, 2.0
    %v755 = vmul.f32 %v557, 2.0
    %v756 = vmul.f32 %v562, 2.0
    %v757 = vmul.f32 %v567, 2.0
    %v758 = vmul.f32 %v572, 2.0
    %v759 = vmul.f32 %v577, 2.0
    %v760 = vmul.f32 %v582, 2.0
    %v761 = vmul.f32 %v587, 2.0
    %v762 = vmul.f32 %v592, 2.0
    %v763 = vmul.f32 %v597, 2.0
    %v764 = vmul.f32 %v602, 2.0
    %v765 = vmul.f32 %v607, 2.0
    %v766 = vmul.f32 %v612, 2.0
    %v767 = vmul.f32 %v617, 2.0
    %v768 = vmul.f32 %v622, 2.0
    %v769 = vmul.f32 %v627, 2.0
    %v770 = vmul.f32 %v632, 2.0
    %v771 = vmul.f32 %v637, 2.0
    %v772 = vmul.f32 %v642, 2.0
    %v773 = vmul.f32 %v647, 2.0
    %v774 = vmul.f32 %v652, 2.0
    %v775 = vmul.f32 %v657, 2.0
    %v776 = vmul.f32 %v662, 2.0
    %v777 = vmul.f32 %v667, 2.0
    %v778 = vmul.f32 %v672, 2.0
    %v779 = vmul.f32 %v677, 2.0
    %v780 = vmul.f32 %v682, 2.0
    %v781 = vmul.f32 %v687, 2.0
    %v782 = vmul.f32 %v692, 2.0
    %v783 = vmul.f32 %v697, 2.0
    %v784 = vmul.f32 %v702, 2.0
    %v785 = vmul.f32 %v707, 2.0
    %v786 = vmul.f32 %v712, 2.0
    %v787 = vmul.f32 %v717, 2.0
    %v788 = vmul.f32 %v722, 2.0
    %v790 = vlaneseq
    %v791 = vshrl.u32 %v790, 7
    %v792 = vsub.s32 0, %v791
    %v793 = vrot.slane %v98, %v792
    %v795 = vsub.f32 %v793, %v725
    %v796 = vsub.f32 %v793, %v726
    %v797 = vsub.f32 %v793, %v727
    %v798 = vsub.f32 %v793, %v728
    %v799 = vsub.f32 %v793, %v729
    %v800 = vsub.f32 %v793, %v730
    %v801 = vsub.f32 %v793, %v731
    %v802 = vsub.f32 %v793, %v732
    %v803 = vsub.f32 %v793, %v733
    %v804 = vsub.f32 %v793, %v734
    %v805 = vsub.f32 %v793, %v735
    %v806 = vsub.f32 %v793, %v736
    %v807 = vsub.f32 %v793, %v737
    %v808 = vsub.f32 %v793, %v738
    %v809 = vsub.f32 %v793, %v739
    %v810 = vsub.f32 %v793, %v740
    %v811 = vsub.f32 %v793, %v741
    %v812 = vsub.f32 %v793, %v742
    %v813 = vsub.f32 %v793, %v743
    %v814 = vsub.f32 %v793, %v744
    %v815 = vsub.f32 %v793, %v745
    %v816 = vsub.f32 %v793, %v746
    %v817 = vsub.f32 %v793, %v747
    %v818 = vsub.f32 %v793, %v748
    %v819 = vsub.f32 %v793, %v749
    %v820 = vsub.f32 %v793, %v750
    %v821 = vsub.f32 %v793, %v751
    %v822 = vsub.f32 %v793, %v752
    %v823 = vsub.f32 %v793, %v753
    %v824 = vsub.f32 %v793, %v754
    %v825 = vsub.f32 %v793, %v755
    %v826 = vsub.f32 %v793, %v756
    %v827 = vsub.f32 %v793, %v757
    %v828 = vsub.f32 %v793, %v758
    %v829 = vsub.f32 %v793, %v759
    %v830 = vsub.f32 %v793, %v760
    %v831 = vsub.f32 %v793, %v761
    %v832 = vsub.f32 %v793, %v762
    %v833 = vsub.f32 %v793, %v763
    %v834 = vsub.f32 %v793, %v764
    %v835 = vsub.f32 %v793, %v765
    %v836 = vsub.f32 %v793, %v766
    %v837 = vsub.f32 %v793, %v767
    %v838 = vsub.f32 %v793, %v768
    %v839 = vsub.f32 %v793, %v769
    %v840 = vsub.f32 %v793, %v770
    %v841 = vsub.f32 %v793, %v771
    %v842 = vsub.f32 %v793, %v772
    %v843 = vsub.f32 %v793, %v773
    %v844 = vsub.f32 %v793, %v774
    %v845 = vsub.f32 %v793, %v775
    %v846 = vsub.f32 %v793, %v776
    %v847 = vsub.f32 %v793, %v777
    %v848 = vsub.f32 %v793, %v778
    %v849 = vsub.f32 %v793, %v779
    %v850 = vsub.f32 %v793, %v780
    %v851 = vsub.f32 %v793, %v781
    %v852 = vsub.f32 %v793, %v782
    %v853 = vsub.f32 %v793, %v783
    %v854 = vsub.f32 %v793, %v784
    %v855 = vsub.f32 %v793, %v785
    %v856 = vsub.f32 %v793, %v786
    %v857 = vsub.f32 %v793, %v787
    %v858 = vsub.f32 %v793, %v788
    %v859 = vlaneseq
    %v860 = vand.u32 %v859, 127
    %861 = vmin.xlane.f32.xlu0 %v795
    %v862 = vpop.xlane.xlu0 %861
    %863 = vmin.xlane.f32.xlu0 %v796
    %v864 = vpop.xlane.xlu0 %863
    %865 = vmin.xlane.f32.xlu0 %v797
    %v866 = vpop.xlane.xlu0 %865
    %867 = vmin.xlane.f32.xlu0 %v798
    %v868 = vpop.xlane.xlu0 %867
    %869 = vmin.xlane.f32.xlu0 %v799
    %v870 = vpop.xlane.xlu0 %869
    %871 = vmin.xlane.f32.xlu0 %v800
    %v872 = vpop.xlane.xlu0 %871
    %873 = vmin.xlane.f32.xlu0 %v801
    %v874 = vpop.xlane.xlu0 %873
    %875 = vmin.xlane.f32.xlu0 %v802
    %v876 = vpop.xlane.xlu0 %875
    %877 = vmin.xlane.f32.xlu0 %v803
    %v878 = vpop.xlane.xlu0 %877
    %879 = vmin.xlane.f32.xlu0 %v804
    %v880 = vpop.xlane.xlu0 %879
    %881 = vmin.xlane.f32.xlu0 %v805
    %v882 = vpop.xlane.xlu0 %881
    %883 = vmin.xlane.f32.xlu0 %v806
    %v884 = vpop.xlane.xlu0 %883
    %885 = vmin.xlane.f32.xlu0 %v807
    %v886 = vpop.xlane.xlu0 %885
    %887 = vmin.xlane.f32.xlu0 %v808
    %v888 = vpop.xlane.xlu0 %887
    %889 = vmin.xlane.f32.xlu0 %v809
    %v890 = vpop.xlane.xlu0 %889
    %891 = vmin.xlane.f32.xlu0 %v810
    %v892 = vpop.xlane.xlu0 %891
    %893 = vmin.xlane.f32.xlu0 %v811
    %v894 = vpop.xlane.xlu0 %893
    %895 = vmin.xlane.f32.xlu0 %v812
    %v896 = vpop.xlane.xlu0 %895
    %897 = vmin.xlane.f32.xlu0 %v813
    %v898 = vpop.xlane.xlu0 %897
    %899 = vmin.xlane.f32.xlu0 %v814
    %v900 = vpop.xlane.xlu0 %899
    %901 = vmin.xlane.f32.xlu0 %v815
    %v902 = vpop.xlane.xlu0 %901
    %903 = vmin.xlane.f32.xlu0 %v816
    %v904 = vpop.xlane.xlu0 %903
    %905 = vmin.xlane.f32.xlu0 %v817
    %v906 = vpop.xlane.xlu0 %905
    %907 = vmin.xlane.f32.xlu0 %v818
    %v908 = vpop.xlane.xlu0 %907
    %909 = vmin.xlane.f32.xlu0 %v819
    %v910 = vpop.xlane.xlu0 %909
    %911 = vmin.xlane.f32.xlu0 %v820
    %v912 = vpop.xlane.xlu0 %911
    %913 = vmin.xlane.f32.xlu0 %v821
    %v914 = vpop.xlane.xlu0 %913
    %915 = vmin.xlane.f32.xlu0 %v822
    %v916 = vpop.xlane.xlu0 %915
    %917 = vmin.xlane.f32.xlu0 %v823
    %v918 = vpop.xlane.xlu0 %917
    %919 = vmin.xlane.f32.xlu0 %v824
    %v920 = vpop.xlane.xlu0 %919
    %921 = vmin.xlane.f32.xlu0 %v825
    %v922 = vpop.xlane.xlu0 %921
    %923 = vmin.xlane.f32.xlu0 %v826
    %v924 = vpop.xlane.xlu0 %923
    %925 = vmin.xlane.f32.xlu0 %v827
    %v926 = vpop.xlane.xlu0 %925
    %927 = vmin.xlane.f32.xlu0 %v828
    %v928 = vpop.xlane.xlu0 %927
    %929 = vmin.xlane.f32.xlu0 %v829
    %v930 = vpop.xlane.xlu0 %929
    %931 = vmin.xlane.f32.xlu0 %v830
    %v932 = vpop.xlane.xlu0 %931
    %933 = vmin.xlane.f32.xlu0 %v831
    %v934 = vpop.xlane.xlu0 %933
    %935 = vmin.xlane.f32.xlu0 %v832
    %v936 = vpop.xlane.xlu0 %935
    %937 = vmin.xlane.f32.xlu0 %v833
    %v938 = vpop.xlane.xlu0 %937
    %939 = vmin.xlane.f32.xlu0 %v834
    %v940 = vpop.xlane.xlu0 %939
    %941 = vmin.xlane.f32.xlu0 %v835
    %v942 = vpop.xlane.xlu0 %941
    %943 = vmin.xlane.f32.xlu0 %v836
    %v944 = vpop.xlane.xlu0 %943
    %945 = vmin.xlane.f32.xlu0 %v837
    %v946 = vpop.xlane.xlu0 %945
    %947 = vmin.xlane.f32.xlu0 %v838
    %v948 = vpop.xlane.xlu0 %947
    %949 = vmin.xlane.f32.xlu0 %v839
    %v950 = vpop.xlane.xlu0 %949
    %951 = vmin.xlane.f32.xlu0 %v840
    %v952 = vpop.xlane.xlu0 %951
    %953 = vmin.xlane.f32.xlu0 %v841
    %v954 = vpop.xlane.xlu0 %953
    %955 = vmin.xlane.f32.xlu0 %v842
    %v956 = vpop.xlane.xlu0 %955
    %957 = vmin.xlane.f32.xlu0 %v843
    %v958 = vpop.xlane.xlu0 %957
    %959 = vmin.xlane.f32.xlu0 %v844
    %v960 = vpop.xlane.xlu0 %959
    %961 = vmin.xlane.f32.xlu0 %v845
    %v962 = vpop.xlane.xlu0 %961
    %963 = vmin.xlane.f32.xlu0 %v846
    %v964 = vpop.xlane.xlu0 %963
    %965 = vmin.xlane.f32.xlu0 %v847
    %v966 = vpop.xlane.xlu0 %965
    %967 = vmin.xlane.f32.xlu0 %v848
    %v968 = vpop.xlane.xlu0 %967
    %969 = vmin.xlane.f32.xlu0 %v849
    %v970 = vpop.xlane.xlu0 %969
    %971 = vmin.xlane.f32.xlu0 %v850
    %v972 = vpop.xlane.xlu0 %971
    %973 = vmin.xlane.f32.xlu0 %v851
    %v974 = vpop.xlane.xlu0 %973
    %975 = vmin.xlane.f32.xlu0 %v852
    %v976 = vpop.xlane.xlu0 %975
    %977 = vmin.xlane.f32.xlu0 %v853
    %v978 = vpop.xlane.xlu0 %977
    %979 = vmin.xlane.f32.xlu0 %v854
    %v980 = vpop.xlane.xlu0 %979
    %981 = vmin.xlane.f32.xlu0 %v855
    %v982 = vpop.xlane.xlu0 %981
    %983 = vmin.xlane.f32.xlu0 %v856
    %v984 = vpop.xlane.xlu0 %983
    %985 = vmin.xlane.f32.xlu0 %v857
    %v986 = vpop.xlane.xlu0 %985
    %987 = vmin.xlane.f32.xlu0 %v858
    %v988 = vpop.xlane.xlu0 %987
    %vm989 = vcmp.eq.f32.partialorder %v795, %v862
    %vm990 = vcmp.eq.f32.partialorder %v796, %v864
    %vm991 = vcmp.eq.f32.partialorder %v797, %v866
    %vm992 = vcmp.eq.f32.partialorder %v798, %v868
    %vm993 = vcmp.eq.f32.partialorder %v799, %v870
    %vm994 = vcmp.eq.f32.partialorder %v800, %v872
    %vm995 = vcmp.eq.f32.partialorder %v801, %v874
    %vm996 = vcmp.eq.f32.partialorder %v802, %v876
    %vm997 = vcmp.eq.f32.partialorder %v803, %v878
    %vm998 = vcmp.eq.f32.partialorder %v804, %v880
    %vm999 = vcmp.eq.f32.partialorder %v805, %v882
    %vm1000 = vcmp.eq.f32.partialorder %v806, %v884
    %vm1001 = vcmp.eq.f32.partialorder %v807, %v886
    %vm1002 = vcmp.eq.f32.partialorder %v808, %v888
    %vm1003 = vcmp.eq.f32.partialorder %v809, %v890
    %vm1004 = vcmp.eq.f32.partialorder %v810, %v892
    %vm1005 = vcmp.eq.f32.partialorder %v811, %v894
    %vm1006 = vcmp.eq.f32.partialorder %v812, %v896
    %vm1007 = vcmp.eq.f32.partialorder %v813, %v898
    %vm1008 = vcmp.eq.f32.partialorder %v814, %v900
    %vm1009 = vcmp.eq.f32.partialorder %v815, %v902
    %vm1010 = vcmp.eq.f32.partialorder %v816, %v904
    %vm1011 = vcmp.eq.f32.partialorder %v817, %v906
    %vm1012 = vcmp.eq.f32.partialorder %v818, %v908
    %vm1013 = vcmp.eq.f32.partialorder %v819, %v910
    %vm1014 = vcmp.eq.f32.partialorder %v820, %v912
    %vm1015 = vcmp.eq.f32.partialorder %v821, %v914
    %vm1016 = vcmp.eq.f32.partialorder %v822, %v916
    %vm1017 = vcmp.eq.f32.partialorder %v823, %v918
    %vm1018 = vcmp.eq.f32.partialorder %v824, %v920
    %vm1019 = vcmp.eq.f32.partialorder %v825, %v922
    %vm1020 = vcmp.eq.f32.partialorder %v826, %v924
    %vm1021 = vcmp.eq.f32.partialorder %v827, %v926
    %vm1022 = vcmp.eq.f32.partialorder %v828, %v928
    %vm1023 = vcmp.eq.f32.partialorder %v829, %v930
    %vm1024 = vcmp.eq.f32.partialorder %v830, %v932
    %vm1025 = vcmp.eq.f32.partialorder %v831, %v934
    %vm1026 = vcmp.eq.f32.partialorder %v832, %v936
    %vm1027 = vcmp.eq.f32.partialorder %v833, %v938
    %vm1028 = vcmp.eq.f32.partialorder %v834, %v940
    %vm1029 = vcmp.eq.f32.partialorder %v835, %v942
    %vm1030 = vcmp.eq.f32.partialorder %v836, %v944
    %vm1031 = vcmp.eq.f32.partialorder %v837, %v946
    %vm1032 = vcmp.eq.f32.partialorder %v838, %v948
    %vm1033 = vcmp.eq.f32.partialorder %v839, %v950
    %vm1034 = vcmp.eq.f32.partialorder %v840, %v952
    %vm1035 = vcmp.eq.f32.partialorder %v841, %v954
    %vm1036 = vcmp.eq.f32.partialorder %v842, %v956
    %vm1037 = vcmp.eq.f32.partialorder %v843, %v958
    %vm1038 = vcmp.eq.f32.partialorder %v844, %v960
    %vm1039 = vcmp.eq.f32.partialorder %v845, %v962
    %vm1040 = vcmp.eq.f32.partialorder %v846, %v964
    %vm1041 = vcmp.eq.f32.partialorder %v847, %v966
    %vm1042 = vcmp.eq.f32.partialorder %v848, %v968
    %vm1043 = vcmp.eq.f32.partialorder %v849, %v970
    %vm1044 = vcmp.eq.f32.partialorder %v850, %v972
    %vm1045 = vcmp.eq.f32.partialorder %v851, %v974
    %vm1046 = vcmp.eq.f32.partialorder %v852, %v976
    %vm1047 = vcmp.eq.f32.partialorder %v853, %v978
    %vm1048 = vcmp.eq.f32.partialorder %v854, %v980
    %vm1049 = vcmp.eq.f32.partialorder %v855, %v982
    %vm1050 = vcmp.eq.f32.partialorder %v856, %v984
    %vm1051 = vcmp.eq.f32.partialorder %v857, %v986
    %vm1052 = vcmp.eq.f32.partialorder %v858, %v988
    %v1053 = vsel %vm989, %v860, 128
    %v1054 = vsel %vm990, %v860, 128
    %v1055 = vsel %vm991, %v860, 128
    %v1056 = vsel %vm992, %v860, 128
    %v1057 = vsel %vm993, %v860, 128
    %v1058 = vsel %vm994, %v860, 128
    %v1059 = vsel %vm995, %v860, 128
    %v1060 = vsel %vm996, %v860, 128
    %v1061 = vsel %vm997, %v860, 128
    %v1062 = vsel %vm998, %v860, 128
    %v1063 = vsel %vm999, %v860, 128
    %v1064 = vsel %vm1000, %v860, 128
    %v1065 = vsel %vm1001, %v860, 128
    %v1066 = vsel %vm1002, %v860, 128
    %v1067 = vsel %vm1003, %v860, 128
    %v1068 = vsel %vm1004, %v860, 128
    %v1069 = vsel %vm1005, %v860, 128
    %v1070 = vsel %vm1006, %v860, 128
    %v1071 = vsel %vm1007, %v860, 128
    %v1072 = vsel %vm1008, %v860, 128
    %v1073 = vsel %vm1009, %v860, 128
    %v1074 = vsel %vm1010, %v860, 128
    %v1075 = vsel %vm1011, %v860, 128
    %v1076 = vsel %vm1012, %v860, 128
    %v1077 = vsel %vm1013, %v860, 128
    %v1078 = vsel %vm1014, %v860, 128
    %v1079 = vsel %vm1015, %v860, 128
    %v1080 = vsel %vm1016, %v860, 128
    %v1081 = vsel %vm1017, %v860, 128
    %v1082 = vsel %vm1018, %v860, 128
    %v1083 = vsel %vm1019, %v860, 128
    %v1084 = vsel %vm1020, %v860, 128
    %v1085 = vsel %vm1021, %v860, 128
    %v1086 = vsel %vm1022, %v860, 128
    %v1087 = vsel %vm1023, %v860, 128
    %v1088 = vsel %vm1024, %v860, 128
    %v1089 = vsel %vm1025, %v860, 128
    %v1090 = vsel %vm1026, %v860, 128
    %v1091 = vsel %vm1027, %v860, 128
    %v1092 = vsel %vm1028, %v860, 128
    %v1093 = vsel %vm1029, %v860, 128
    %v1094 = vsel %vm1030, %v860, 128
    %v1095 = vsel %vm1031, %v860, 128
    %v1096 = vsel %vm1032, %v860, 128
    %v1097 = vsel %vm1033, %v860, 128
    %v1098 = vsel %vm1034, %v860, 128
    %v1099 = vsel %vm1035, %v860, 128
    %v1100 = vsel %vm1036, %v860, 128
    %v1101 = vsel %vm1037, %v860, 128
    %v1102 = vsel %vm1038, %v860, 128
    %v1103 = vsel %vm1039, %v860, 128
    %v1104 = vsel %vm1040, %v860, 128
    %v1105 = vsel %vm1041, %v860, 128
    %v1106 = vsel %vm1042, %v860, 128
    %v1107 = vsel %vm1043, %v860, 128
    %v1108 = vsel %vm1044, %v860, 128
    %v1109 = vsel %vm1045, %v860, 128
    %v1110 = vsel %vm1046, %v860, 128
    %v1111 = vsel %vm1047, %v860, 128
    %v1112 = vsel %vm1048, %v860, 128
    %v1113 = vsel %vm1049, %v860, 128
    %v1114 = vsel %vm1050, %v860, 128
    %v1115 = vsel %vm1051, %v860, 128
    %v1116 = vsel %vm1052, %v860, 128
    %v1117 = vand.u32 %v1053, 65535
    %v1118 = vshra.s32 %v1053, 16
    %v1119 = vcvt.s32.f32 %v1117
    %v1120 = vcvt.s32.f32 %v1118
    %1121 = vmin.xlane.f32.xlu0 %v1120
    %v1122 = vpop.xlane.xlu0 %1121
    %vm1123 = vcmp.eq.f32.partialorder %v1120, %v1122
    %v1124 = vsel %vm1123, %v1119, inf
    %1125 = vmin.xlane.f32.xlu0 %v1124
    %v1126 = vpop.xlane.xlu0 %1125
    %v1127 = vcvt.f32.s32 %v1126
    %v1128 = vcvt.f32.s32 %v1122
    %v1129 = vshll.u32 %v1128, 16
    %v1130 = vadd.s32 %v1129, %v1127
    %v1131 = vand.u32 %v1054, 65535
    %v1132 = vshra.s32 %v1054, 16
    %v1133 = vcvt.s32.f32 %v1131
    %v1134 = vcvt.s32.f32 %v1132
    %1135 = vmin.xlane.f32.xlu0 %v1134
    %v1136 = vpop.xlane.xlu0 %1135
    %vm1137 = vcmp.eq.f32.partialorder %v1134, %v1136
    %v1138 = vsel %vm1137, %v1133, inf
    %1139 = vmin.xlane.f32.xlu0 %v1138
    %v1140 = vpop.xlane.xlu0 %1139
    %v1141 = vcvt.f32.s32 %v1140
    %v1142 = vcvt.f32.s32 %v1136
    %v1143 = vshll.u32 %v1142, 16
    %v1144 = vadd.s32 %v1143, %v1141
    %v1145 = vand.u32 %v1055, 65535
    %v1146 = vshra.s32 %v1055, 16
    %v1147 = vcvt.s32.f32 %v1145
    %v1148 = vcvt.s32.f32 %v1146
    %1149 = vmin.xlane.f32.xlu0 %v1148
    %v1150 = vpop.xlane.xlu0 %1149
    %vm1151 = vcmp.eq.f32.partialorder %v1148, %v1150
    %v1152 = vsel %vm1151, %v1147, inf
    %1153 = vmin.xlane.f32.xlu0 %v1152
    %v1154 = vpop.xlane.xlu0 %1153
    %v1155 = vcvt.f32.s32 %v1154
    %v1156 = vcvt.f32.s32 %v1150
    %v1157 = vshll.u32 %v1156, 16
    %v1158 = vadd.s32 %v1157, %v1155
    %v1159 = vand.u32 %v1056, 65535
    %v1160 = vshra.s32 %v1056, 16
    %v1161 = vcvt.s32.f32 %v1159
    %v1162 = vcvt.s32.f32 %v1160
    %1163 = vmin.xlane.f32.xlu0 %v1162
    %v1164 = vpop.xlane.xlu0 %1163
    %vm1165 = vcmp.eq.f32.partialorder %v1162, %v1164
    %v1166 = vsel %vm1165, %v1161, inf
    %1167 = vmin.xlane.f32.xlu0 %v1166
    %v1168 = vpop.xlane.xlu0 %1167
    %v1169 = vcvt.f32.s32 %v1168
    %v1170 = vcvt.f32.s32 %v1164
    %v1171 = vshll.u32 %v1170, 16
    %v1172 = vadd.s32 %v1171, %v1169
    %v1173 = vand.u32 %v1057, 65535
    %v1174 = vshra.s32 %v1057, 16
    %v1175 = vcvt.s32.f32 %v1173
    %v1176 = vcvt.s32.f32 %v1174
    %1177 = vmin.xlane.f32.xlu0 %v1176
    %v1178 = vpop.xlane.xlu0 %1177
    %vm1179 = vcmp.eq.f32.partialorder %v1176, %v1178
    %v1180 = vsel %vm1179, %v1175, inf
    %1181 = vmin.xlane.f32.xlu0 %v1180
    %v1182 = vpop.xlane.xlu0 %1181
    %v1183 = vcvt.f32.s32 %v1182
    %v1184 = vcvt.f32.s32 %v1178
    %v1185 = vshll.u32 %v1184, 16
    %v1186 = vadd.s32 %v1185, %v1183
    %v1187 = vand.u32 %v1058, 65535
    %v1188 = vshra.s32 %v1058, 16
    %v1189 = vcvt.s32.f32 %v1187
    %v1190 = vcvt.s32.f32 %v1188
    %1191 = vmin.xlane.f32.xlu0 %v1190
    %v1192 = vpop.xlane.xlu0 %1191
    %vm1193 = vcmp.eq.f32.partialorder %v1190, %v1192
    %v1194 = vsel %vm1193, %v1189, inf
    %1195 = vmin.xlane.f32.xlu0 %v1194
    %v1196 = vpop.xlane.xlu0 %1195
    %v1197 = vcvt.f32.s32 %v1196
    %v1198 = vcvt.f32.s32 %v1192
    %v1199 = vshll.u32 %v1198, 16
    %v1200 = vadd.s32 %v1199, %v1197
    %v1201 = vand.u32 %v1059, 65535
    %v1202 = vshra.s32 %v1059, 16
    %v1203 = vcvt.s32.f32 %v1201
    %v1204 = vcvt.s32.f32 %v1202
    %1205 = vmin.xlane.f32.xlu0 %v1204
    %v1206 = vpop.xlane.xlu0 %1205
    %vm1207 = vcmp.eq.f32.partialorder %v1204, %v1206
    %v1208 = vsel %vm1207, %v1203, inf
    %1209 = vmin.xlane.f32.xlu0 %v1208
    %v1210 = vpop.xlane.xlu0 %1209
    %v1211 = vcvt.f32.s32 %v1210
    %v1212 = vcvt.f32.s32 %v1206
    %v1213 = vshll.u32 %v1212, 16
    %v1214 = vadd.s32 %v1213, %v1211
    %v1215 = vand.u32 %v1060, 65535
    %v1216 = vshra.s32 %v1060, 16
    %v1217 = vcvt.s32.f32 %v1215
    %v1218 = vcvt.s32.f32 %v1216
    %1219 = vmin.xlane.f32.xlu0 %v1218
    %v1220 = vpop.xlane.xlu0 %1219
    %vm1221 = vcmp.eq.f32.partialorder %v1218, %v1220
    %v1222 = vsel %vm1221, %v1217, inf
    %1223 = vmin.xlane.f32.xlu0 %v1222
    %v1224 = vpop.xlane.xlu0 %1223
    %v1225 = vcvt.f32.s32 %v1224
    %v1226 = vcvt.f32.s32 %v1220
    %v1227 = vshll.u32 %v1226, 16
    %v1228 = vadd.s32 %v1227, %v1225
    %v1229 = vand.u32 %v1061, 65535
    %v1230 = vshra.s32 %v1061, 16
    %v1231 = vcvt.s32.f32 %v1229
    %v1232 = vcvt.s32.f32 %v1230
    %1233 = vmin.xlane.f32.xlu0 %v1232
    %v1234 = vpop.xlane.xlu0 %1233
    %vm1235 = vcmp.eq.f32.partialorder %v1232, %v1234
    %v1236 = vsel %vm1235, %v1231, inf
    %1237 = vmin.xlane.f32.xlu0 %v1236
    %v1238 = vpop.xlane.xlu0 %1237
    %v1239 = vcvt.f32.s32 %v1238
    %v1240 = vcvt.f32.s32 %v1234
    %v1241 = vshll.u32 %v1240, 16
    %v1242 = vadd.s32 %v1241, %v1239
    %v1243 = vand.u32 %v1062, 65535
    %v1244 = vshra.s32 %v1062, 16
    %v1245 = vcvt.s32.f32 %v1243
    %v1246 = vcvt.s32.f32 %v1244
    %1247 = vmin.xlane.f32.xlu0 %v1246
    %v1248 = vpop.xlane.xlu0 %1247
    %vm1249 = vcmp.eq.f32.partialorder %v1246, %v1248
    %v1250 = vsel %vm1249, %v1245, inf
    %1251 = vmin.xlane.f32.xlu0 %v1250
    %v1252 = vpop.xlane.xlu0 %1251
    %v1253 = vcvt.f32.s32 %v1252
    %v1254 = vcvt.f32.s32 %v1248
    %v1255 = vshll.u32 %v1254, 16
    %v1256 = vadd.s32 %v1255, %v1253
    %v1257 = vand.u32 %v1063, 65535
    %v1258 = vshra.s32 %v1063, 16
    %v1259 = vcvt.s32.f32 %v1257
    %v1260 = vcvt.s32.f32 %v1258
    %1261 = vmin.xlane.f32.xlu0 %v1260
    %v1262 = vpop.xlane.xlu0 %1261
    %vm1263 = vcmp.eq.f32.partialorder %v1260, %v1262
    %v1264 = vsel %vm1263, %v1259, inf
    %1265 = vmin.xlane.f32.xlu0 %v1264
    %v1266 = vpop.xlane.xlu0 %1265
    %v1267 = vcvt.f32.s32 %v1266
    %v1268 = vcvt.f32.s32 %v1262
    %v1269 = vshll.u32 %v1268, 16
    %v1270 = vadd.s32 %v1269, %v1267
    %v1271 = vand.u32 %v1064, 65535
    %v1272 = vshra.s32 %v1064, 16
    %v1273 = vcvt.s32.f32 %v1271
    %v1274 = vcvt.s32.f32 %v1272
    %1275 = vmin.xlane.f32.xlu0 %v1274
    %v1276 = vpop.xlane.xlu0 %1275
    %vm1277 = vcmp.eq.f32.partialorder %v1274, %v1276
    %v1278 = vsel %vm1277, %v1273, inf
    %1279 = vmin.xlane.f32.xlu0 %v1278
    %v1280 = vpop.xlane.xlu0 %1279
    %v1281 = vcvt.f32.s32 %v1280
    %v1282 = vcvt.f32.s32 %v1276
    %v1283 = vshll.u32 %v1282, 16
    %v1284 = vadd.s32 %v1283, %v1281
    %v1285 = vand.u32 %v1065, 65535
    %v1286 = vshra.s32 %v1065, 16
    %v1287 = vcvt.s32.f32 %v1285
    %v1288 = vcvt.s32.f32 %v1286
    %1289 = vmin.xlane.f32.xlu0 %v1288
    %v1290 = vpop.xlane.xlu0 %1289
    %vm1291 = vcmp.eq.f32.partialorder %v1288, %v1290
    %v1292 = vsel %vm1291, %v1287, inf
    %1293 = vmin.xlane.f32.xlu0 %v1292
    %v1294 = vpop.xlane.xlu0 %1293
    %v1295 = vcvt.f32.s32 %v1294
    %v1296 = vcvt.f32.s32 %v1290
    %v1297 = vshll.u32 %v1296, 16
    %v1298 = vadd.s32 %v1297, %v1295
    %v1299 = vand.u32 %v1066, 65535
    %v1300 = vshra.s32 %v1066, 16
    %v1301 = vcvt.s32.f32 %v1299
    %v1302 = vcvt.s32.f32 %v1300
    %1303 = vmin.xlane.f32.xlu0 %v1302
    %v1304 = vpop.xlane.xlu0 %1303
    %vm1305 = vcmp.eq.f32.partialorder %v1302, %v1304
    %v1306 = vsel %vm1305, %v1301, inf
    %1307 = vmin.xlane.f32.xlu0 %v1306
    %v1308 = vpop.xlane.xlu0 %1307
    %v1309 = vcvt.f32.s32 %v1308
    %v1310 = vcvt.f32.s32 %v1304
    %v1311 = vshll.u32 %v1310, 16
    %v1312 = vadd.s32 %v1311, %v1309
    %v1313 = vand.u32 %v1067, 65535
    %v1314 = vshra.s32 %v1067, 16
    %v1315 = vcvt.s32.f32 %v1313
    %v1316 = vcvt.s32.f32 %v1314
    %1317 = vmin.xlane.f32.xlu0 %v1316
    %v1318 = vpop.xlane.xlu0 %1317
    %vm1319 = vcmp.eq.f32.partialorder %v1316, %v1318
    %v1320 = vsel %vm1319, %v1315, inf
    %1321 = vmin.xlane.f32.xlu0 %v1320
    %v1322 = vpop.xlane.xlu0 %1321
    %v1323 = vcvt.f32.s32 %v1322
    %v1324 = vcvt.f32.s32 %v1318
    %v1325 = vshll.u32 %v1324, 16
    %v1326 = vadd.s32 %v1325, %v1323
    %v1327 = vand.u32 %v1068, 65535
    %v1328 = vshra.s32 %v1068, 16
    %v1329 = vcvt.s32.f32 %v1327
    %v1330 = vcvt.s32.f32 %v1328
    %1331 = vmin.xlane.f32.xlu0 %v1330
    %v1332 = vpop.xlane.xlu0 %1331
    %vm1333 = vcmp.eq.f32.partialorder %v1330, %v1332
    %v1334 = vsel %vm1333, %v1329, inf
    %1335 = vmin.xlane.f32.xlu0 %v1334
    %v1336 = vpop.xlane.xlu0 %1335
    %v1337 = vcvt.f32.s32 %v1336
    %v1338 = vcvt.f32.s32 %v1332
    %v1339 = vshll.u32 %v1338, 16
    %v1340 = vadd.s32 %v1339, %v1337
    %v1341 = vand.u32 %v1069, 65535
    %v1342 = vshra.s32 %v1069, 16
    %v1343 = vcvt.s32.f32 %v1341
    %v1344 = vcvt.s32.f32 %v1342
    %1345 = vmin.xlane.f32.xlu0 %v1344
    %v1346 = vpop.xlane.xlu0 %1345
    %vm1347 = vcmp.eq.f32.partialorder %v1344, %v1346
    %v1348 = vsel %vm1347, %v1343, inf
    %1349 = vmin.xlane.f32.xlu0 %v1348
    %v1350 = vpop.xlane.xlu0 %1349
    %v1351 = vcvt.f32.s32 %v1350
    %v1352 = vcvt.f32.s32 %v1346
    %v1353 = vshll.u32 %v1352, 16
    %v1354 = vadd.s32 %v1353, %v1351
    %v1355 = vand.u32 %v1070, 65535
    %v1356 = vshra.s32 %v1070, 16
    %v1357 = vcvt.s32.f32 %v1355
    %v1358 = vcvt.s32.f32 %v1356
    %1359 = vmin.xlane.f32.xlu0 %v1358
    %v1360 = vpop.xlane.xlu0 %1359
    %vm1361 = vcmp.eq.f32.partialorder %v1358, %v1360
    %v1362 = vsel %vm1361, %v1357, inf
    %1363 = vmin.xlane.f32.xlu0 %v1362
    %v1364 = vpop.xlane.xlu0 %1363
    %v1365 = vcvt.f32.s32 %v1364
    %v1366 = vcvt.f32.s32 %v1360
    %v1367 = vshll.u32 %v1366, 16
    %v1368 = vadd.s32 %v1367, %v1365
    %v1369 = vand.u32 %v1071, 65535
    %v1370 = vshra.s32 %v1071, 16
    %v1371 = vcvt.s32.f32 %v1369
    %v1372 = vcvt.s32.f32 %v1370
    %1373 = vmin.xlane.f32.xlu0 %v1372
    %v1374 = vpop.xlane.xlu0 %1373
    %vm1375 = vcmp.eq.f32.partialorder %v1372, %v1374
    %v1376 = vsel %vm1375, %v1371, inf
    %1377 = vmin.xlane.f32.xlu0 %v1376
    %v1378 = vpop.xlane.xlu0 %1377
    %v1379 = vcvt.f32.s32 %v1378
    %v1380 = vcvt.f32.s32 %v1374
    %v1381 = vshll.u32 %v1380, 16
    %v1382 = vadd.s32 %v1381, %v1379
    %v1383 = vand.u32 %v1072, 65535
    %v1384 = vshra.s32 %v1072, 16
    %v1385 = vcvt.s32.f32 %v1383
    %v1386 = vcvt.s32.f32 %v1384
    %1387 = vmin.xlane.f32.xlu0 %v1386
    %v1388 = vpop.xlane.xlu0 %1387
    %vm1389 = vcmp.eq.f32.partialorder %v1386, %v1388
    %v1390 = vsel %vm1389, %v1385, inf
    %1391 = vmin.xlane.f32.xlu0 %v1390
    %v1392 = vpop.xlane.xlu0 %1391
    %v1393 = vcvt.f32.s32 %v1392
    %v1394 = vcvt.f32.s32 %v1388
    %v1395 = vshll.u32 %v1394, 16
    %v1396 = vadd.s32 %v1395, %v1393
    %v1397 = vand.u32 %v1073, 65535
    %v1398 = vshra.s32 %v1073, 16
    %v1399 = vcvt.s32.f32 %v1397
    %v1400 = vcvt.s32.f32 %v1398
    %1401 = vmin.xlane.f32.xlu0 %v1400
    %v1402 = vpop.xlane.xlu0 %1401
    %vm1403 = vcmp.eq.f32.partialorder %v1400, %v1402
    %v1404 = vsel %vm1403, %v1399, inf
    %1405 = vmin.xlane.f32.xlu0 %v1404
    %v1406 = vpop.xlane.xlu0 %1405
    %v1407 = vcvt.f32.s32 %v1406
    %v1408 = vcvt.f32.s32 %v1402
    %v1409 = vshll.u32 %v1408, 16
    %v1410 = vadd.s32 %v1409, %v1407
    %v1411 = vand.u32 %v1074, 65535
    %v1412 = vshra.s32 %v1074, 16
    %v1413 = vcvt.s32.f32 %v1411
    %v1414 = vcvt.s32.f32 %v1412
    %1415 = vmin.xlane.f32.xlu0 %v1414
    %v1416 = vpop.xlane.xlu0 %1415
    %vm1417 = vcmp.eq.f32.partialorder %v1414, %v1416
    %v1418 = vsel %vm1417, %v1413, inf
    %1419 = vmin.xlane.f32.xlu0 %v1418
    %v1420 = vpop.xlane.xlu0 %1419
    %v1421 = vcvt.f32.s32 %v1420
    %v1422 = vcvt.f32.s32 %v1416
    %v1423 = vshll.u32 %v1422, 16
    %v1424 = vadd.s32 %v1423, %v1421
    %v1425 = vand.u32 %v1075, 65535
    %v1426 = vshra.s32 %v1075, 16
    %v1427 = vcvt.s32.f32 %v1425
    %v1428 = vcvt.s32.f32 %v1426
    %1429 = vmin.xlane.f32.xlu0 %v1428
    %v1430 = vpop.xlane.xlu0 %1429
    %vm1431 = vcmp.eq.f32.partialorder %v1428, %v1430
    %v1432 = vsel %vm1431, %v1427, inf
    %1433 = vmin.xlane.f32.xlu0 %v1432
    %v1434 = vpop.xlane.xlu0 %1433
    %v1435 = vcvt.f32.s32 %v1434
    %v1436 = vcvt.f32.s32 %v1430
    %v1437 = vshll.u32 %v1436, 16
    %v1438 = vadd.s32 %v1437, %v1435
    %v1439 = vand.u32 %v1076, 65535
    %v1440 = vshra.s32 %v1076, 16
    %v1441 = vcvt.s32.f32 %v1439
    %v1442 = vcvt.s32.f32 %v1440
    %1443 = vmin.xlane.f32.xlu0 %v1442
    %v1444 = vpop.xlane.xlu0 %1443
    %vm1445 = vcmp.eq.f32.partialorder %v1442, %v1444
    %v1446 = vsel %vm1445, %v1441, inf
    %1447 = vmin.xlane.f32.xlu0 %v1446
    %v1448 = vpop.xlane.xlu0 %1447
    %v1449 = vcvt.f32.s32 %v1448
    %v1450 = vcvt.f32.s32 %v1444
    %v1451 = vshll.u32 %v1450, 16
    %v1452 = vadd.s32 %v1451, %v1449
    %v1453 = vand.u32 %v1077, 65535
    %v1454 = vshra.s32 %v1077, 16
    %v1455 = vcvt.s32.f32 %v1453
    %v1456 = vcvt.s32.f32 %v1454
    %1457 = vmin.xlane.f32.xlu0 %v1456
    %v1458 = vpop.xlane.xlu0 %1457
    %vm1459 = vcmp.eq.f32.partialorder %v1456, %v1458
    %v1460 = vsel %vm1459, %v1455, inf
    %1461 = vmin.xlane.f32.xlu0 %v1460
    %v1462 = vpop.xlane.xlu0 %1461
    %v1463 = vcvt.f32.s32 %v1462
    %v1464 = vcvt.f32.s32 %v1458
    %v1465 = vshll.u32 %v1464, 16
    %v1466 = vadd.s32 %v1465, %v1463
    %v1467 = vand.u32 %v1078, 65535
    %v1468 = vshra.s32 %v1078, 16
    %v1469 = vcvt.s32.f32 %v1467
    %v1470 = vcvt.s32.f32 %v1468
    %1471 = vmin.xlane.f32.xlu0 %v1470
    %v1472 = vpop.xlane.xlu0 %1471
    %vm1473 = vcmp.eq.f32.partialorder %v1470, %v1472
    %v1474 = vsel %vm1473, %v1469, inf
    %1475 = vmin.xlane.f32.xlu0 %v1474
    %v1476 = vpop.xlane.xlu0 %1475
    %v1477 = vcvt.f32.s32 %v1476
    %v1478 = vcvt.f32.s32 %v1472
    %v1479 = vshll.u32 %v1478, 16
    %v1480 = vadd.s32 %v1479, %v1477
    %v1481 = vand.u32 %v1079, 65535
    %v1482 = vshra.s32 %v1079, 16
    %v1483 = vcvt.s32.f32 %v1481
    %v1484 = vcvt.s32.f32 %v1482
    %1485 = vmin.xlane.f32.xlu0 %v1484
    %v1486 = vpop.xlane.xlu0 %1485
    %vm1487 = vcmp.eq.f32.partialorder %v1484, %v1486
    %v1488 = vsel %vm1487, %v1483, inf
    %1489 = vmin.xlane.f32.xlu0 %v1488
    %v1490 = vpop.xlane.xlu0 %1489
    %v1491 = vcvt.f32.s32 %v1490
    %v1492 = vcvt.f32.s32 %v1486
    %v1493 = vshll.u32 %v1492, 16
    %v1494 = vadd.s32 %v1493, %v1491
    %v1495 = vand.u32 %v1080, 65535
    %v1496 = vshra.s32 %v1080, 16
    %v1497 = vcvt.s32.f32 %v1495
    %v1498 = vcvt.s32.f32 %v1496
    %1499 = vmin.xlane.f32.xlu0 %v1498
    %v1500 = vpop.xlane.xlu0 %1499
    %vm1501 = vcmp.eq.f32.partialorder %v1498, %v1500
    %v1502 = vsel %vm1501, %v1497, inf
    %1503 = vmin.xlane.f32.xlu0 %v1502
    %v1504 = vpop.xlane.xlu0 %1503
    %v1505 = vcvt.f32.s32 %v1504
    %v1506 = vcvt.f32.s32 %v1500
    %v1507 = vshll.u32 %v1506, 16
    %v1508 = vadd.s32 %v1507, %v1505
    %v1509 = vand.u32 %v1081, 65535
    %v1510 = vshra.s32 %v1081, 16
    %v1511 = vcvt.s32.f32 %v1509
    %v1512 = vcvt.s32.f32 %v1510
    %1513 = vmin.xlane.f32.xlu0 %v1512
    %v1514 = vpop.xlane.xlu0 %1513
    %vm1515 = vcmp.eq.f32.partialorder %v1512, %v1514
    %v1516 = vsel %vm1515, %v1511, inf
    %1517 = vmin.xlane.f32.xlu0 %v1516
    %v1518 = vpop.xlane.xlu0 %1517
    %v1519 = vcvt.f32.s32 %v1518
    %v1520 = vcvt.f32.s32 %v1514
    %v1521 = vshll.u32 %v1520, 16
    %v1522 = vadd.s32 %v1521, %v1519
    %v1523 = vand.u32 %v1082, 65535
    %v1524 = vshra.s32 %v1082, 16
    %v1525 = vcvt.s32.f32 %v1523
    %v1526 = vcvt.s32.f32 %v1524
    %1527 = vmin.xlane.f32.xlu0 %v1526
    %v1528 = vpop.xlane.xlu0 %1527
    %vm1529 = vcmp.eq.f32.partialorder %v1526, %v1528
    %v1530 = vsel %vm1529, %v1525, inf
    %1531 = vmin.xlane.f32.xlu0 %v1530
    %v1532 = vpop.xlane.xlu0 %1531
    %v1533 = vcvt.f32.s32 %v1532
    %v1534 = vcvt.f32.s32 %v1528
    %v1535 = vshll.u32 %v1534, 16
    %v1536 = vadd.s32 %v1535, %v1533
    %v1537 = vand.u32 %v1083, 65535
    %v1538 = vshra.s32 %v1083, 16
    %v1539 = vcvt.s32.f32 %v1537
    %v1540 = vcvt.s32.f32 %v1538
    %1541 = vmin.xlane.f32.xlu0 %v1540
    %v1542 = vpop.xlane.xlu0 %1541
    %vm1543 = vcmp.eq.f32.partialorder %v1540, %v1542
    %v1544 = vsel %vm1543, %v1539, inf
    %1545 = vmin.xlane.f32.xlu0 %v1544
    %v1546 = vpop.xlane.xlu0 %1545
    %v1547 = vcvt.f32.s32 %v1546
    %v1548 = vcvt.f32.s32 %v1542
    %v1549 = vshll.u32 %v1548, 16
    %v1550 = vadd.s32 %v1549, %v1547
    %v1551 = vand.u32 %v1084, 65535
    %v1552 = vshra.s32 %v1084, 16
    %v1553 = vcvt.s32.f32 %v1551
    %v1554 = vcvt.s32.f32 %v1552
    %1555 = vmin.xlane.f32.xlu0 %v1554
    %v1556 = vpop.xlane.xlu0 %1555
    %vm1557 = vcmp.eq.f32.partialorder %v1554, %v1556
    %v1558 = vsel %vm1557, %v1553, inf
    %1559 = vmin.xlane.f32.xlu0 %v1558
    %v1560 = vpop.xlane.xlu0 %1559
    %v1561 = vcvt.f32.s32 %v1560
    %v1562 = vcvt.f32.s32 %v1556
    %v1563 = vshll.u32 %v1562, 16
    %v1564 = vadd.s32 %v1563, %v1561
    %v1565 = vand.u32 %v1085, 65535
    %v1566 = vshra.s32 %v1085, 16
    %v1567 = vcvt.s32.f32 %v1565
    %v1568 = vcvt.s32.f32 %v1566
    %1569 = vmin.xlane.f32.xlu0 %v1568
    %v1570 = vpop.xlane.xlu0 %1569
    %vm1571 = vcmp.eq.f32.partialorder %v1568, %v1570
    %v1572 = vsel %vm1571, %v1567, inf
    %1573 = vmin.xlane.f32.xlu0 %v1572
    %v1574 = vpop.xlane.xlu0 %1573
    %v1575 = vcvt.f32.s32 %v1574
    %v1576 = vcvt.f32.s32 %v1570
    %v1577 = vshll.u32 %v1576, 16
    %v1578 = vadd.s32 %v1577, %v1575
    %v1579 = vand.u32 %v1086, 65535
    %v1580 = vshra.s32 %v1086, 16
    %v1581 = vcvt.s32.f32 %v1579
    %v1582 = vcvt.s32.f32 %v1580
    %1583 = vmin.xlane.f32.xlu0 %v1582
    %v1584 = vpop.xlane.xlu0 %1583
    %vm1585 = vcmp.eq.f32.partialorder %v1582, %v1584
    %v1586 = vsel %vm1585, %v1581, inf
    %1587 = vmin.xlane.f32.xlu0 %v1586
    %v1588 = vpop.xlane.xlu0 %1587
    %v1589 = vcvt.f32.s32 %v1588
    %v1590 = vcvt.f32.s32 %v1584
    %v1591 = vshll.u32 %v1590, 16
    %v1592 = vadd.s32 %v1591, %v1589
    %v1593 = vand.u32 %v1087, 65535
    %v1594 = vshra.s32 %v1087, 16
    %v1595 = vcvt.s32.f32 %v1593
    %v1596 = vcvt.s32.f32 %v1594
    %1597 = vmin.xlane.f32.xlu0 %v1596
    %v1598 = vpop.xlane.xlu0 %1597
    %vm1599 = vcmp.eq.f32.partialorder %v1596, %v1598
    %v1600 = vsel %vm1599, %v1595, inf
    %1601 = vmin.xlane.f32.xlu0 %v1600
    %v1602 = vpop.xlane.xlu0 %1601
    %v1603 = vcvt.f32.s32 %v1602
    %v1604 = vcvt.f32.s32 %v1598
    %v1605 = vshll.u32 %v1604, 16
    %v1606 = vadd.s32 %v1605, %v1603
    %v1607 = vand.u32 %v1088, 65535
    %v1608 = vshra.s32 %v1088, 16
    %v1609 = vcvt.s32.f32 %v1607
    %v1610 = vcvt.s32.f32 %v1608
    %1611 = vmin.xlane.f32.xlu0 %v1610
    %v1612 = vpop.xlane.xlu0 %1611
    %vm1613 = vcmp.eq.f32.partialorder %v1610, %v1612
    %v1614 = vsel %vm1613, %v1609, inf
    %1615 = vmin.xlane.f32.xlu0 %v1614
    %v1616 = vpop.xlane.xlu0 %1615
    %v1617 = vcvt.f32.s32 %v1616
    %v1618 = vcvt.f32.s32 %v1612
    %v1619 = vshll.u32 %v1618, 16
    %v1620 = vadd.s32 %v1619, %v1617
    %v1621 = vand.u32 %v1089, 65535
    %v1622 = vshra.s32 %v1089, 16
    %v1623 = vcvt.s32.f32 %v1621
    %v1624 = vcvt.s32.f32 %v1622
    %1625 = vmin.xlane.f32.xlu0 %v1624
    %v1626 = vpop.xlane.xlu0 %1625
    %vm1627 = vcmp.eq.f32.partialorder %v1624, %v1626
    %v1628 = vsel %vm1627, %v1623, inf
    %1629 = vmin.xlane.f32.xlu0 %v1628
    %v1630 = vpop.xlane.xlu0 %1629
    %v1631 = vcvt.f32.s32 %v1630
    %v1632 = vcvt.f32.s32 %v1626
    %v1633 = vshll.u32 %v1632, 16
    %v1634 = vadd.s32 %v1633, %v1631
    %v1635 = vand.u32 %v1090, 65535
    %v1636 = vshra.s32 %v1090, 16
    %v1637 = vcvt.s32.f32 %v1635
    %v1638 = vcvt.s32.f32 %v1636
    %1639 = vmin.xlane.f32.xlu0 %v1638
    %v1640 = vpop.xlane.xlu0 %1639
    %vm1641 = vcmp.eq.f32.partialorder %v1638, %v1640
    %v1642 = vsel %vm1641, %v1637, inf
    %1643 = vmin.xlane.f32.xlu0 %v1642
    %v1644 = vpop.xlane.xlu0 %1643
    %v1645 = vcvt.f32.s32 %v1644
    %v1646 = vcvt.f32.s32 %v1640
    %v1647 = vshll.u32 %v1646, 16
    %v1648 = vadd.s32 %v1647, %v1645
    %v1649 = vand.u32 %v1091, 65535
    %v1650 = vshra.s32 %v1091, 16
    %v1651 = vcvt.s32.f32 %v1649
    %v1652 = vcvt.s32.f32 %v1650
    %1653 = vmin.xlane.f32.xlu0 %v1652
    %v1654 = vpop.xlane.xlu0 %1653
    %vm1655 = vcmp.eq.f32.partialorder %v1652, %v1654
    %v1656 = vsel %vm1655, %v1651, inf
    %1657 = vmin.xlane.f32.xlu0 %v1656
    %v1658 = vpop.xlane.xlu0 %1657
    %v1659 = vcvt.f32.s32 %v1658
    %v1660 = vcvt.f32.s32 %v1654
    %v1661 = vshll.u32 %v1660, 16
    %v1662 = vadd.s32 %v1661, %v1659
    %v1663 = vand.u32 %v1092, 65535
    %v1664 = vshra.s32 %v1092, 16
    %v1665 = vcvt.s32.f32 %v1663
    %v1666 = vcvt.s32.f32 %v1664
    %1667 = vmin.xlane.f32.xlu0 %v1666
    %v1668 = vpop.xlane.xlu0 %1667
    %vm1669 = vcmp.eq.f32.partialorder %v1666, %v1668
    %v1670 = vsel %vm1669, %v1665, inf
    %1671 = vmin.xlane.f32.xlu0 %v1670
    %v1672 = vpop.xlane.xlu0 %1671
    %v1673 = vcvt.f32.s32 %v1672
    %v1674 = vcvt.f32.s32 %v1668
    %v1675 = vshll.u32 %v1674, 16
    %v1676 = vadd.s32 %v1675, %v1673
    %v1677 = vand.u32 %v1093, 65535
    %v1678 = vshra.s32 %v1093, 16
    %v1679 = vcvt.s32.f32 %v1677
    %v1680 = vcvt.s32.f32 %v1678
    %1681 = vmin.xlane.f32.xlu0 %v1680
    %v1682 = vpop.xlane.xlu0 %1681
    %vm1683 = vcmp.eq.f32.partialorder %v1680, %v1682
    %v1684 = vsel %vm1683, %v1679, inf
    %1685 = vmin.xlane.f32.xlu0 %v1684
    %v1686 = vpop.xlane.xlu0 %1685
    %v1687 = vcvt.f32.s32 %v1686
    %v1688 = vcvt.f32.s32 %v1682
    %v1689 = vshll.u32 %v1688, 16
    %v1690 = vadd.s32 %v1689, %v1687
    %v1691 = vand.u32 %v1094, 65535
    %v1692 = vshra.s32 %v1094, 16
    %v1693 = vcvt.s32.f32 %v1691
    %v1694 = vcvt.s32.f32 %v1692
    %1695 = vmin.xlane.f32.xlu0 %v1694
    %v1696 = vpop.xlane.xlu0 %1695
    %vm1697 = vcmp.eq.f32.partialorder %v1694, %v1696
    %v1698 = vsel %vm1697, %v1693, inf
    %1699 = vmin.xlane.f32.xlu0 %v1698
    %v1700 = vpop.xlane.xlu0 %1699
    %v1701 = vcvt.f32.s32 %v1700
    %v1702 = vcvt.f32.s32 %v1696
    %v1703 = vshll.u32 %v1702, 16
    %v1704 = vadd.s32 %v1703, %v1701
    %v1705 = vand.u32 %v1095, 65535
    %v1706 = vshra.s32 %v1095, 16
    %v1707 = vcvt.s32.f32 %v1705
    %v1708 = vcvt.s32.f32 %v1706
    %1709 = vmin.xlane.f32.xlu0 %v1708
    %v1710 = vpop.xlane.xlu0 %1709
    %vm1711 = vcmp.eq.f32.partialorder %v1708, %v1710
    %v1712 = vsel %vm1711, %v1707, inf
    %1713 = vmin.xlane.f32.xlu0 %v1712
    %v1714 = vpop.xlane.xlu0 %1713
    %v1715 = vcvt.f32.s32 %v1714
    %v1716 = vcvt.f32.s32 %v1710
    %v1717 = vshll.u32 %v1716, 16
    %v1718 = vadd.s32 %v1717, %v1715
    %v1719 = vand.u32 %v1096, 65535
    %v1720 = vshra.s32 %v1096, 16
    %v1721 = vcvt.s32.f32 %v1719
    %v1722 = vcvt.s32.f32 %v1720
    %1723 = vmin.xlane.f32.xlu0 %v1722
    %v1724 = vpop.xlane.xlu0 %1723
    %vm1725 = vcmp.eq.f32.partialorder %v1722, %v1724
    %v1726 = vsel %vm1725, %v1721, inf
    %1727 = vmin.xlane.f32.xlu0 %v1726
    %v1728 = vpop.xlane.xlu0 %1727
    %v1729 = vcvt.f32.s32 %v1728
    %v1730 = vcvt.f32.s32 %v1724
    %v1731 = vshll.u32 %v1730, 16
    %v1732 = vadd.s32 %v1731, %v1729
    %v1733 = vand.u32 %v1097, 65535
    %v1734 = vshra.s32 %v1097, 16
    %v1735 = vcvt.s32.f32 %v1733
    %v1736 = vcvt.s32.f32 %v1734
    %1737 = vmin.xlane.f32.xlu0 %v1736
    %v1738 = vpop.xlane.xlu0 %1737
    %vm1739 = vcmp.eq.f32.partialorder %v1736, %v1738
    %v1740 = vsel %vm1739, %v1735, inf
    %1741 = vmin.xlane.f32.xlu0 %v1740
    %v1742 = vpop.xlane.xlu0 %1741
    %v1743 = vcvt.f32.s32 %v1742
    %v1744 = vcvt.f32.s32 %v1738
    %v1745 = vshll.u32 %v1744, 16
    %v1746 = vadd.s32 %v1745, %v1743
    %v1747 = vand.u32 %v1098, 65535
    %v1748 = vshra.s32 %v1098, 16
    %v1749 = vcvt.s32.f32 %v1747
    %v1750 = vcvt.s32.f32 %v1748
    %1751 = vmin.xlane.f32.xlu0 %v1750
    %v1752 = vpop.xlane.xlu0 %1751
    %vm1753 = vcmp.eq.f32.partialorder %v1750, %v1752
    %v1754 = vsel %vm1753, %v1749, inf
    %1755 = vmin.xlane.f32.xlu0 %v1754
    %v1756 = vpop.xlane.xlu0 %1755
    %v1757 = vcvt.f32.s32 %v1756
    %v1758 = vcvt.f32.s32 %v1752
    %v1759 = vshll.u32 %v1758, 16
    %v1760 = vadd.s32 %v1759, %v1757
    %v1761 = vand.u32 %v1099, 65535
    %v1762 = vshra.s32 %v1099, 16
    %v1763 = vcvt.s32.f32 %v1761
    %v1764 = vcvt.s32.f32 %v1762
    %1765 = vmin.xlane.f32.xlu0 %v1764
    %v1766 = vpop.xlane.xlu0 %1765
    %vm1767 = vcmp.eq.f32.partialorder %v1764, %v1766
    %v1768 = vsel %vm1767, %v1763, inf
    %1769 = vmin.xlane.f32.xlu0 %v1768
    %v1770 = vpop.xlane.xlu0 %1769
    %v1771 = vcvt.f32.s32 %v1770
    %v1772 = vcvt.f32.s32 %v1766
    %v1773 = vshll.u32 %v1772, 16
    %v1774 = vadd.s32 %v1773, %v1771
    %v1775 = vand.u32 %v1100, 65535
    %v1776 = vshra.s32 %v1100, 16
    %v1777 = vcvt.s32.f32 %v1775
    %v1778 = vcvt.s32.f32 %v1776
    %1779 = vmin.xlane.f32.xlu0 %v1778
    %v1780 = vpop.xlane.xlu0 %1779
    %vm1781 = vcmp.eq.f32.partialorder %v1778, %v1780
    %v1782 = vsel %vm1781, %v1777, inf
    %1783 = vmin.xlane.f32.xlu0 %v1782
    %v1784 = vpop.xlane.xlu0 %1783
    %v1785 = vcvt.f32.s32 %v1784
    %v1786 = vcvt.f32.s32 %v1780
    %v1787 = vshll.u32 %v1786, 16
    %v1788 = vadd.s32 %v1787, %v1785
    %v1789 = vand.u32 %v1101, 65535
    %v1790 = vshra.s32 %v1101, 16
    %v1791 = vcvt.s32.f32 %v1789
    %v1792 = vcvt.s32.f32 %v1790
    %1793 = vmin.xlane.f32.xlu0 %v1792
    %v1794 = vpop.xlane.xlu0 %1793
    %vm1795 = vcmp.eq.f32.partialorder %v1792, %v1794
    %v1796 = vsel %vm1795, %v1791, inf
    %1797 = vmin.xlane.f32.xlu0 %v1796
    %v1798 = vpop.xlane.xlu0 %1797
    %v1799 = vcvt.f32.s32 %v1798
    %v1800 = vcvt.f32.s32 %v1794
    %v1801 = vshll.u32 %v1800, 16
    %v1802 = vadd.s32 %v1801, %v1799
    %v1803 = vand.u32 %v1102, 65535
    %v1804 = vshra.s32 %v1102, 16
    %v1805 = vcvt.s32.f32 %v1803
    %v1806 = vcvt.s32.f32 %v1804
    %1807 = vmin.xlane.f32.xlu0 %v1806
    %v1808 = vpop.xlane.xlu0 %1807
    %vm1809 = vcmp.eq.f32.partialorder %v1806, %v1808
    %v1810 = vsel %vm1809, %v1805, inf
    %1811 = vmin.xlane.f32.xlu0 %v1810
    %v1812 = vpop.xlane.xlu0 %1811
    %v1813 = vcvt.f32.s32 %v1812
    %v1814 = vcvt.f32.s32 %v1808
    %v1815 = vshll.u32 %v1814, 16
    %v1816 = vadd.s32 %v1815, %v1813
    %v1817 = vand.u32 %v1103, 65535
    %v1818 = vshra.s32 %v1103, 16
    %v1819 = vcvt.s32.f32 %v1817
    %v1820 = vcvt.s32.f32 %v1818
    %1821 = vmin.xlane.f32.xlu0 %v1820
    %v1822 = vpop.xlane.xlu0 %1821
    %vm1823 = vcmp.eq.f32.partialorder %v1820, %v1822
    %v1824 = vsel %vm1823, %v1819, inf
    %1825 = vmin.xlane.f32.xlu0 %v1824
    %v1826 = vpop.xlane.xlu0 %1825
    %v1827 = vcvt.f32.s32 %v1826
    %v1828 = vcvt.f32.s32 %v1822
    %v1829 = vshll.u32 %v1828, 16
    %v1830 = vadd.s32 %v1829, %v1827
    %v1831 = vand.u32 %v1104, 65535
    %v1832 = vshra.s32 %v1104, 16
    %v1833 = vcvt.s32.f32 %v1831
    %v1834 = vcvt.s32.f32 %v1832
    %1835 = vmin.xlane.f32.xlu0 %v1834
    %v1836 = vpop.xlane.xlu0 %1835
    %vm1837 = vcmp.eq.f32.partialorder %v1834, %v1836
    %v1838 = vsel %vm1837, %v1833, inf
    %1839 = vmin.xlane.f32.xlu0 %v1838
    %v1840 = vpop.xlane.xlu0 %1839
    %v1841 = vcvt.f32.s32 %v1840
    %v1842 = vcvt.f32.s32 %v1836
    %v1843 = vshll.u32 %v1842, 16
    %v1844 = vadd.s32 %v1843, %v1841
    %v1845 = vand.u32 %v1105, 65535
    %v1846 = vshra.s32 %v1105, 16
    %v1847 = vcvt.s32.f32 %v1845
    %v1848 = vcvt.s32.f32 %v1846
    %1849 = vmin.xlane.f32.xlu0 %v1848
    %v1850 = vpop.xlane.xlu0 %1849
    %vm1851 = vcmp.eq.f32.partialorder %v1848, %v1850
    %v1852 = vsel %vm1851, %v1847, inf
    %1853 = vmin.xlane.f32.xlu0 %v1852
    %v1854 = vpop.xlane.xlu0 %1853
    %v1855 = vcvt.f32.s32 %v1854
    %v1856 = vcvt.f32.s32 %v1850
    %v1857 = vshll.u32 %v1856, 16
    %v1858 = vadd.s32 %v1857, %v1855
    %v1859 = vand.u32 %v1106, 65535
    %v1860 = vshra.s32 %v1106, 16
    %v1861 = vcvt.s32.f32 %v1859
    %v1862 = vcvt.s32.f32 %v1860
    %1863 = vmin.xlane.f32.xlu0 %v1862
    %v1864 = vpop.xlane.xlu0 %1863
    %vm1865 = vcmp.eq.f32.partialorder %v1862, %v1864
    %v1866 = vsel %vm1865, %v1861, inf
    %1867 = vmin.xlane.f32.xlu0 %v1866
    %v1868 = vpop.xlane.xlu0 %1867
    %v1869 = vcvt.f32.s32 %v1868
    %v1870 = vcvt.f32.s32 %v1864
    %v1871 = vshll.u32 %v1870, 16
    %v1872 = vadd.s32 %v1871, %v1869
    %v1873 = vand.u32 %v1107, 65535
    %v1874 = vshra.s32 %v1107, 16
    %v1875 = vcvt.s32.f32 %v1873
    %v1876 = vcvt.s32.f32 %v1874
    %1877 = vmin.xlane.f32.xlu0 %v1876
    %v1878 = vpop.xlane.xlu0 %1877
    %vm1879 = vcmp.eq.f32.partialorder %v1876, %v1878
    %v1880 = vsel %vm1879, %v1875, inf
    %1881 = vmin.xlane.f32.xlu0 %v1880
    %v1882 = vpop.xlane.xlu0 %1881
    %v1883 = vcvt.f32.s32 %v1882
    %v1884 = vcvt.f32.s32 %v1878
    %v1885 = vshll.u32 %v1884, 16
    %v1886 = vadd.s32 %v1885, %v1883
    %v1887 = vand.u32 %v1108, 65535
    %v1888 = vshra.s32 %v1108, 16
    %v1889 = vcvt.s32.f32 %v1887
    %v1890 = vcvt.s32.f32 %v1888
    %1891 = vmin.xlane.f32.xlu0 %v1890
    %v1892 = vpop.xlane.xlu0 %1891
    %vm1893 = vcmp.eq.f32.partialorder %v1890, %v1892
    %v1894 = vsel %vm1893, %v1889, inf
    %1895 = vmin.xlane.f32.xlu0 %v1894
    %v1896 = vpop.xlane.xlu0 %1895
    %v1897 = vcvt.f32.s32 %v1896
    %v1898 = vcvt.f32.s32 %v1892
    %v1899 = vshll.u32 %v1898, 16
    %v1900 = vadd.s32 %v1899, %v1897
    %v1901 = vand.u32 %v1109, 65535
    %v1902 = vshra.s32 %v1109, 16
    %v1903 = vcvt.s32.f32 %v1901
    %v1904 = vcvt.s32.f32 %v1902
    %1905 = vmin.xlane.f32.xlu0 %v1904
    %v1906 = vpop.xlane.xlu0 %1905
    %vm1907 = vcmp.eq.f32.partialorder %v1904, %v1906
    %v1908 = vsel %vm1907, %v1903, inf
    %1909 = vmin.xlane.f32.xlu0 %v1908
    %v1910 = vpop.xlane.xlu0 %1909
    %v1911 = vcvt.f32.s32 %v1910
    %v1912 = vcvt.f32.s32 %v1906
    %v1913 = vshll.u32 %v1912, 16
    %v1914 = vadd.s32 %v1913, %v1911
    %v1915 = vand.u32 %v1110, 65535
    %v1916 = vshra.s32 %v1110, 16
    %v1917 = vcvt.s32.f32 %v1915
    %v1918 = vcvt.s32.f32 %v1916
    %1919 = vmin.xlane.f32.xlu0 %v1918
    %v1920 = vpop.xlane.xlu0 %1919
    %vm1921 = vcmp.eq.f32.partialorder %v1918, %v1920
    %v1922 = vsel %vm1921, %v1917, inf
    %1923 = vmin.xlane.f32.xlu0 %v1922
    %v1924 = vpop.xlane.xlu0 %1923
    %v1925 = vcvt.f32.s32 %v1924
    %v1926 = vcvt.f32.s32 %v1920
    %v1927 = vshll.u32 %v1926, 16
    %v1928 = vadd.s32 %v1927, %v1925
    %v1929 = vand.u32 %v1111, 65535
    %v1930 = vshra.s32 %v1111, 16
    %v1931 = vcvt.s32.f32 %v1929
    %v1932 = vcvt.s32.f32 %v1930
    %1933 = vmin.xlane.f32.xlu0 %v1932
    %v1934 = vpop.xlane.xlu0 %1933
    %vm1935 = vcmp.eq.f32.partialorder %v1932, %v1934
    %v1936 = vsel %vm1935, %v1931, inf
    %1937 = vmin.xlane.f32.xlu0 %v1936
    %v1938 = vpop.xlane.xlu0 %1937
    %v1939 = vcvt.f32.s32 %v1938
    %v1940 = vcvt.f32.s32 %v1934
    %v1941 = vshll.u32 %v1940, 16
    %v1942 = vadd.s32 %v1941, %v1939
    %v1943 = vand.u32 %v1112, 65535
    %v1944 = vshra.s32 %v1112, 16
    %v1945 = vcvt.s32.f32 %v1943
    %v1946 = vcvt.s32.f32 %v1944
    %1947 = vmin.xlane.f32.xlu0 %v1946
    %v1948 = vpop.xlane.xlu0 %1947
    %vm1949 = vcmp.eq.f32.partialorder %v1946, %v1948
    %v1950 = vsel %vm1949, %v1945, inf
    %1951 = vmin.xlane.f32.xlu0 %v1950
    %v1952 = vpop.xlane.xlu0 %1951
    %v1953 = vcvt.f32.s32 %v1952
    %v1954 = vcvt.f32.s32 %v1948
    %v1955 = vshll.u32 %v1954, 16
    %v1956 = vadd.s32 %v1955, %v1953
    %v1957 = vand.u32 %v1113, 65535
    %v1958 = vshra.s32 %v1113, 16
    %v1959 = vcvt.s32.f32 %v1957
    %v1960 = vcvt.s32.f32 %v1958
    %1961 = vmin.xlane.f32.xlu0 %v1960
    %v1962 = vpop.xlane.xlu0 %1961
    %vm1963 = vcmp.eq.f32.partialorder %v1960, %v1962
    %v1964 = vsel %vm1963, %v1959, inf
    %1965 = vmin.xlane.f32.xlu0 %v1964
    %v1966 = vpop.xlane.xlu0 %1965
    %v1967 = vcvt.f32.s32 %v1966
    %v1968 = vcvt.f32.s32 %v1962
    %v1969 = vshll.u32 %v1968, 16
    %v1970 = vadd.s32 %v1969, %v1967
    %v1971 = vand.u32 %v1114, 65535
    %v1972 = vshra.s32 %v1114, 16
    %v1973 = vcvt.s32.f32 %v1971
    %v1974 = vcvt.s32.f32 %v1972
    %1975 = vmin.xlane.f32.xlu0 %v1974
    %v1976 = vpop.xlane.xlu0 %1975
    %vm1977 = vcmp.eq.f32.partialorder %v1974, %v1976
    %v1978 = vsel %vm1977, %v1973, inf
    %1979 = vmin.xlane.f32.xlu0 %v1978
    %v1980 = vpop.xlane.xlu0 %1979
    %v1981 = vcvt.f32.s32 %v1980
    %v1982 = vcvt.f32.s32 %v1976
    %v1983 = vshll.u32 %v1982, 16
    %v1984 = vadd.s32 %v1983, %v1981
    %v1985 = vand.u32 %v1115, 65535
    %v1986 = vshra.s32 %v1115, 16
    %v1987 = vcvt.s32.f32 %v1985
    %v1988 = vcvt.s32.f32 %v1986
    %1989 = vmin.xlane.f32.xlu0 %v1988
    %v1990 = vpop.xlane.xlu0 %1989
    %vm1991 = vcmp.eq.f32.partialorder %v1988, %v1990
    %v1992 = vsel %vm1991, %v1987, inf
    %1993 = vmin.xlane.f32.xlu0 %v1992
    %v1994 = vpop.xlane.xlu0 %1993
    %v1995 = vcvt.f32.s32 %v1994
    %v1996 = vcvt.f32.s32 %v1990
    %v1997 = vshll.u32 %v1996, 16
    %v1998 = vadd.s32 %v1997, %v1995
    %v1999 = vand.u32 %v1116, 65535
    %v2000 = vshra.s32 %v1116, 16
    %v2001 = vcvt.s32.f32 %v1999
    %v2002 = vcvt.s32.f32 %v2000
    %2003 = vmin.xlane.f32.xlu0 %v2002
    %v2004 = vpop.xlane.xlu0 %2003
    %vm2005 = vcmp.eq.f32.partialorder %v2002, %v2004
    %v2006 = vsel %vm2005, %v2001, inf
    %2007 = vmin.xlane.f32.xlu0 %v2006
    %v2008 = vpop.xlane.xlu0 %2007
    %v2009 = vcvt.f32.s32 %v2008
    %v2010 = vcvt.f32.s32 %v2004
    %v2011 = vshll.u32 %v2010, 16
    %v2012 = vadd.s32 %v2011, %v2009
    %vm2013 = vcmask 7168
    %2014 = vst.msk [vmem:[%s4] sm:$0xff] %vm2013, %v1130
    %2015 = vst.msk [vmem:[%s4 + $0x8] sm:$0xff] %vm2013, %v1144
    %2016 = vst.msk [vmem:[%s4 + $0x10] sm:$0xff] %vm2013, %v1158
    %2017 = vst.msk [vmem:[%s4 + $0x18] sm:$0xff] %vm2013, %v1172
    %2018 = vst.msk [vmem:[%s4 + $0x20] sm:$0xff] %vm2013, %v1186
    %2019 = vst.msk [vmem:[%s4 + $0x28] sm:$0xff] %vm2013, %v1200
    %2020 = vst.msk [vmem:[%s4 + $0x30] sm:$0xff] %vm2013, %v1214
    %2021 = vst.msk [vmem:[%s4 + $0x38] sm:$0xff] %vm2013, %v1228
    %2022 = vst.msk [vmem:[%s4 + $0x40] sm:$0xff] %vm2013, %v1242
    %2023 = vst.msk [vmem:[%s4 + $0x48] sm:$0xff] %vm2013, %v1256
    %2024 = vst.msk [vmem:[%s4 + $0x50] sm:$0xff] %vm2013, %v1270
    %2025 = vst.msk [vmem:[%s4 + $0x58] sm:$0xff] %vm2013, %v1284
    %2026 = vst.msk [vmem:[%s4 + $0x60] sm:$0xff] %vm2013, %v1298
    %2027 = vst.msk [vmem:[%s4 + $0x68] sm:$0xff] %vm2013, %v1312
    %2028 = vst.msk [vmem:[%s4 + $0x70] sm:$0xff] %vm2013, %v1326
    %2029 = vst.msk [vmem:[%s4 + $0x78] sm:$0xff] %vm2013, %v1340
    %2030 = vst.msk [vmem:[%s4 + $0x80] sm:$0xff] %vm2013, %v1354
    %2031 = vst.msk [vmem:[%s4 + $0x88] sm:$0xff] %vm2013, %v1368
    %2032 = vst.msk [vmem:[%s4 + $0x90] sm:$0xff] %vm2013, %v1382
    %2033 = vst.msk [vmem:[%s4 + $0x98] sm:$0xff] %vm2013, %v1396
    %2034 = vst.msk [vmem:[%s4 + $0xa0] sm:$0xff] %vm2013, %v1410
    %2035 = vst.msk [vmem:[%s4 + $0xa8] sm:$0xff] %vm2013, %v1424
    %2036 = vst.msk [vmem:[%s4 + $0xb0] sm:$0xff] %vm2013, %v1438
    %2037 = vst.msk [vmem:[%s4 + $0xb8] sm:$0xff] %vm2013, %v1452
    %2038 = vst.msk [vmem:[%s4 + $0xc0] sm:$0xff] %vm2013, %v1466
    %2039 = vst.msk [vmem:[%s4 + $0xc8] sm:$0xff] %vm2013, %v1480
    %2040 = vst.msk [vmem:[%s4 + $0xd0] sm:$0xff] %vm2013, %v1494
    %2041 = vst.msk [vmem:[%s4 + $0xd8] sm:$0xff] %vm2013, %v1508
    %2042 = vst.msk [vmem:[%s4 + $0xe0] sm:$0xff] %vm2013, %v1522
    %2043 = vst.msk [vmem:[%s4 + $0xe8] sm:$0xff] %vm2013, %v1536
    %2044 = vst.msk [vmem:[%s4 + $0xf0] sm:$0xff] %vm2013, %v1550
    %2045 = vst.msk [vmem:[%s4 + $0xf8] sm:$0xff] %vm2013, %v1564
    %2046 = vst.msk [vmem:[%s4 + $0x100] sm:$0xff] %vm2013, %v1578
    %2047 = vst.msk [vmem:[%s4 + $0x108] sm:$0xff] %vm2013, %v1592
    %2048 = vst.msk [vmem:[%s4 + $0x110] sm:$0xff] %vm2013, %v1606
    %2049 = vst.msk [vmem:[%s4 + $0x118] sm:$0xff] %vm2013, %v1620
    %2050 = vst.msk [vmem:[%s4 + $0x120] sm:$0xff] %vm2013, %v1634
    %2051 = vst.msk [vmem:[%s4 + $0x128] sm:$0xff] %vm2013, %v1648
    %2052 = vst.msk [vmem:[%s4 + $0x130] sm:$0xff] %vm2013, %v1662
    %2053 = vst.msk [vmem:[%s4 + $0x138] sm:$0xff] %vm2013, %v1676
    %2054 = vst.msk [vmem:[%s4 + $0x140] sm:$0xff] %vm2013, %v1690
    %2055 = vst.msk [vmem:[%s4 + $0x148] sm:$0xff] %vm2013, %v1704
    %2056 = vst.msk [vmem:[%s4 + $0x150] sm:$0xff] %vm2013, %v1718
    %2057 = vst.msk [vmem:[%s4 + $0x158] sm:$0xff] %vm2013, %v1732
    %2058 = vst.msk [vmem:[%s4 + $0x160] sm:$0xff] %vm2013, %v1746
    %2059 = vst.msk [vmem:[%s4 + $0x168] sm:$0xff] %vm2013, %v1760
    %2060 = vst.msk [vmem:[%s4 + $0x170] sm:$0xff] %vm2013, %v1774
    %2061 = vst.msk [vmem:[%s4 + $0x178] sm:$0xff] %vm2013, %v1788
    %2062 = vst.msk [vmem:[%s4 + $0x180] sm:$0xff] %vm2013, %v1802
    %2063 = vst.msk [vmem:[%s4 + $0x188] sm:$0xff] %vm2013, %v1816
    %2064 = vst.msk [vmem:[%s4 + $0x190] sm:$0xff] %vm2013, %v1830
    %2065 = vst.msk [vmem:[%s4 + $0x198] sm:$0xff] %vm2013, %v1844
    %2066 = vst.msk [vmem:[%s4 + $0x1a0] sm:$0xff] %vm2013, %v1858
    %2067 = vst.msk [vmem:[%s4 + $0x1a8] sm:$0xff] %vm2013, %v1872
    %2068 = vst.msk [vmem:[%s4 + $0x1b0] sm:$0xff] %vm2013, %v1886
    %2069 = vst.msk [vmem:[%s4 + $0x1b8] sm:$0xff] %vm2013, %v1900
    %2070 = vst.msk [vmem:[%s4 + $0x1c0] sm:$0xff] %vm2013, %v1914
    %2071 = vst.msk [vmem:[%s4 + $0x1c8] sm:$0xff] %vm2013, %v1928
    %2072 = vst.msk [vmem:[%s4 + $0x1d0] sm:$0xff] %vm2013, %v1942
    %2073 = vst.msk [vmem:[%s4 + $0x1d8] sm:$0xff] %vm2013, %v1956
    %2074 = vst.msk [vmem:[%s4 + $0x1e0] sm:$0xff] %vm2013, %v1970
    %2075 = vst.msk [vmem:[%s4 + $0x1e8] sm:$0xff] %vm2013, %v1984
    %2076 = vst.msk [vmem:[%s4 + $0x1f0] sm:$0xff] %vm2013, %v1998
    %2077 = vst.msk [vmem:[%s4 + $0x1f8] sm:$0xff] %vm2013, %v2012
    %vm2078 = vcmp.eq.s32.totalorder %v860, %v1130
    %vm2079 = vcmp.eq.s32.totalorder %v860, %v1144
    %vm2080 = vcmp.eq.s32.totalorder %v860, %v1158
    %vm2081 = vcmp.eq.s32.totalorder %v860, %v1172
    %vm2082 = vcmp.eq.s32.totalorder %v860, %v1186
    %vm2083 = vcmp.eq.s32.totalorder %v860, %v1200
    %vm2084 = vcmp.eq.s32.totalorder %v860, %v1214
    %vm2085 = vcmp.eq.s32.totalorder %v860, %v1228
    %vm2086 = vcmp.eq.s32.totalorder %v860, %v1242
    %vm2087 = vcmp.eq.s32.totalorder %v860, %v1256
    %vm2088 = vcmp.eq.s32.totalorder %v860, %v1270
    %vm2089 = vcmp.eq.s32.totalorder %v860, %v1284
    %vm2090 = vcmp.eq.s32.totalorder %v860, %v1298
    %vm2091 = vcmp.eq.s32.totalorder %v860, %v1312
    %vm2092 = vcmp.eq.s32.totalorder %v860, %v1326
    %vm2093 = vcmp.eq.s32.totalorder %v860, %v1340
    %vm2094 = vcmp.eq.s32.totalorder %v860, %v1354
    %vm2095 = vcmp.eq.s32.totalorder %v860, %v1368
    %vm2096 = vcmp.eq.s32.totalorder %v860, %v1382
    %vm2097 = vcmp.eq.s32.totalorder %v860, %v1396
    %vm2098 = vcmp.eq.s32.totalorder %v860, %v1410
    %vm2099 = vcmp.eq.s32.totalorder %v860, %v1424
    %vm2100 = vcmp.eq.s32.totalorder %v860, %v1438
    %vm2101 = vcmp.eq.s32.totalorder %v860, %v1452
    %vm2102 = vcmp.eq.s32.totalorder %v860, %v1466
    %vm2103 = vcmp.eq.s32.totalorder %v860, %v1480
    %vm2104 = vcmp.eq.s32.totalorder %v860, %v1494
    %vm2105 = vcmp.eq.s32.totalorder %v860, %v1508
    %vm2106 = vcmp.eq.s32.totalorder %v860, %v1522
    %vm2107 = vcmp.eq.s32.totalorder %v860, %v1536
    %vm2108 = vcmp.eq.s32.totalorder %v860, %v1550
    %vm2109 = vcmp.eq.s32.totalorder %v860, %v1564
    %vm2110 = vcmp.eq.s32.totalorder %v860, %v1578
    %vm2111 = vcmp.eq.s32.totalorder %v860, %v1592
    %vm2112 = vcmp.eq.s32.totalorder %v860, %v1606
    %vm2113 = vcmp.eq.s32.totalorder %v860, %v1620
    %vm2114 = vcmp.eq.s32.totalorder %v860, %v1634
    %vm2115 = vcmp.eq.s32.totalorder %v860, %v1648
    %vm2116 = vcmp.eq.s32.totalorder %v860, %v1662
    %vm2117 = vcmp.eq.s32.totalorder %v860, %v1676
    %vm2118 = vcmp.eq.s32.totalorder %v860, %v1690
    %vm2119 = vcmp.eq.s32.totalorder %v860, %v1704
    %vm2120 = vcmp.eq.s32.totalorder %v860, %v1718
    %vm2121 = vcmp.eq.s32.totalorder %v860, %v1732
    %vm2122 = vcmp.eq.s32.totalorder %v860, %v1746
    %vm2123 = vcmp.eq.s32.totalorder %v860, %v1760
    %vm2124 = vcmp.eq.s32.totalorder %v860, %v1774
    %vm2125 = vcmp.eq.s32.totalorder %v860, %v1788
    %vm2126 = vcmp.eq.s32.totalorder %v860, %v1802
    %vm2127 = vcmp.eq.s32.totalorder %v860, %v1816
    %vm2128 = vcmp.eq.s32.totalorder %v860, %v1830
    %vm2129 = vcmp.eq.s32.totalorder %v860, %v1844
    %vm2130 = vcmp.eq.s32.totalorder %v860, %v1858
    %vm2131 = vcmp.eq.s32.totalorder %v860, %v1872
    %vm2132 = vcmp.eq.s32.totalorder %v860, %v1886
    %vm2133 = vcmp.eq.s32.totalorder %v860, %v1900
    %vm2134 = vcmp.eq.s32.totalorder %v860, %v1914
    %vm2135 = vcmp.eq.s32.totalorder %v860, %v1928
    %vm2136 = vcmp.eq.s32.totalorder %v860, %v1942
    %vm2137 = vcmp.eq.s32.totalorder %v860, %v1956
    %vm2138 = vcmp.eq.s32.totalorder %v860, %v1970
    %vm2139 = vcmp.eq.s32.totalorder %v860, %v1984
    %vm2140 = vcmp.eq.s32.totalorder %v860, %v1998
    %vm2141 = vcmp.eq.s32.totalorder %v860, %v2012
    %v2142 = vsel %vm2078, 1, 0
    %v2143 = vsel %vm2079, 1, 0
    %v2144 = vsel %vm2080, 1, 0
    %v2145 = vsel %vm2081, 1, 0
    %v2146 = vsel %vm2082, 1, 0
    %v2147 = vsel %vm2083, 1, 0
    %v2148 = vsel %vm2084, 1, 0
    %v2149 = vsel %vm2085, 1, 0
    %v2150 = vsel %vm2086, 1, 0
    %v2151 = vsel %vm2087, 1, 0
    %v2152 = vsel %vm2088, 1, 0
    %v2153 = vsel %vm2089, 1, 0
    %v2154 = vsel %vm2090, 1, 0
    %v2155 = vsel %vm2091, 1, 0
    %v2156 = vsel %vm2092, 1, 0
    %v2157 = vsel %vm2093, 1, 0
    %v2158 = vsel %vm2094, 1, 0
    %v2159 = vsel %vm2095, 1, 0
    %v2160 = vsel %vm2096, 1, 0
    %v2161 = vsel %vm2097, 1, 0
    %v2162 = vsel %vm2098, 1, 0
    %v2163 = vsel %vm2099, 1, 0
    %v2164 = vsel %vm2100, 1, 0
    %v2165 = vsel %vm2101, 1, 0
    %v2166 = vsel %vm2102, 1, 0
    %v2167 = vsel %vm2103, 1, 0
    %v2168 = vsel %vm2104, 1, 0
    %v2169 = vsel %vm2105, 1, 0
    %v2170 = vsel %vm2106, 1, 0
    %v2171 = vsel %vm2107, 1, 0
    %v2172 = vsel %vm2108, 1, 0
    %v2173 = vsel %vm2109, 1, 0
    %v2174 = vsel %vm2110, 1, 0
    %v2175 = vsel %vm2111, 1, 0
    %v2176 = vsel %vm2112, 1, 0
    %v2177 = vsel %vm2113, 1, 0
    %v2178 = vsel %vm2114, 1, 0
    %v2179 = vsel %vm2115, 1, 0
    %v2180 = vsel %vm2116, 1, 0
    %v2181 = vsel %vm2117, 1, 0
    %v2182 = vsel %vm2118, 1, 0
    %v2183 = vsel %vm2119, 1, 0
    %v2184 = vsel %vm2120, 1, 0
    %v2185 = vsel %vm2121, 1, 0
    %v2186 = vsel %vm2122, 1, 0
    %v2187 = vsel %vm2123, 1, 0
    %v2188 = vsel %vm2124, 1, 0
    %v2189 = vsel %vm2125, 1, 0
    %v2190 = vsel %vm2126, 1, 0
    %v2191 = vsel %vm2127, 1, 0
    %v2192 = vsel %vm2128, 1, 0
    %v2193 = vsel %vm2129, 1, 0
    %v2194 = vsel %vm2130, 1, 0
    %v2195 = vsel %vm2131, 1, 0
    %v2196 = vsel %vm2132, 1, 0
    %v2197 = vsel %vm2133, 1, 0
    %v2198 = vsel %vm2134, 1, 0
    %v2199 = vsel %vm2135, 1, 0
    %v2200 = vsel %vm2136, 1, 0
    %v2201 = vsel %vm2137, 1, 0
    %v2202 = vsel %vm2138, 1, 0
    %v2203 = vsel %vm2139, 1, 0
    %v2204 = vsel %vm2140, 1, 0
    %v2205 = vsel %vm2141, 1, 0
    %v2206 = vcvt.s32.f32 %v2142
    %v2207 = vcvt.s32.f32 %v2143
    %v2208 = vcvt.s32.f32 %v2144
    %v2209 = vcvt.s32.f32 %v2145
    %v2210 = vcvt.s32.f32 %v2146
    %v2211 = vcvt.s32.f32 %v2147
    %v2212 = vcvt.s32.f32 %v2148
    %v2213 = vcvt.s32.f32 %v2149
    %v2214 = vcvt.s32.f32 %v2150
    %v2215 = vcvt.s32.f32 %v2151
    %v2216 = vcvt.s32.f32 %v2152
    %v2217 = vcvt.s32.f32 %v2153
    %v2218 = vcvt.s32.f32 %v2154
    %v2219 = vcvt.s32.f32 %v2155
    %v2220 = vcvt.s32.f32 %v2156
    %v2221 = vcvt.s32.f32 %v2157
    %v2222 = vcvt.s32.f32 %v2158
    %v2223 = vcvt.s32.f32 %v2159
    %v2224 = vcvt.s32.f32 %v2160
    %v2225 = vcvt.s32.f32 %v2161
    %v2226 = vcvt.s32.f32 %v2162
    %v2227 = vcvt.s32.f32 %v2163
    %v2228 = vcvt.s32.f32 %v2164
    %v2229 = vcvt.s32.f32 %v2165
    %v2230 = vcvt.s32.f32 %v2166
    %v2231 = vcvt.s32.f32 %v2167
    %v2232 = vcvt.s32.f32 %v2168
    %v2233 = vcvt.s32.f32 %v2169
    %v2234 = vcvt.s32.f32 %v2170
    %v2235 = vcvt.s32.f32 %v2171
    %v2236 = vcvt.s32.f32 %v2172
    %v2237 = vcvt.s32.f32 %v2173
    %v2238 = vcvt.s32.f32 %v2174
    %v2239 = vcvt.s32.f32 %v2175
    %v2240 = vcvt.s32.f32 %v2176
    %v2241 = vcvt.s32.f32 %v2177
    %v2242 = vcvt.s32.f32 %v2178
    %v2243 = vcvt.s32.f32 %v2179
    %v2244 = vcvt.s32.f32 %v2180
    %v2245 = vcvt.s32.f32 %v2181
    %v2246 = vcvt.s32.f32 %v2182
    %v2247 = vcvt.s32.f32 %v2183
    %v2248 = vcvt.s32.f32 %v2184
    %v2249 = vcvt.s32.f32 %v2185
    %v2250 = vcvt.s32.f32 %v2186
    %v2251 = vcvt.s32.f32 %v2187
    %v2252 = vcvt.s32.f32 %v2188
    %v2253 = vcvt.s32.f32 %v2189
    %v2254 = vcvt.s32.f32 %v2190
    %v2255 = vcvt.s32.f32 %v2191
    %v2256 = vcvt.s32.f32 %v2192
    %v2257 = vcvt.s32.f32 %v2193
    %v2258 = vcvt.s32.f32 %v2194
    %v2259 = vcvt.s32.f32 %v2195
    %v2260 = vcvt.s32.f32 %v2196
    %v2261 = vcvt.s32.f32 %v2197
    %v2262 = vcvt.s32.f32 %v2198
    %v2263 = vcvt.s32.f32 %v2199
    %v2264 = vcvt.s32.f32 %v2200
    %v2265 = vcvt.s32.f32 %v2201
    %v2266 = vcvt.s32.f32 %v2202
    %v2267 = vcvt.s32.f32 %v2203
    %v2268 = vcvt.s32.f32 %v2204
    %v2269 = vcvt.s32.f32 %v2205
    %2270 = vmatprep.subr.mxu0 0.0
    %2271 = vmatpush1.msra.mxu0 %v82
    %2272 = vmatprep.subr.mxu0 0.0
    %2273 = vmatpush1.msra.mxu0 %v83
    %2274 = vmatprep.subr.mxu0 0.0
    %2275 = vmatpush1.msra.mxu0 %v84
    %2276 = vmatprep.subr.mxu0 0.0
    %2277 = vmatpush1.msra.mxu0 %v85
    %2278 = vmatprep.subr.mxu0 0.0
    %2279 = vmatpush1.msra.mxu0 %v86
    %2280 = vmatprep.subr.mxu0 0.0
    %2281 = vmatpush1.msra.mxu0 %v87
    %2282 = vmatprep.subr.mxu0 0.0
    %2283 = vmatpush1.msra.mxu0 %v88
    %2284 = vmatprep.subr.mxu0 0.0
    %2285 = vmatpush1.msra.mxu0 %v89
    %2286 = vmatprep.subr.mxu0 0.0
    %2287 = vmatpush1.msra.mxu0 %v90
    %2288 = vmatprep.subr.mxu0 0.0
    %2289 = vmatpush1.msra.mxu0 %v91
    %2290 = vmatprep.subr.mxu0 0.0
    %2291 = vmatpush1.msra.mxu0 %v92
    %2292 = vmatprep.subr.mxu0 0.0
    %2293 = vmatpush1.msra.mxu0 %v93
    %2294 = vmatprep.subr.mxu0 0.0
    %2295 = vmatpush1.msra.mxu0 %v94
    %2296 = vmatprep.subr.mxu0 0.0
    %2297 = vmatpush1.msra.mxu0 %v95
    %2298 = vmatprep.subr.mxu0 0.0
    %2299 = vmatpush1.msra.mxu0 %v96
    %2300 = vmatprep.subr.mxu0 0.0
    %2301 = vmatpush1.msra.mxu0 %v97
    %2302 = vmatprep.subr.mxu0 0.0
    %2303 = vmatpush1.msra.mxu0 0.0
    %2304 = vmatprep.subr.mxu0 0.0
    %2305 = vmatpush1.msra.mxu0 0.0
    %2306 = vmatprep.subr.mxu0 0.0
    %2307 = vmatpush1.msra.mxu0 0.0
    %2308 = vmatprep.subr.mxu0 0.0
    %2309 = vmatpush1.msra.mxu0 0.0
    %2310 = vmatprep.subr.mxu0 0.0
    %2311 = vmatpush1.msra.mxu0 0.0
    %2312 = vmatprep.subr.mxu0 0.0
    %2313 = vmatpush1.msra.mxu0 0.0
    %2314 = vmatprep.subr.mxu0 0.0
    %2315 = vmatpush1.msra.mxu0 0.0
    %2316 = vmatprep.subr.mxu0 0.0
    %2317 = vmatpush1.msra.mxu0 0.0
    %2318 = vmatprep.subr.mxu0 0.0
    %2319 = vmatpush1.msra.mxu0 0.0
    %2320 = vmatprep.subr.mxu0 0.0
    %2321 = vmatpush1.msra.mxu0 0.0
    %2322 = vmatprep.subr.mxu0 0.0
    %2323 = vmatpush1.msra.mxu0 0.0
    %2324 = vmatprep.subr.mxu0 0.0
    %2325 = vmatpush1.msra.mxu0 0.0
    %2326 = vmatprep.subr.mxu0 0.0
    %2327 = vmatpush1.msra.mxu0 0.0
    %2328 = vmatprep.subr.mxu0 0.0
    %2329 = vmatpush1.msra.mxu0 0.0
    %2330 = vmatprep.subr.mxu0 0.0
    %2331 = vmatpush1.msra.mxu0 0.0
    %2332 = vmatprep.subr.mxu0 0.0
    %2333 = vmatpush1.msra.mxu0 0.0
    %2334 = vmatprep.mubr.f32.mxu0 0.0
    %2335 = vmatmul.mubr.f32.gmra.mrb[0].mxu0 %v2206
    %v2336 = vpop.f32.mrb[0].mxu0
    %v2337 = vadd.f32 0.0, %v2336
    %v2338 = vpop.f32.mrb[0].mxu0
    %2339 = vmatprep.mubr.f32.mxu0 0.0
    %2340 = vmatmul.mubr.f32.gmra.mrb[0].mxu0 %v2207
    %v2341 = vpop.f32.mrb[0].mxu0
    %v2342 = vadd.f32 0.0, %v2341
    %v2343 = vpop.f32.mrb[0].mxu0
    %2344 = vmatprep.mubr.f32.mxu0 0.0
    %2345 = vmatmul.mubr.f32.gmra.mrb[0].mxu0 %v2208
    %v2346 = vpop.f32.mrb[0].mxu0
    %v2347 = vadd.f32 0.0, %v2346
    %v2348 = vpop.f32.mrb[0].mxu0
    %2349 = vmatprep.mubr.f32.mxu0 0.0
    %2350 = vmatmul.mubr.f32.gmra.mrb[0].mxu0 %v2209
    %v2351 = vpop.f32.mrb[0].mxu0
    %v2352 = vadd.f32 0.0, %v2351
    %v2353 = vpop.f32.mrb[0].mxu0
    %2354 = vmatprep.mubr.f32.mxu0 0.0
    %2355 = vmatmul.mubr.f32.gmra.mrb[0].mxu0 %v2210
    %v2356 = vpop.f32.mrb[0].mxu0
    %v2357 = vadd.f32 0.0, %v2356
    %v2358 = vpop.f32.mrb[0].mxu0
    %2359 = vmatprep.mubr.f32.mxu0 0.0
    %2360 = vmatmul.mubr.f32.gmra.mrb[0].mxu0 %v2211
    %v2361 = vpop.f32.mrb[0].mxu0
    %v2362 = vadd.f32 0.0, %v2361
    %v2363 = vpop.f32.mrb[0].mxu0
    %2364 = vmatprep.mubr.f32.mxu0 0.0
    %2365 = vmatmul.mubr.f32.gmra.mrb[0].mxu0 %v2212
    %v2366 = vpop.f32.mrb[0].mxu0
    %v2367 = vadd.f32 0.0, %v2366
    %v2368 = vpop.f32.mrb[0].mxu0
    %2369 = vmatprep.mubr.f32.mxu0 0.0
    %2370 = vmatmul.mubr.f32.gmra.mrb[0].mxu0 %v2213
    %v2371 = vpop.f32.mrb[0].mxu0
    %v2372 = vadd.f32 0.0, %v2371
    %v2373 = vpop.f32.mrb[0].mxu0
    %2374 = vmatprep.mubr.f32.mxu0 0.0
    %2375 = vmatmul.mubr.f32.gmra.mrb[0].mxu0 %v2214
    %v2376 = vpop.f32.mrb[0].mxu0
    %v2377 = vadd.f32 0.0, %v2376
    %v2378 = vpop.f32.mrb[0].mxu0
    %2379 = vmatprep.mubr.f32.mxu0 0.0
    %2380 = vmatmul.mubr.f32.gmra.mrb[0].mxu0 %v2215
    %v2381 = vpop.f32.mrb[0].mxu0
    %v2382 = vadd.f32 0.0, %v2381
    %v2383 = vpop.f32.mrb[0].mxu0
    %2384 = vmatprep.mubr.f32.mxu0 0.0
    %2385 = vmatmul.mubr.f32.gmra.mrb[0].mxu0 %v2216
    %v2386 = vpop.f32.mrb[0].mxu0
    %v2387 = vadd.f32 0.0, %v2386
    %v2388 = vpop.f32.mrb[0].mxu0
    %2389 = vmatprep.mubr.f32.mxu0 0.0
    %2390 = vmatmul.mubr.f32.gmra.mrb[0].mxu0 %v2217
    %v2391 = vpop.f32.mrb[0].mxu0
    %v2392 = vadd.f32 0.0, %v2391
    %v2393 = vpop.f32.mrb[0].mxu0
    %2394 = vmatprep.mubr.f32.mxu0 0.0
    %2395 = vmatmul.mubr.f32.gmra.mrb[0].mxu0 %v2218
    %v2396 = vpop.f32.mrb[0].mxu0
    %v2397 = vadd.f32 0.0, %v2396
    %v2398 = vpop.f32.mrb[0].mxu0
    %2399 = vmatprep.mubr.f32.mxu0 0.0
    %2400 = vmatmul.mubr.f32.gmra.mrb[0].mxu0 %v2219
    %v2401 = vpop.f32.mrb[0].mxu0
    %v2402 = vadd.f32 0.0, %v2401
    %v2403 = vpop.f32.mrb[0].mxu0
    %2404 = vmatprep.mubr.f32.mxu0 0.0
    %2405 = vmatmul.mubr.f32.gmra.mrb[0].mxu0 %v2220
    %v2406 = vpop.f32.mrb[0].mxu0
    %v2407 = vadd.f32 0.0, %v2406
    %v2408 = vpop.f32.mrb[0].mxu0
    %2409 = vmatprep.mubr.f32.mxu0 0.0
    %2410 = vmatmul.mubr.f32.gmra.mrb[0].mxu0 %v2221
    %v2411 = vpop.f32.mrb[0].mxu0
    %v2412 = vadd.f32 0.0, %v2411
    %v2413 = vpop.f32.mrb[0].mxu0
    %2414 = vmatprep.mubr.f32.mxu0 0.0
    %2415 = vmatmul.mubr.f32.gmra.mrb[0].mxu0 %v2222
    %v2416 = vpop.f32.mrb[0].mxu0
    %v2417 = vadd.f32 0.0, %v2416
    %v2418 = vpop.f32.mrb[0].mxu0
    %2419 = vmatprep.mubr.f32.mxu0 0.0
    %2420 = vmatmul.mubr.f32.gmra.mrb[0].mxu0 %v2223
    %v2421 = vpop.f32.mrb[0].mxu0
    %v2422 = vadd.f32 0.0, %v2421
    %v2423 = vpop.f32.mrb[0].mxu0
    %2424 = vmatprep.mubr.f32.mxu0 0.0
    %2425 = vmatmul.mubr.f32.gmra.mrb[0].mxu0 %v2224
    %v2426 = vpop.f32.mrb[0].mxu0
    %v2427 = vadd.f32 0.0, %v2426
    %v2428 = vpop.f32.mrb[0].mxu0
    %2429 = vmatprep.mubr.f32.mxu0 0.0
    %2430 = vmatmul.mubr.f32.gmra.mrb[0].mxu0 %v2225
    %v2431 = vpop.f32.mrb[0].mxu0
    %v2432 = vadd.f32 0.0, %v2431
    %v2433 = vpop.f32.mrb[0].mxu0
    %2434 = vmatprep.mubr.f32.mxu0 0.0
    %2435 = vmatmul.mubr.f32.gmra.mrb[0].mxu0 %v2226
    %v2436 = vpop.f32.mrb[0].mxu0
    %v2437 = vadd.f32 0.0, %v2436
    %v2438 = vpop.f32.mrb[0].mxu0
    %2439 = vmatprep.mubr.f32.mxu0 0.0
    %2440 = vmatmul.mubr.f32.gmra.mrb[0].mxu0 %v2227
    %v2441 = vpop.f32.mrb[0].mxu0
    %v2442 = vadd.f32 0.0, %v2441
    %v2443 = vpop.f32.mrb[0].mxu0
    %2444 = vmatprep.mubr.f32.mxu0 0.0
    %2445 = vmatmul.mubr.f32.gmra.mrb[0].mxu0 %v2228
    %v2446 = vpop.f32.mrb[0].mxu0
    %v2447 = vadd.f32 0.0, %v2446
    %v2448 = vpop.f32.mrb[0].mxu0
    %2449 = vmatprep.mubr.f32.mxu0 0.0
    %2450 = vmatmul.mubr.f32.gmra.mrb[0].mxu0 %v2229
    %v2451 = vpop.f32.mrb[0].mxu0
    %v2452 = vadd.f32 0.0, %v2451
    %v2453 = vpop.f32.mrb[0].mxu0
    %2454 = vmatprep.mubr.f32.mxu0 0.0
    %2455 = vmatmul.mubr.f32.gmra.mrb[0].mxu0 %v2230
    %v2456 = vpop.f32.mrb[0].mxu0
    %v2457 = vadd.f32 0.0, %v2456
    %v2458 = vpop.f32.mrb[0].mxu0
    %2459 = vmatprep.mubr.f32.mxu0 0.0
    %2460 = vmatmul.mubr.f32.gmra.mrb[0].mxu0 %v2231
    %v2461 = vpop.f32.mrb[0].mxu0
    %v2462 = vadd.f32 0.0, %v2461
    %v2463 = vpop.f32.mrb[0].mxu0
    %2464 = vmatprep.mubr.f32.mxu0 0.0
    %2465 = vmatmul.mubr.f32.gmra.mrb[0].mxu0 %v2232
    %v2466 = vpop.f32.mrb[0].mxu0
    %v2467 = vadd.f32 0.0, %v2466
    %v2468 = vpop.f32.mrb[0].mxu0
    %2469 = vmatprep.mubr.f32.mxu0 0.0
    %2470 = vmatmul.mubr.f32.gmra.mrb[0].mxu0 %v2233
    %v2471 = vpop.f32.mrb[0].mxu0
    %v2472 = vadd.f32 0.0, %v2471
    %v2473 = vpop.f32.mrb[0].mxu0
    %2474 = vmatprep.mubr.f32.mxu0 0.0
    %2475 = vmatmul.mubr.f32.gmra.mrb[0].mxu0 %v2234
    %v2476 = vpop.f32.mrb[0].mxu0
    %v2477 = vadd.f32 0.0, %v2476
    %v2478 = vpop.f32.mrb[0].mxu0
    %2479 = vmatprep.mubr.f32.mxu0 0.0
    %2480 = vmatmul.mubr.f32.gmra.mrb[0].mxu0 %v2235
    %v2481 = vpop.f32.mrb[0].mxu0
    %v2482 = vadd.f32 0.0, %v2481
    %v2483 = vpop.f32.mrb[0].mxu0
    %2484 = vmatprep.mubr.f32.mxu0 0.0
    %2485 = vmatmul.mubr.f32.gmra.mrb[0].mxu0 %v2236
    %v2486 = vpop.f32.mrb[0].mxu0
    %v2487 = vadd.f32 0.0, %v2486
    %v2488 = vpop.f32.mrb[0].mxu0
    %2489 = vmatprep.mubr.f32.mxu0 0.0
    %2490 = vmatmul.mubr.f32.gmra.mrb[0].mxu0 %v2237
    %v2491 = vpop.f32.mrb[0].mxu0
    %v2492 = vadd.f32 0.0, %v2491
    %v2493 = vpop.f32.mrb[0].mxu0
    %2494 = vmatprep.mubr.f32.mxu0 0.0
    %2495 = vmatmul.mubr.f32.gmra.mrb[0].mxu0 %v2238
    %v2496 = vpop.f32.mrb[0].mxu0
    %v2497 = vadd.f32 0.0, %v2496
    %v2498 = vpop.f32.mrb[0].mxu0
    %2499 = vmatprep.mubr.f32.mxu0 0.0
    %2500 = vmatmul.mubr.f32.gmra.mrb[0].mxu0 %v2239
    %v2501 = vpop.f32.mrb[0].mxu0
    %v2502 = vadd.f32 0.0, %v2501
    %v2503 = vpop.f32.mrb[0].mxu0
    %2504 = vmatprep.mubr.f32.mxu0 0.0
    %2505 = vmatmul.mubr.f32.gmra.mrb[0].mxu0 %v2240
    %v2506 = vpop.f32.mrb[0].mxu0
    %v2507 = vadd.f32 0.0, %v2506
    %v2508 = vpop.f32.mrb[0].mxu0
    %2509 = vmatprep.mubr.f32.mxu0 0.0
    %2510 = vmatmul.mubr.f32.gmra.mrb[0].mxu0 %v2241
    %v2511 = vpop.f32.mrb[0].mxu0
    %v2512 = vadd.f32 0.0, %v2511
    %v2513 = vpop.f32.mrb[0].mxu0
    %2514 = vmatprep.mubr.f32.mxu0 0.0
    %2515 = vmatmul.mubr.f32.gmra.mrb[0].mxu0 %v2242
    %v2516 = vpop.f32.mrb[0].mxu0
    %v2517 = vadd.f32 0.0, %v2516
    %v2518 = vpop.f32.mrb[0].mxu0
    %2519 = vmatprep.mubr.f32.mxu0 0.0
    %2520 = vmatmul.mubr.f32.gmra.mrb[0].mxu0 %v2243
    %v2521 = vpop.f32.mrb[0].mxu0
    %v2522 = vadd.f32 0.0, %v2521
    %v2523 = vpop.f32.mrb[0].mxu0
    %2524 = vmatprep.mubr.f32.mxu0 0.0
    %2525 = vmatmul.mubr.f32.gmra.mrb[0].mxu0 %v2244
    %v2526 = vpop.f32.mrb[0].mxu0
    %v2527 = vadd.f32 0.0, %v2526
    %v2528 = vpop.f32.mrb[0].mxu0
    %2529 = vmatprep.mubr.f32.mxu0 0.0
    %2530 = vmatmul.mubr.f32.gmra.mrb[0].mxu0 %v2245
    %v2531 = vpop.f32.mrb[0].mxu0
    %v2532 = vadd.f32 0.0, %v2531
    %v2533 = vpop.f32.mrb[0].mxu0
    %2534 = vmatprep.mubr.f32.mxu0 0.0
    %2535 = vmatmul.mubr.f32.gmra.mrb[0].mxu0 %v2246
    %v2536 = vpop.f32.mrb[0].mxu0
    %v2537 = vadd.f32 0.0, %v2536
    %v2538 = vpop.f32.mrb[0].mxu0
    %2539 = vmatprep.mubr.f32.mxu0 0.0
    %2540 = vmatmul.mubr.f32.gmra.mrb[0].mxu0 %v2247
    %v2541 = vpop.f32.mrb[0].mxu0
    %v2542 = vadd.f32 0.0, %v2541
    %v2543 = vpop.f32.mrb[0].mxu0
    %2544 = vmatprep.mubr.f32.mxu0 0.0
    %2545 = vmatmul.mubr.f32.gmra.mrb[0].mxu0 %v2248
    %v2546 = vpop.f32.mrb[0].mxu0
    %v2547 = vadd.f32 0.0, %v2546
    %v2548 = vpop.f32.mrb[0].mxu0
    %2549 = vmatprep.mubr.f32.mxu0 0.0
    %2550 = vmatmul.mubr.f32.gmra.mrb[0].mxu0 %v2249
    %v2551 = vpop.f32.mrb[0].mxu0
    %v2552 = vadd.f32 0.0, %v2551
    %v2553 = vpop.f32.mrb[0].mxu0
    %2554 = vmatprep.mubr.f32.mxu0 0.0
    %2555 = vmatmul.mubr.f32.gmra.mrb[0].mxu0 %v2250
    %v2556 = vpop.f32.mrb[0].mxu0
    %v2557 = vadd.f32 0.0, %v2556
    %v2558 = vpop.f32.mrb[0].mxu0
    %2559 = vmatprep.mubr.f32.mxu0 0.0
    %2560 = vmatmul.mubr.f32.gmra.mrb[0].mxu0 %v2251
    %v2561 = vpop.f32.mrb[0].mxu0
    %v2562 = vadd.f32 0.0, %v2561
    %v2563 = vpop.f32.mrb[0].mxu0
    %2564 = vmatprep.mubr.f32.mxu0 0.0
    %2565 = vmatmul.mubr.f32.gmra.mrb[0].mxu0 %v2252
    %v2566 = vpop.f32.mrb[0].mxu0
    %v2567 = vadd.f32 0.0, %v2566
    %v2568 = vpop.f32.mrb[0].mxu0
    %2569 = vmatprep.mubr.f32.mxu0 0.0
    %2570 = vmatmul.mubr.f32.gmra.mrb[0].mxu0 %v2253
    %v2571 = vpop.f32.mrb[0].mxu0
    %v2572 = vadd.f32 0.0, %v2571
    %v2573 = vpop.f32.mrb[0].mxu0
    %2574 = vmatprep.mubr.f32.mxu0 0.0
    %2575 = vmatmul.mubr.f32.gmra.mrb[0].mxu0 %v2254
    %v2576 = vpop.f32.mrb[0].mxu0
    %v2577 = vadd.f32 0.0, %v2576
    %v2578 = vpop.f32.mrb[0].mxu0
    %2579 = vmatprep.mubr.f32.mxu0 0.0
    %2580 = vmatmul.mubr.f32.gmra.mrb[0].mxu0 %v2255
    %v2581 = vpop.f32.mrb[0].mxu0
    %v2582 = vadd.f32 0.0, %v2581
    %v2583 = vpop.f32.mrb[0].mxu0
    %2584 = vmatprep.mubr.f32.mxu0 0.0
    %2585 = vmatmul.mubr.f32.gmra.mrb[0].mxu0 %v2256
    %v2586 = vpop.f32.mrb[0].mxu0
    %v2587 = vadd.f32 0.0, %v2586
    %v2588 = vpop.f32.mrb[0].mxu0
    %2589 = vmatprep.mubr.f32.mxu0 0.0
    %2590 = vmatmul.mubr.f32.gmra.mrb[0].mxu0 %v2257
    %v2591 = vpop.f32.mrb[0].mxu0
    %v2592 = vadd.f32 0.0, %v2591
    %v2593 = vpop.f32.mrb[0].mxu0
    %2594 = vmatprep.mubr.f32.mxu0 0.0
    %2595 = vmatmul.mubr.f32.gmra.mrb[0].mxu0 %v2258
    %v2596 = vpop.f32.mrb[0].mxu0
    %v2597 = vadd.f32 0.0, %v2596
    %v2598 = vpop.f32.mrb[0].mxu0
    %2599 = vmatprep.mubr.f32.mxu0 0.0
    %2600 = vmatmul.mubr.f32.gmra.mrb[0].mxu0 %v2259
    %v2601 = vpop.f32.mrb[0].mxu0
    %v2602 = vadd.f32 0.0, %v2601
    %v2603 = vpop.f32.mrb[0].mxu0
    %2604 = vmatprep.mubr.f32.mxu0 0.0
    %2605 = vmatmul.mubr.f32.gmra.mrb[0].mxu0 %v2260
    %v2606 = vpop.f32.mrb[0].mxu0
    %v2607 = vadd.f32 0.0, %v2606
    %v2608 = vpop.f32.mrb[0].mxu0
    %2609 = vmatprep.mubr.f32.mxu0 0.0
    %2610 = vmatmul.mubr.f32.gmra.mrb[0].mxu0 %v2261
    %v2611 = vpop.f32.mrb[0].mxu0
    %v2612 = vadd.f32 0.0, %v2611
    %v2613 = vpop.f32.mrb[0].mxu0
    %2614 = vmatprep.mubr.f32.mxu0 0.0
    %2615 = vmatmul.mubr.f32.gmra.mrb[0].mxu0 %v2262
    %v2616 = vpop.f32.mrb[0].mxu0
    %v2617 = vadd.f32 0.0, %v2616
    %v2618 = vpop.f32.mrb[0].mxu0
    %2619 = vmatprep.mubr.f32.mxu0 0.0
    %2620 = vmatmul.mubr.f32.gmra.mrb[0].mxu0 %v2263
    %v2621 = vpop.f32.mrb[0].mxu0
    %v2622 = vadd.f32 0.0, %v2621
    %v2623 = vpop.f32.mrb[0].mxu0
    %2624 = vmatprep.mubr.f32.mxu0 0.0
    %2625 = vmatmul.mubr.f32.gmra.mrb[0].mxu0 %v2264
    %v2626 = vpop.f32.mrb[0].mxu0
    %v2627 = vadd.f32 0.0, %v2626
    %v2628 = vpop.f32.mrb[0].mxu0
    %2629 = vmatprep.mubr.f32.mxu0 0.0
    %2630 = vmatmul.mubr.f32.gmra.mrb[0].mxu0 %v2265
    %v2631 = vpop.f32.mrb[0].mxu0
    %v2632 = vadd.f32 0.0, %v2631
    %v2633 = vpop.f32.mrb[0].mxu0
    %2634 = vmatprep.mubr.f32.mxu0 0.0
    %2635 = vmatmul.mubr.f32.gmra.mrb[0].mxu0 %v2266
    %v2636 = vpop.f32.mrb[0].mxu0
    %v2637 = vadd.f32 0.0, %v2636
    %v2638 = vpop.f32.mrb[0].mxu0
    %2639 = vmatprep.mubr.f32.mxu0 0.0
    %2640 = vmatmul.mubr.f32.gmra.mrb[0].mxu0 %v2267
    %v2641 = vpop.f32.mrb[0].mxu0
    %v2642 = vadd.f32 0.0, %v2641
    %v2643 = vpop.f32.mrb[0].mxu0
    %2644 = vmatprep.mubr.f32.mxu0 0.0
    %2645 = vmatmul.mubr.f32.gmra.mrb[0].mxu0 %v2268
    %v2646 = vpop.f32.mrb[0].mxu0
    %v2647 = vadd.f32 0.0, %v2646
    %v2648 = vpop.f32.mrb[0].mxu0
    %2649 = vmatprep.mubr.f32.mxu0 0.0
    %2650 = vmatmul.mubr.f32.gmra.mrb[0].mxu0 %v2269
    %v2651 = vpop.f32.mrb[0].mxu0
    %v2652 = vadd.f32 0.0, %v2651
    %v2653 = vpop.f32.mrb[0].mxu0
    %2654 = vdwg.mxu0
    %2655 = vst.msk [vmem:[%s3] sm:$0xff] %vm99, %v2337
    %2656 = vst.msk [vmem:[%s3 + $0x8] sm:$0xff] %vm99, %v2342
    %2657 = vst.msk [vmem:[%s3 + $0x10] sm:$0xff] %vm99, %v2347
    %2658 = vst.msk [vmem:[%s3 + $0x18] sm:$0xff] %vm99, %v2352
    %2659 = vst.msk [vmem:[%s3 + $0x20] sm:$0xff] %vm99, %v2357
    %2660 = vst.msk [vmem:[%s3 + $0x28] sm:$0xff] %vm99, %v2362
    %2661 = vst.msk [vmem:[%s3 + $0x30] sm:$0xff] %vm99, %v2367
    %2662 = vst.msk [vmem:[%s3 + $0x38] sm:$0xff] %vm99, %v2372
    %2663 = vst.msk [vmem:[%s3 + $0x40] sm:$0xff] %vm99, %v2377
    %2664 = vst.msk [vmem:[%s3 + $0x48] sm:$0xff] %vm99, %v2382
    %2665 = vst.msk [vmem:[%s3 + $0x50] sm:$0xff] %vm99, %v2387
    %2666 = vst.msk [vmem:[%s3 + $0x58] sm:$0xff] %vm99, %v2392
    %2667 = vst.msk [vmem:[%s3 + $0x60] sm:$0xff] %vm99, %v2397
    %2668 = vst.msk [vmem:[%s3 + $0x68] sm:$0xff] %vm99, %v2402
    %2669 = vst.msk [vmem:[%s3 + $0x70] sm:$0xff] %vm99, %v2407
    %2670 = vst.msk [vmem:[%s3 + $0x78] sm:$0xff] %vm99, %v2412
    %2671 = vst.msk [vmem:[%s3 + $0x80] sm:$0xff] %vm99, %v2417
    %2672 = vst.msk [vmem:[%s3 + $0x88] sm:$0xff] %vm99, %v2422
    %2673 = vst.msk [vmem:[%s3 + $0x90] sm:$0xff] %vm99, %v2427
    %2674 = vst.msk [vmem:[%s3 + $0x98] sm:$0xff] %vm99, %v2432
    %2675 = vst.msk [vmem:[%s3 + $0xa0] sm:$0xff] %vm99, %v2437
    %2676 = vst.msk [vmem:[%s3 + $0xa8] sm:$0xff] %vm99, %v2442
    %2677 = vst.msk [vmem:[%s3 + $0xb0] sm:$0xff] %vm99, %v2447
    %2678 = vst.msk [vmem:[%s3 + $0xb8] sm:$0xff] %vm99, %v2452
    %2679 = vst.msk [vmem:[%s3 + $0xc0] sm:$0xff] %vm99, %v2457
    %2680 = vst.msk [vmem:[%s3 + $0xc8] sm:$0xff] %vm99, %v2462
    %2681 = vst.msk [vmem:[%s3 + $0xd0] sm:$0xff] %vm99, %v2467
    %2682 = vst.msk [vmem:[%s3 + $0xd8] sm:$0xff] %vm99, %v2472
    %2683 = vst.msk [vmem:[%s3 + $0xe0] sm:$0xff] %vm99, %v2477
    %2684 = vst.msk [vmem:[%s3 + $0xe8] sm:$0xff] %vm99, %v2482
    %2685 = vst.msk [vmem:[%s3 + $0xf0] sm:$0xff] %vm99, %v2487
    %2686 = vst.msk [vmem:[%s3 + $0xf8] sm:$0xff] %vm99, %v2492
    %2687 = vst.msk [vmem:[%s3 + $0x100] sm:$0xff] %vm99, %v2497
    %2688 = vst.msk [vmem:[%s3 + $0x108] sm:$0xff] %vm99, %v2502
    %2689 = vst.msk [vmem:[%s3 + $0x110] sm:$0xff] %vm99, %v2507
    %2690 = vst.msk [vmem:[%s3 + $0x118] sm:$0xff] %vm99, %v2512
    %2691 = vst.msk [vmem:[%s3 + $0x120] sm:$0xff] %vm99, %v2517
    %2692 = vst.msk [vmem:[%s3 + $0x128] sm:$0xff] %vm99, %v2522
    %2693 = vst.msk [vmem:[%s3 + $0x130] sm:$0xff] %vm99, %v2527
    %2694 = vst.msk [vmem:[%s3 + $0x138] sm:$0xff] %vm99, %v2532
    %2695 = vst.msk [vmem:[%s3 + $0x140] sm:$0xff] %vm99, %v2537
    %2696 = vst.msk [vmem:[%s3 + $0x148] sm:$0xff] %vm99, %v2542
    %2697 = vst.msk [vmem:[%s3 + $0x150] sm:$0xff] %vm99, %v2547
    %2698 = vst.msk [vmem:[%s3 + $0x158] sm:$0xff] %vm99, %v2552
    %2699 = vst.msk [vmem:[%s3 + $0x160] sm:$0xff] %vm99, %v2557
    %2700 = vst.msk [vmem:[%s3 + $0x168] sm:$0xff] %vm99, %v2562
    %2701 = vst.msk [vmem:[%s3 + $0x170] sm:$0xff] %vm99, %v2567
    %2702 = vst.msk [vmem:[%s3 + $0x178] sm:$0xff] %vm99, %v2572
    %2703 = vst.msk [vmem:[%s3 + $0x180] sm:$0xff] %vm99, %v2577
    %2704 = vst.msk [vmem:[%s3 + $0x188] sm:$0xff] %vm99, %v2582
    %2705 = vst.msk [vmem:[%s3 + $0x190] sm:$0xff] %vm99, %v2587
    %2706 = vst.msk [vmem:[%s3 + $0x198] sm:$0xff] %vm99, %v2592
    %2707 = vst.msk [vmem:[%s3 + $0x1a0] sm:$0xff] %vm99, %v2597
    %2708 = vst.msk [vmem:[%s3 + $0x1a8] sm:$0xff] %vm99, %v2602
    %2709 = vst.msk [vmem:[%s3 + $0x1b0] sm:$0xff] %vm99, %v2607
    %2710 = vst.msk [vmem:[%s3 + $0x1b8] sm:$0xff] %vm99, %v2612
    %2711 = vst.msk [vmem:[%s3 + $0x1c0] sm:$0xff] %vm99, %v2617
    %2712 = vst.msk [vmem:[%s3 + $0x1c8] sm:$0xff] %vm99, %v2622
    %2713 = vst.msk [vmem:[%s3 + $0x1d0] sm:$0xff] %vm99, %v2627
    %2714 = vst.msk [vmem:[%s3 + $0x1d8] sm:$0xff] %vm99, %v2632
    %2715 = vst.msk [vmem:[%s3 + $0x1e0] sm:$0xff] %vm99, %v2637
    %2716 = vst.msk [vmem:[%s3 + $0x1e8] sm:$0xff] %vm99, %v2642
    %2717 = vst.msk [vmem:[%s3 + $0x1f0] sm:$0xff] %vm99, %v2647
    %2718 = vst.msk [vmem:[%s3 + $0x1f8] sm:$0xff] %vm99, %v2652
    %v2719 = vmul.f32 %v18, %v18
    %v2720 = vmul.f32 %v19, %v19
    %v2721 = vmul.f32 %v20, %v20
    %v2722 = vmul.f32 %v21, %v21
    %v2723 = vmul.f32 %v22, %v22
    %v2724 = vmul.f32 %v23, %v23
    %v2725 = vmul.f32 %v24, %v24
    %v2726 = vmul.f32 %v25, %v25
    %v2727 = vmul.f32 %v26, %v26
    %v2728 = vmul.f32 %v27, %v27
    %v2729 = vmul.f32 %v28, %v28
    %v2730 = vmul.f32 %v29, %v29
    %v2731 = vmul.f32 %v30, %v30
    %v2732 = vmul.f32 %v31, %v31
    %v2733 = vmul.f32 %v32, %v32
    %v2734 = vmul.f32 %v33, %v33
    %v2735 = vmul.f32 %v34, %v34
    %v2736 = vmul.f32 %v35, %v35
    %v2737 = vmul.f32 %v36, %v36
    %v2738 = vmul.f32 %v37, %v37
    %v2739 = vmul.f32 %v38, %v38
    %v2740 = vmul.f32 %v39, %v39
    %v2741 = vmul.f32 %v40, %v40
    %v2742 = vmul.f32 %v41, %v41
    %v2743 = vmul.f32 %v42, %v42
    %v2744 = vmul.f32 %v43, %v43
    %v2745 = vmul.f32 %v44, %v44
    %v2746 = vmul.f32 %v45, %v45
    %v2747 = vmul.f32 %v46, %v46
    %v2748 = vmul.f32 %v47, %v47
    %v2749 = vmul.f32 %v48, %v48
    %v2750 = vmul.f32 %v49, %v49
    %v2751 = vmul.f32 %v50, %v50
    %v2752 = vmul.f32 %v51, %v51
    %v2753 = vmul.f32 %v52, %v52
    %v2754 = vmul.f32 %v53, %v53
    %v2755 = vmul.f32 %v54, %v54
    %v2756 = vmul.f32 %v55, %v55
    %v2757 = vmul.f32 %v56, %v56
    %v2758 = vmul.f32 %v57, %v57
    %v2759 = vmul.f32 %v58, %v58
    %v2760 = vmul.f32 %v59, %v59
    %v2761 = vmul.f32 %v60, %v60
    %v2762 = vmul.f32 %v61, %v61
    %v2763 = vmul.f32 %v62, %v62
    %v2764 = vmul.f32 %v63, %v63
    %v2765 = vmul.f32 %v64, %v64
    %v2766 = vmul.f32 %v65, %v65
    %v2767 = vmul.f32 %v66, %v66
    %v2768 = vmul.f32 %v67, %v67
    %v2769 = vmul.f32 %v68, %v68
    %v2770 = vmul.f32 %v69, %v69
    %v2771 = vmul.f32 %v70, %v70
    %v2772 = vmul.f32 %v71, %v71
    %v2773 = vmul.f32 %v72, %v72
    %v2774 = vmul.f32 %v73, %v73
    %v2775 = vmul.f32 %v74, %v74
    %v2776 = vmul.f32 %v75, %v75
    %v2777 = vmul.f32 %v76, %v76
    %v2778 = vmul.f32 %v77, %v77
    %v2779 = vmul.f32 %v78, %v78
    %v2780 = vmul.f32 %v79, %v79
    %v2781 = vmul.f32 %v80, %v80
    %v2782 = vmul.f32 %v81, %v81
    %v2783 = vsel %vm99, %v2719, 0.0
    %2784 = vadd.xlane.f32.xlu0 %v2783
    %v2785 = vpop.xlane.xlu0 %2784
    %v2786 = vsel %vm99, %v2720, 0.0
    %2787 = vadd.xlane.f32.xlu0 %v2786
    %v2788 = vpop.xlane.xlu0 %2787
    %v2789 = vsel %vm99, %v2721, 0.0
    %2790 = vadd.xlane.f32.xlu0 %v2789
    %v2791 = vpop.xlane.xlu0 %2790
    %v2792 = vsel %vm99, %v2722, 0.0
    %2793 = vadd.xlane.f32.xlu0 %v2792
    %v2794 = vpop.xlane.xlu0 %2793
    %v2795 = vsel %vm99, %v2723, 0.0
    %2796 = vadd.xlane.f32.xlu0 %v2795
    %v2797 = vpop.xlane.xlu0 %2796
    %v2798 = vsel %vm99, %v2724, 0.0
    %2799 = vadd.xlane.f32.xlu0 %v2798
    %v2800 = vpop.xlane.xlu0 %2799
    %v2801 = vsel %vm99, %v2725, 0.0
    %2802 = vadd.xlane.f32.xlu0 %v2801
    %v2803 = vpop.xlane.xlu0 %2802
    %v2804 = vsel %vm99, %v2726, 0.0
    %2805 = vadd.xlane.f32.xlu0 %v2804
    %v2806 = vpop.xlane.xlu0 %2805
    %v2807 = vsel %vm99, %v2727, 0.0
    %2808 = vadd.xlane.f32.xlu0 %v2807
    %v2809 = vpop.xlane.xlu0 %2808
    %v2810 = vsel %vm99, %v2728, 0.0
    %2811 = vadd.xlane.f32.xlu0 %v2810
    %v2812 = vpop.xlane.xlu0 %2811
    %v2813 = vsel %vm99, %v2729, 0.0
    %2814 = vadd.xlane.f32.xlu0 %v2813
    %v2815 = vpop.xlane.xlu0 %2814
    %v2816 = vsel %vm99, %v2730, 0.0
    %2817 = vadd.xlane.f32.xlu0 %v2816
    %v2818 = vpop.xlane.xlu0 %2817
    %v2819 = vsel %vm99, %v2731, 0.0
    %2820 = vadd.xlane.f32.xlu0 %v2819
    %v2821 = vpop.xlane.xlu0 %2820
    %v2822 = vsel %vm99, %v2732, 0.0
    %2823 = vadd.xlane.f32.xlu0 %v2822
    %v2824 = vpop.xlane.xlu0 %2823
    %v2825 = vsel %vm99, %v2733, 0.0
    %2826 = vadd.xlane.f32.xlu0 %v2825
    %v2827 = vpop.xlane.xlu0 %2826
    %v2828 = vsel %vm99, %v2734, 0.0
    %2829 = vadd.xlane.f32.xlu0 %v2828
    %v2830 = vpop.xlane.xlu0 %2829
    %v2831 = vsel %vm99, %v2735, 0.0
    %2832 = vadd.xlane.f32.xlu0 %v2831
    %v2833 = vpop.xlane.xlu0 %2832
    %v2834 = vsel %vm99, %v2736, 0.0
    %2835 = vadd.xlane.f32.xlu0 %v2834
    %v2836 = vpop.xlane.xlu0 %2835
    %v2837 = vsel %vm99, %v2737, 0.0
    %2838 = vadd.xlane.f32.xlu0 %v2837
    %v2839 = vpop.xlane.xlu0 %2838
    %v2840 = vsel %vm99, %v2738, 0.0
    %2841 = vadd.xlane.f32.xlu0 %v2840
    %v2842 = vpop.xlane.xlu0 %2841
    %v2843 = vsel %vm99, %v2739, 0.0
    %2844 = vadd.xlane.f32.xlu0 %v2843
    %v2845 = vpop.xlane.xlu0 %2844
    %v2846 = vsel %vm99, %v2740, 0.0
    %2847 = vadd.xlane.f32.xlu0 %v2846
    %v2848 = vpop.xlane.xlu0 %2847
    %v2849 = vsel %vm99, %v2741, 0.0
    %2850 = vadd.xlane.f32.xlu0 %v2849
    %v2851 = vpop.xlane.xlu0 %2850
    %v2852 = vsel %vm99, %v2742, 0.0
    %2853 = vadd.xlane.f32.xlu0 %v2852
    %v2854 = vpop.xlane.xlu0 %2853
    %v2855 = vsel %vm99, %v2743, 0.0
    %2856 = vadd.xlane.f32.xlu0 %v2855
    %v2857 = vpop.xlane.xlu0 %2856
    %v2858 = vsel %vm99, %v2744, 0.0
    %2859 = vadd.xlane.f32.xlu0 %v2858
    %v2860 = vpop.xlane.xlu0 %2859
    %v2861 = vsel %vm99, %v2745, 0.0
    %2862 = vadd.xlane.f32.xlu0 %v2861
    %v2863 = vpop.xlane.xlu0 %2862
    %v2864 = vsel %vm99, %v2746, 0.0
    %2865 = vadd.xlane.f32.xlu0 %v2864
    %v2866 = vpop.xlane.xlu0 %2865
    %v2867 = vsel %vm99, %v2747, 0.0
    %2868 = vadd.xlane.f32.xlu0 %v2867
    %v2869 = vpop.xlane.xlu0 %2868
    %v2870 = vsel %vm99, %v2748, 0.0
    %2871 = vadd.xlane.f32.xlu0 %v2870
    %v2872 = vpop.xlane.xlu0 %2871
    %v2873 = vsel %vm99, %v2749, 0.0
    %2874 = vadd.xlane.f32.xlu0 %v2873
    %v2875 = vpop.xlane.xlu0 %2874
    %v2876 = vsel %vm99, %v2750, 0.0
    %2877 = vadd.xlane.f32.xlu0 %v2876
    %v2878 = vpop.xlane.xlu0 %2877
    %v2879 = vsel %vm99, %v2751, 0.0
    %2880 = vadd.xlane.f32.xlu0 %v2879
    %v2881 = vpop.xlane.xlu0 %2880
    %v2882 = vsel %vm99, %v2752, 0.0
    %2883 = vadd.xlane.f32.xlu0 %v2882
    %v2884 = vpop.xlane.xlu0 %2883
    %v2885 = vsel %vm99, %v2753, 0.0
    %2886 = vadd.xlane.f32.xlu0 %v2885
    %v2887 = vpop.xlane.xlu0 %2886
    %v2888 = vsel %vm99, %v2754, 0.0
    %2889 = vadd.xlane.f32.xlu0 %v2888
    %v2890 = vpop.xlane.xlu0 %2889
    %v2891 = vsel %vm99, %v2755, 0.0
    %2892 = vadd.xlane.f32.xlu0 %v2891
    %v2893 = vpop.xlane.xlu0 %2892
    %v2894 = vsel %vm99, %v2756, 0.0
    %2895 = vadd.xlane.f32.xlu0 %v2894
    %v2896 = vpop.xlane.xlu0 %2895
    %v2897 = vsel %vm99, %v2757, 0.0
    %2898 = vadd.xlane.f32.xlu0 %v2897
    %v2899 = vpop.xlane.xlu0 %2898
    %v2900 = vsel %vm99, %v2758, 0.0
    %2901 = vadd.xlane.f32.xlu0 %v2900
    %v2902 = vpop.xlane.xlu0 %2901
    %v2903 = vsel %vm99, %v2759, 0.0
    %2904 = vadd.xlane.f32.xlu0 %v2903
    %v2905 = vpop.xlane.xlu0 %2904
    %v2906 = vsel %vm99, %v2760, 0.0
    %2907 = vadd.xlane.f32.xlu0 %v2906
    %v2908 = vpop.xlane.xlu0 %2907
    %v2909 = vsel %vm99, %v2761, 0.0
    %2910 = vadd.xlane.f32.xlu0 %v2909
    %v2911 = vpop.xlane.xlu0 %2910
    %v2912 = vsel %vm99, %v2762, 0.0
    %2913 = vadd.xlane.f32.xlu0 %v2912
    %v2914 = vpop.xlane.xlu0 %2913
    %v2915 = vsel %vm99, %v2763, 0.0
    %2916 = vadd.xlane.f32.xlu0 %v2915
    %v2917 = vpop.xlane.xlu0 %2916
    %v2918 = vsel %vm99, %v2764, 0.0
    %2919 = vadd.xlane.f32.xlu0 %v2918
    %v2920 = vpop.xlane.xlu0 %2919
    %v2921 = vsel %vm99, %v2765, 0.0
    %2922 = vadd.xlane.f32.xlu0 %v2921
    %v2923 = vpop.xlane.xlu0 %2922
    %v2924 = vsel %vm99, %v2766, 0.0
    %2925 = vadd.xlane.f32.xlu0 %v2924
    %v2926 = vpop.xlane.xlu0 %2925
    %v2927 = vsel %vm99, %v2767, 0.0
    %2928 = vadd.xlane.f32.xlu0 %v2927
    %v2929 = vpop.xlane.xlu0 %2928
    %v2930 = vsel %vm99, %v2768, 0.0
    %2931 = vadd.xlane.f32.xlu0 %v2930
    %v2932 = vpop.xlane.xlu0 %2931
    %v2933 = vsel %vm99, %v2769, 0.0
    %2934 = vadd.xlane.f32.xlu0 %v2933
    %v2935 = vpop.xlane.xlu0 %2934
    %v2936 = vsel %vm99, %v2770, 0.0
    %2937 = vadd.xlane.f32.xlu0 %v2936
    %v2938 = vpop.xlane.xlu0 %2937
    %v2939 = vsel %vm99, %v2771, 0.0
    %2940 = vadd.xlane.f32.xlu0 %v2939
    %v2941 = vpop.xlane.xlu0 %2940
    %v2942 = vsel %vm99, %v2772, 0.0
    %2943 = vadd.xlane.f32.xlu0 %v2942
    %v2944 = vpop.xlane.xlu0 %2943
    %v2945 = vsel %vm99, %v2773, 0.0
    %2946 = vadd.xlane.f32.xlu0 %v2945
    %v2947 = vpop.xlane.xlu0 %2946
    %v2948 = vsel %vm99, %v2774, 0.0
    %2949 = vadd.xlane.f32.xlu0 %v2948
    %v2950 = vpop.xlane.xlu0 %2949
    %v2951 = vsel %vm99, %v2775, 0.0
    %2952 = vadd.xlane.f32.xlu0 %v2951
    %v2953 = vpop.xlane.xlu0 %2952
    %v2954 = vsel %vm99, %v2776, 0.0
    %2955 = vadd.xlane.f32.xlu0 %v2954
    %v2956 = vpop.xlane.xlu0 %2955
    %v2957 = vsel %vm99, %v2777, 0.0
    %2958 = vadd.xlane.f32.xlu0 %v2957
    %v2959 = vpop.xlane.xlu0 %2958
    %v2960 = vsel %vm99, %v2778, 0.0
    %2961 = vadd.xlane.f32.xlu0 %v2960
    %v2962 = vpop.xlane.xlu0 %2961
    %v2963 = vsel %vm99, %v2779, 0.0
    %2964 = vadd.xlane.f32.xlu0 %v2963
    %v2965 = vpop.xlane.xlu0 %2964
    %v2966 = vsel %vm99, %v2780, 0.0
    %2967 = vadd.xlane.f32.xlu0 %v2966
    %v2968 = vpop.xlane.xlu0 %2967
    %v2969 = vsel %vm99, %v2781, 0.0
    %2970 = vadd.xlane.f32.xlu0 %v2969
    %v2971 = vpop.xlane.xlu0 %2970
    %v2972 = vsel %vm99, %v2782, 0.0
    %2973 = vadd.xlane.f32.xlu0 %v2972
    %v2974 = vpop.xlane.xlu0 %2973
    %v2975 = vadd.f32 %v795, %v2785
    %v2976 = vadd.f32 %v796, %v2788
    %v2977 = vadd.f32 %v797, %v2791
    %v2978 = vadd.f32 %v798, %v2794
    %v2979 = vadd.f32 %v799, %v2797
    %v2980 = vadd.f32 %v800, %v2800
    %v2981 = vadd.f32 %v801, %v2803
    %v2982 = vadd.f32 %v802, %v2806
    %v2983 = vadd.f32 %v803, %v2809
    %v2984 = vadd.f32 %v804, %v2812
    %v2985 = vadd.f32 %v805, %v2815
    %v2986 = vadd.f32 %v806, %v2818
    %v2987 = vadd.f32 %v807, %v2821
    %v2988 = vadd.f32 %v808, %v2824
    %v2989 = vadd.f32 %v809, %v2827
    %v2990 = vadd.f32 %v810, %v2830
    %v2991 = vadd.f32 %v811, %v2833
    %v2992 = vadd.f32 %v812, %v2836
    %v2993 = vadd.f32 %v813, %v2839
    %v2994 = vadd.f32 %v814, %v2842
    %v2995 = vadd.f32 %v815, %v2845
    %v2996 = vadd.f32 %v816, %v2848
    %v2997 = vadd.f32 %v817, %v2851
    %v2998 = vadd.f32 %v818, %v2854
    %v2999 = vadd.f32 %v819, %v2857
    %v3000 = vadd.f32 %v820, %v2860
    %v3001 = vadd.f32 %v821, %v2863
    %v3002 = vadd.f32 %v822, %v2866
    %v3003 = vadd.f32 %v823, %v2869
    %v3004 = vadd.f32 %v824, %v2872
    %v3005 = vadd.f32 %v825, %v2875
    %v3006 = vadd.f32 %v826, %v2878
    %v3007 = vadd.f32 %v827, %v2881
    %v3008 = vadd.f32 %v828, %v2884
    %v3009 = vadd.f32 %v829, %v2887
    %v3010 = vadd.f32 %v830, %v2890
    %v3011 = vadd.f32 %v831, %v2893
    %v3012 = vadd.f32 %v832, %v2896
    %v3013 = vadd.f32 %v833, %v2899
    %v3014 = vadd.f32 %v834, %v2902
    %v3015 = vadd.f32 %v835, %v2905
    %v3016 = vadd.f32 %v836, %v2908
    %v3017 = vadd.f32 %v837, %v2911
    %v3018 = vadd.f32 %v838, %v2914
    %v3019 = vadd.f32 %v839, %v2917
    %v3020 = vadd.f32 %v840, %v2920
    %v3021 = vadd.f32 %v841, %v2923
    %v3022 = vadd.f32 %v842, %v2926
    %v3023 = vadd.f32 %v843, %v2929
    %v3024 = vadd.f32 %v844, %v2932
    %v3025 = vadd.f32 %v845, %v2935
    %v3026 = vadd.f32 %v846, %v2938
    %v3027 = vadd.f32 %v847, %v2941
    %v3028 = vadd.f32 %v848, %v2944
    %v3029 = vadd.f32 %v849, %v2947
    %v3030 = vadd.f32 %v850, %v2950
    %v3031 = vadd.f32 %v851, %v2953
    %v3032 = vadd.f32 %v852, %v2956
    %v3033 = vadd.f32 %v853, %v2959
    %v3034 = vadd.f32 %v854, %v2962
    %v3035 = vadd.f32 %v855, %v2965
    %v3036 = vadd.f32 %v856, %v2968
    %v3037 = vadd.f32 %v857, %v2971
    %v3038 = vadd.f32 %v858, %v2974
    %v3039 = vmax.f32 %v2975, 0.0
    %v3040 = vmax.f32 %v2976, 0.0
    %v3041 = vmax.f32 %v2977, 0.0
    %v3042 = vmax.f32 %v2978, 0.0
    %v3043 = vmax.f32 %v2979, 0.0
    %v3044 = vmax.f32 %v2980, 0.0
    %v3045 = vmax.f32 %v2981, 0.0
    %v3046 = vmax.f32 %v2982, 0.0
    %v3047 = vmax.f32 %v2983, 0.0
    %v3048 = vmax.f32 %v2984, 0.0
    %v3049 = vmax.f32 %v2985, 0.0
    %v3050 = vmax.f32 %v2986, 0.0
    %v3051 = vmax.f32 %v2987, 0.0
    %v3052 = vmax.f32 %v2988, 0.0
    %v3053 = vmax.f32 %v2989, 0.0
    %v3054 = vmax.f32 %v2990, 0.0
    %v3055 = vmax.f32 %v2991, 0.0
    %v3056 = vmax.f32 %v2992, 0.0
    %v3057 = vmax.f32 %v2993, 0.0
    %v3058 = vmax.f32 %v2994, 0.0
    %v3059 = vmax.f32 %v2995, 0.0
    %v3060 = vmax.f32 %v2996, 0.0
    %v3061 = vmax.f32 %v2997, 0.0
    %v3062 = vmax.f32 %v2998, 0.0
    %v3063 = vmax.f32 %v2999, 0.0
    %v3064 = vmax.f32 %v3000, 0.0
    %v3065 = vmax.f32 %v3001, 0.0
    %v3066 = vmax.f32 %v3002, 0.0
    %v3067 = vmax.f32 %v3003, 0.0
    %v3068 = vmax.f32 %v3004, 0.0
    %v3069 = vmax.f32 %v3005, 0.0
    %v3070 = vmax.f32 %v3006, 0.0
    %v3071 = vmax.f32 %v3007, 0.0
    %v3072 = vmax.f32 %v3008, 0.0
    %v3073 = vmax.f32 %v3009, 0.0
    %v3074 = vmax.f32 %v3010, 0.0
    %v3075 = vmax.f32 %v3011, 0.0
    %v3076 = vmax.f32 %v3012, 0.0
    %v3077 = vmax.f32 %v3013, 0.0
    %v3078 = vmax.f32 %v3014, 0.0
    %v3079 = vmax.f32 %v3015, 0.0
    %v3080 = vmax.f32 %v3016, 0.0
    %v3081 = vmax.f32 %v3017, 0.0
    %v3082 = vmax.f32 %v3018, 0.0
    %v3083 = vmax.f32 %v3019, 0.0
    %v3084 = vmax.f32 %v3020, 0.0
    %v3085 = vmax.f32 %v3021, 0.0
    %v3086 = vmax.f32 %v3022, 0.0
    %v3087 = vmax.f32 %v3023, 0.0
    %v3088 = vmax.f32 %v3024, 0.0
    %v3089 = vmax.f32 %v3025, 0.0
    %v3090 = vmax.f32 %v3026, 0.0
    %v3091 = vmax.f32 %v3027, 0.0
    %v3092 = vmax.f32 %v3028, 0.0
    %v3093 = vmax.f32 %v3029, 0.0
    %v3094 = vmax.f32 %v3030, 0.0
    %v3095 = vmax.f32 %v3031, 0.0
    %v3096 = vmax.f32 %v3032, 0.0
    %v3097 = vmax.f32 %v3033, 0.0
    %v3098 = vmax.f32 %v3034, 0.0
    %v3099 = vmax.f32 %v3035, 0.0
    %v3100 = vmax.f32 %v3036, 0.0
    %v3101 = vmax.f32 %v3037, 0.0
    %v3102 = vmax.f32 %v3038, 0.0
    %v3103 = vrsqrt.pop %v3039
    %v3104 = vmul.f32 %v3039, %v3103
    %vm3105 = vcmp.eq.f32.partialorder %v3039, inf
    %v3106 = vsel %vm3105, %v3039, %v3104
    %vm3107 = vcmp.eq.f32.partialorder %v3039, 0.0
    %v3108 = vand.u32 %v3039, 2147483648
    %v3109 = vsel %vm3107, %v3108, %v3106
    %v3110 = vrsqrt.pop %v3040
    %v3111 = vmul.f32 %v3040, %v3110
    %vm3112 = vcmp.eq.f32.partialorder %v3040, inf
    %v3113 = vsel %vm3112, %v3040, %v3111
    %vm3114 = vcmp.eq.f32.partialorder %v3040, 0.0
    %v3115 = vand.u32 %v3040, 2147483648
    %v3116 = vsel %vm3114, %v3115, %v3113
    %v3117 = vrsqrt.pop %v3041
    %v3118 = vmul.f32 %v3041, %v3117
    %vm3119 = vcmp.eq.f32.partialorder %v3041, inf
    %v3120 = vsel %vm3119, %v3041, %v3118
    %vm3121 = vcmp.eq.f32.partialorder %v3041, 0.0
    %v3122 = vand.u32 %v3041, 2147483648
    %v3123 = vsel %vm3121, %v3122, %v3120
    %v3124 = vrsqrt.pop %v3042
    %v3125 = vmul.f32 %v3042, %v3124
    %vm3126 = vcmp.eq.f32.partialorder %v3042, inf
    %v3127 = vsel %vm3126, %v3042, %v3125
    %vm3128 = vcmp.eq.f32.partialorder %v3042, 0.0
    %v3129 = vand.u32 %v3042, 2147483648
    %v3130 = vsel %vm3128, %v3129, %v3127
    %v3131 = vrsqrt.pop %v3043
    %v3132 = vmul.f32 %v3043, %v3131
    %vm3133 = vcmp.eq.f32.partialorder %v3043, inf
    %v3134 = vsel %vm3133, %v3043, %v3132
    %vm3135 = vcmp.eq.f32.partialorder %v3043, 0.0
    %v3136 = vand.u32 %v3043, 2147483648
    %v3137 = vsel %vm3135, %v3136, %v3134
    %v3138 = vrsqrt.pop %v3044
    %v3139 = vmul.f32 %v3044, %v3138
    %vm3140 = vcmp.eq.f32.partialorder %v3044, inf
    %v3141 = vsel %vm3140, %v3044, %v3139
    %vm3142 = vcmp.eq.f32.partialorder %v3044, 0.0
    %v3143 = vand.u32 %v3044, 2147483648
    %v3144 = vsel %vm3142, %v3143, %v3141
    %v3145 = vrsqrt.pop %v3045
    %v3146 = vmul.f32 %v3045, %v3145
    %vm3147 = vcmp.eq.f32.partialorder %v3045, inf
    %v3148 = vsel %vm3147, %v3045, %v3146
    %vm3149 = vcmp.eq.f32.partialorder %v3045, 0.0
    %v3150 = vand.u32 %v3045, 2147483648
    %v3151 = vsel %vm3149, %v3150, %v3148
    %v3152 = vrsqrt.pop %v3046
    %v3153 = vmul.f32 %v3046, %v3152
    %vm3154 = vcmp.eq.f32.partialorder %v3046, inf
    %v3155 = vsel %vm3154, %v3046, %v3153
    %vm3156 = vcmp.eq.f32.partialorder %v3046, 0.0
    %v3157 = vand.u32 %v3046, 2147483648
    %v3158 = vsel %vm3156, %v3157, %v3155
    %v3159 = vrsqrt.pop %v3047
    %v3160 = vmul.f32 %v3047, %v3159
    %vm3161 = vcmp.eq.f32.partialorder %v3047, inf
    %v3162 = vsel %vm3161, %v3047, %v3160
    %vm3163 = vcmp.eq.f32.partialorder %v3047, 0.0
    %v3164 = vand.u32 %v3047, 2147483648
    %v3165 = vsel %vm3163, %v3164, %v3162
    %v3166 = vrsqrt.pop %v3048
    %v3167 = vmul.f32 %v3048, %v3166
    %vm3168 = vcmp.eq.f32.partialorder %v3048, inf
    %v3169 = vsel %vm3168, %v3048, %v3167
    %vm3170 = vcmp.eq.f32.partialorder %v3048, 0.0
    %v3171 = vand.u32 %v3048, 2147483648
    %v3172 = vsel %vm3170, %v3171, %v3169
    %v3173 = vrsqrt.pop %v3049
    %v3174 = vmul.f32 %v3049, %v3173
    %vm3175 = vcmp.eq.f32.partialorder %v3049, inf
    %v3176 = vsel %vm3175, %v3049, %v3174
    %vm3177 = vcmp.eq.f32.partialorder %v3049, 0.0
    %v3178 = vand.u32 %v3049, 2147483648
    %v3179 = vsel %vm3177, %v3178, %v3176
    %v3180 = vrsqrt.pop %v3050
    %v3181 = vmul.f32 %v3050, %v3180
    %vm3182 = vcmp.eq.f32.partialorder %v3050, inf
    %v3183 = vsel %vm3182, %v3050, %v3181
    %vm3184 = vcmp.eq.f32.partialorder %v3050, 0.0
    %v3185 = vand.u32 %v3050, 2147483648
    %v3186 = vsel %vm3184, %v3185, %v3183
    %v3187 = vrsqrt.pop %v3051
    %v3188 = vmul.f32 %v3051, %v3187
    %vm3189 = vcmp.eq.f32.partialorder %v3051, inf
    %v3190 = vsel %vm3189, %v3051, %v3188
    %vm3191 = vcmp.eq.f32.partialorder %v3051, 0.0
    %v3192 = vand.u32 %v3051, 2147483648
    %v3193 = vsel %vm3191, %v3192, %v3190
    %v3194 = vrsqrt.pop %v3052
    %v3195 = vmul.f32 %v3052, %v3194
    %vm3196 = vcmp.eq.f32.partialorder %v3052, inf
    %v3197 = vsel %vm3196, %v3052, %v3195
    %vm3198 = vcmp.eq.f32.partialorder %v3052, 0.0
    %v3199 = vand.u32 %v3052, 2147483648
    %v3200 = vsel %vm3198, %v3199, %v3197
    %v3201 = vrsqrt.pop %v3053
    %v3202 = vmul.f32 %v3053, %v3201
    %vm3203 = vcmp.eq.f32.partialorder %v3053, inf
    %v3204 = vsel %vm3203, %v3053, %v3202
    %vm3205 = vcmp.eq.f32.partialorder %v3053, 0.0
    %v3206 = vand.u32 %v3053, 2147483648
    %v3207 = vsel %vm3205, %v3206, %v3204
    %v3208 = vrsqrt.pop %v3054
    %v3209 = vmul.f32 %v3054, %v3208
    %vm3210 = vcmp.eq.f32.partialorder %v3054, inf
    %v3211 = vsel %vm3210, %v3054, %v3209
    %vm3212 = vcmp.eq.f32.partialorder %v3054, 0.0
    %v3213 = vand.u32 %v3054, 2147483648
    %v3214 = vsel %vm3212, %v3213, %v3211
    %v3215 = vrsqrt.pop %v3055
    %v3216 = vmul.f32 %v3055, %v3215
    %vm3217 = vcmp.eq.f32.partialorder %v3055, inf
    %v3218 = vsel %vm3217, %v3055, %v3216
    %vm3219 = vcmp.eq.f32.partialorder %v3055, 0.0
    %v3220 = vand.u32 %v3055, 2147483648
    %v3221 = vsel %vm3219, %v3220, %v3218
    %v3222 = vrsqrt.pop %v3056
    %v3223 = vmul.f32 %v3056, %v3222
    %vm3224 = vcmp.eq.f32.partialorder %v3056, inf
    %v3225 = vsel %vm3224, %v3056, %v3223
    %vm3226 = vcmp.eq.f32.partialorder %v3056, 0.0
    %v3227 = vand.u32 %v3056, 2147483648
    %v3228 = vsel %vm3226, %v3227, %v3225
    %v3229 = vrsqrt.pop %v3057
    %v3230 = vmul.f32 %v3057, %v3229
    %vm3231 = vcmp.eq.f32.partialorder %v3057, inf
    %v3232 = vsel %vm3231, %v3057, %v3230
    %vm3233 = vcmp.eq.f32.partialorder %v3057, 0.0
    %v3234 = vand.u32 %v3057, 2147483648
    %v3235 = vsel %vm3233, %v3234, %v3232
    %v3236 = vrsqrt.pop %v3058
    %v3237 = vmul.f32 %v3058, %v3236
    %vm3238 = vcmp.eq.f32.partialorder %v3058, inf
    %v3239 = vsel %vm3238, %v3058, %v3237
    %vm3240 = vcmp.eq.f32.partialorder %v3058, 0.0
    %v3241 = vand.u32 %v3058, 2147483648
    %v3242 = vsel %vm3240, %v3241, %v3239
    %v3243 = vrsqrt.pop %v3059
    %v3244 = vmul.f32 %v3059, %v3243
    %vm3245 = vcmp.eq.f32.partialorder %v3059, inf
    %v3246 = vsel %vm3245, %v3059, %v3244
    %vm3247 = vcmp.eq.f32.partialorder %v3059, 0.0
    %v3248 = vand.u32 %v3059, 2147483648
    %v3249 = vsel %vm3247, %v3248, %v3246
    %v3250 = vrsqrt.pop %v3060
    %v3251 = vmul.f32 %v3060, %v3250
    %vm3252 = vcmp.eq.f32.partialorder %v3060, inf
    %v3253 = vsel %vm3252, %v3060, %v3251
    %vm3254 = vcmp.eq.f32.partialorder %v3060, 0.0
    %v3255 = vand.u32 %v3060, 2147483648
    %v3256 = vsel %vm3254, %v3255, %v3253
    %v3257 = vrsqrt.pop %v3061
    %v3258 = vmul.f32 %v3061, %v3257
    %vm3259 = vcmp.eq.f32.partialorder %v3061, inf
    %v3260 = vsel %vm3259, %v3061, %v3258
    %vm3261 = vcmp.eq.f32.partialorder %v3061, 0.0
    %v3262 = vand.u32 %v3061, 2147483648
    %v3263 = vsel %vm3261, %v3262, %v3260
    %v3264 = vrsqrt.pop %v3062
    %v3265 = vmul.f32 %v3062, %v3264
    %vm3266 = vcmp.eq.f32.partialorder %v3062, inf
    %v3267 = vsel %vm3266, %v3062, %v3265
    %vm3268 = vcmp.eq.f32.partialorder %v3062, 0.0
    %v3269 = vand.u32 %v3062, 2147483648
    %v3270 = vsel %vm3268, %v3269, %v3267
    %v3271 = vrsqrt.pop %v3063
    %v3272 = vmul.f32 %v3063, %v3271
    %vm3273 = vcmp.eq.f32.partialorder %v3063, inf
    %v3274 = vsel %vm3273, %v3063, %v3272
    %vm3275 = vcmp.eq.f32.partialorder %v3063, 0.0
    %v3276 = vand.u32 %v3063, 2147483648
    %v3277 = vsel %vm3275, %v3276, %v3274
    %v3278 = vrsqrt.pop %v3064
    %v3279 = vmul.f32 %v3064, %v3278
    %vm3280 = vcmp.eq.f32.partialorder %v3064, inf
    %v3281 = vsel %vm3280, %v3064, %v3279
    %vm3282 = vcmp.eq.f32.partialorder %v3064, 0.0
    %v3283 = vand.u32 %v3064, 2147483648
    %v3284 = vsel %vm3282, %v3283, %v3281
    %v3285 = vrsqrt.pop %v3065
    %v3286 = vmul.f32 %v3065, %v3285
    %vm3287 = vcmp.eq.f32.partialorder %v3065, inf
    %v3288 = vsel %vm3287, %v3065, %v3286
    %vm3289 = vcmp.eq.f32.partialorder %v3065, 0.0
    %v3290 = vand.u32 %v3065, 2147483648
    %v3291 = vsel %vm3289, %v3290, %v3288
    %v3292 = vrsqrt.pop %v3066
    %v3293 = vmul.f32 %v3066, %v3292
    %vm3294 = vcmp.eq.f32.partialorder %v3066, inf
    %v3295 = vsel %vm3294, %v3066, %v3293
    %vm3296 = vcmp.eq.f32.partialorder %v3066, 0.0
    %v3297 = vand.u32 %v3066, 2147483648
    %v3298 = vsel %vm3296, %v3297, %v3295
    %v3299 = vrsqrt.pop %v3067
    %v3300 = vmul.f32 %v3067, %v3299
    %vm3301 = vcmp.eq.f32.partialorder %v3067, inf
    %v3302 = vsel %vm3301, %v3067, %v3300
    %vm3303 = vcmp.eq.f32.partialorder %v3067, 0.0
    %v3304 = vand.u32 %v3067, 2147483648
    %v3305 = vsel %vm3303, %v3304, %v3302
    %v3306 = vrsqrt.pop %v3068
    %v3307 = vmul.f32 %v3068, %v3306
    %vm3308 = vcmp.eq.f32.partialorder %v3068, inf
    %v3309 = vsel %vm3308, %v3068, %v3307
    %vm3310 = vcmp.eq.f32.partialorder %v3068, 0.0
    %v3311 = vand.u32 %v3068, 2147483648
    %v3312 = vsel %vm3310, %v3311, %v3309
    %v3313 = vrsqrt.pop %v3069
    %v3314 = vmul.f32 %v3069, %v3313
    %vm3315 = vcmp.eq.f32.partialorder %v3069, inf
    %v3316 = vsel %vm3315, %v3069, %v3314
    %vm3317 = vcmp.eq.f32.partialorder %v3069, 0.0
    %v3318 = vand.u32 %v3069, 2147483648
    %v3319 = vsel %vm3317, %v3318, %v3316
    %v3320 = vrsqrt.pop %v3070
    %v3321 = vmul.f32 %v3070, %v3320
    %vm3322 = vcmp.eq.f32.partialorder %v3070, inf
    %v3323 = vsel %vm3322, %v3070, %v3321
    %vm3324 = vcmp.eq.f32.partialorder %v3070, 0.0
    %v3325 = vand.u32 %v3070, 2147483648
    %v3326 = vsel %vm3324, %v3325, %v3323
    %v3327 = vrsqrt.pop %v3071
    %v3328 = vmul.f32 %v3071, %v3327
    %vm3329 = vcmp.eq.f32.partialorder %v3071, inf
    %v3330 = vsel %vm3329, %v3071, %v3328
    %vm3331 = vcmp.eq.f32.partialorder %v3071, 0.0
    %v3332 = vand.u32 %v3071, 2147483648
    %v3333 = vsel %vm3331, %v3332, %v3330
    %v3334 = vrsqrt.pop %v3072
    %v3335 = vmul.f32 %v3072, %v3334
    %vm3336 = vcmp.eq.f32.partialorder %v3072, inf
    %v3337 = vsel %vm3336, %v3072, %v3335
    %vm3338 = vcmp.eq.f32.partialorder %v3072, 0.0
    %v3339 = vand.u32 %v3072, 2147483648
    %v3340 = vsel %vm3338, %v3339, %v3337
    %v3341 = vrsqrt.pop %v3073
    %v3342 = vmul.f32 %v3073, %v3341
    %vm3343 = vcmp.eq.f32.partialorder %v3073, inf
    %v3344 = vsel %vm3343, %v3073, %v3342
    %vm3345 = vcmp.eq.f32.partialorder %v3073, 0.0
    %v3346 = vand.u32 %v3073, 2147483648
    %v3347 = vsel %vm3345, %v3346, %v3344
    %v3348 = vrsqrt.pop %v3074
    %v3349 = vmul.f32 %v3074, %v3348
    %vm3350 = vcmp.eq.f32.partialorder %v3074, inf
    %v3351 = vsel %vm3350, %v3074, %v3349
    %vm3352 = vcmp.eq.f32.partialorder %v3074, 0.0
    %v3353 = vand.u32 %v3074, 2147483648
    %v3354 = vsel %vm3352, %v3353, %v3351
    %v3355 = vrsqrt.pop %v3075
    %v3356 = vmul.f32 %v3075, %v3355
    %vm3357 = vcmp.eq.f32.partialorder %v3075, inf
    %v3358 = vsel %vm3357, %v3075, %v3356
    %vm3359 = vcmp.eq.f32.partialorder %v3075, 0.0
    %v3360 = vand.u32 %v3075, 2147483648
    %v3361 = vsel %vm3359, %v3360, %v3358
    %v3362 = vrsqrt.pop %v3076
    %v3363 = vmul.f32 %v3076, %v3362
    %vm3364 = vcmp.eq.f32.partialorder %v3076, inf
    %v3365 = vsel %vm3364, %v3076, %v3363
    %vm3366 = vcmp.eq.f32.partialorder %v3076, 0.0
    %v3367 = vand.u32 %v3076, 2147483648
    %v3368 = vsel %vm3366, %v3367, %v3365
    %v3369 = vrsqrt.pop %v3077
    %v3370 = vmul.f32 %v3077, %v3369
    %vm3371 = vcmp.eq.f32.partialorder %v3077, inf
    %v3372 = vsel %vm3371, %v3077, %v3370
    %vm3373 = vcmp.eq.f32.partialorder %v3077, 0.0
    %v3374 = vand.u32 %v3077, 2147483648
    %v3375 = vsel %vm3373, %v3374, %v3372
    %v3376 = vrsqrt.pop %v3078
    %v3377 = vmul.f32 %v3078, %v3376
    %vm3378 = vcmp.eq.f32.partialorder %v3078, inf
    %v3379 = vsel %vm3378, %v3078, %v3377
    %vm3380 = vcmp.eq.f32.partialorder %v3078, 0.0
    %v3381 = vand.u32 %v3078, 2147483648
    %v3382 = vsel %vm3380, %v3381, %v3379
    %v3383 = vrsqrt.pop %v3079
    %v3384 = vmul.f32 %v3079, %v3383
    %vm3385 = vcmp.eq.f32.partialorder %v3079, inf
    %v3386 = vsel %vm3385, %v3079, %v3384
    %vm3387 = vcmp.eq.f32.partialorder %v3079, 0.0
    %v3388 = vand.u32 %v3079, 2147483648
    %v3389 = vsel %vm3387, %v3388, %v3386
    %v3390 = vrsqrt.pop %v3080
    %v3391 = vmul.f32 %v3080, %v3390
    %vm3392 = vcmp.eq.f32.partialorder %v3080, inf
    %v3393 = vsel %vm3392, %v3080, %v3391
    %vm3394 = vcmp.eq.f32.partialorder %v3080, 0.0
    %v3395 = vand.u32 %v3080, 2147483648
    %v3396 = vsel %vm3394, %v3395, %v3393
    %v3397 = vrsqrt.pop %v3081
    %v3398 = vmul.f32 %v3081, %v3397
    %vm3399 = vcmp.eq.f32.partialorder %v3081, inf
    %v3400 = vsel %vm3399, %v3081, %v3398
    %vm3401 = vcmp.eq.f32.partialorder %v3081, 0.0
    %v3402 = vand.u32 %v3081, 2147483648
    %v3403 = vsel %vm3401, %v3402, %v3400
    %v3404 = vrsqrt.pop %v3082
    %v3405 = vmul.f32 %v3082, %v3404
    %vm3406 = vcmp.eq.f32.partialorder %v3082, inf
    %v3407 = vsel %vm3406, %v3082, %v3405
    %vm3408 = vcmp.eq.f32.partialorder %v3082, 0.0
    %v3409 = vand.u32 %v3082, 2147483648
    %v3410 = vsel %vm3408, %v3409, %v3407
    %v3411 = vrsqrt.pop %v3083
    %v3412 = vmul.f32 %v3083, %v3411
    %vm3413 = vcmp.eq.f32.partialorder %v3083, inf
    %v3414 = vsel %vm3413, %v3083, %v3412
    %vm3415 = vcmp.eq.f32.partialorder %v3083, 0.0
    %v3416 = vand.u32 %v3083, 2147483648
    %v3417 = vsel %vm3415, %v3416, %v3414
    %v3418 = vrsqrt.pop %v3084
    %v3419 = vmul.f32 %v3084, %v3418
    %vm3420 = vcmp.eq.f32.partialorder %v3084, inf
    %v3421 = vsel %vm3420, %v3084, %v3419
    %vm3422 = vcmp.eq.f32.partialorder %v3084, 0.0
    %v3423 = vand.u32 %v3084, 2147483648
    %v3424 = vsel %vm3422, %v3423, %v3421
    %v3425 = vrsqrt.pop %v3085
    %v3426 = vmul.f32 %v3085, %v3425
    %vm3427 = vcmp.eq.f32.partialorder %v3085, inf
    %v3428 = vsel %vm3427, %v3085, %v3426
    %vm3429 = vcmp.eq.f32.partialorder %v3085, 0.0
    %v3430 = vand.u32 %v3085, 2147483648
    %v3431 = vsel %vm3429, %v3430, %v3428
    %v3432 = vrsqrt.pop %v3086
    %v3433 = vmul.f32 %v3086, %v3432
    %vm3434 = vcmp.eq.f32.partialorder %v3086, inf
    %v3435 = vsel %vm3434, %v3086, %v3433
    %vm3436 = vcmp.eq.f32.partialorder %v3086, 0.0
    %v3437 = vand.u32 %v3086, 2147483648
    %v3438 = vsel %vm3436, %v3437, %v3435
    %v3439 = vrsqrt.pop %v3087
    %v3440 = vmul.f32 %v3087, %v3439
    %vm3441 = vcmp.eq.f32.partialorder %v3087, inf
    %v3442 = vsel %vm3441, %v3087, %v3440
    %vm3443 = vcmp.eq.f32.partialorder %v3087, 0.0
    %v3444 = vand.u32 %v3087, 2147483648
    %v3445 = vsel %vm3443, %v3444, %v3442
    %v3446 = vrsqrt.pop %v3088
    %v3447 = vmul.f32 %v3088, %v3446
    %vm3448 = vcmp.eq.f32.partialorder %v3088, inf
    %v3449 = vsel %vm3448, %v3088, %v3447
    %vm3450 = vcmp.eq.f32.partialorder %v3088, 0.0
    %v3451 = vand.u32 %v3088, 2147483648
    %v3452 = vsel %vm3450, %v3451, %v3449
    %v3453 = vrsqrt.pop %v3089
    %v3454 = vmul.f32 %v3089, %v3453
    %vm3455 = vcmp.eq.f32.partialorder %v3089, inf
    %v3456 = vsel %vm3455, %v3089, %v3454
    %vm3457 = vcmp.eq.f32.partialorder %v3089, 0.0
    %v3458 = vand.u32 %v3089, 2147483648
    %v3459 = vsel %vm3457, %v3458, %v3456
    %v3460 = vrsqrt.pop %v3090
    %v3461 = vmul.f32 %v3090, %v3460
    %vm3462 = vcmp.eq.f32.partialorder %v3090, inf
    %v3463 = vsel %vm3462, %v3090, %v3461
    %vm3464 = vcmp.eq.f32.partialorder %v3090, 0.0
    %v3465 = vand.u32 %v3090, 2147483648
    %v3466 = vsel %vm3464, %v3465, %v3463
    %v3467 = vrsqrt.pop %v3091
    %v3468 = vmul.f32 %v3091, %v3467
    %vm3469 = vcmp.eq.f32.partialorder %v3091, inf
    %v3470 = vsel %vm3469, %v3091, %v3468
    %vm3471 = vcmp.eq.f32.partialorder %v3091, 0.0
    %v3472 = vand.u32 %v3091, 2147483648
    %v3473 = vsel %vm3471, %v3472, %v3470
    %v3474 = vrsqrt.pop %v3092
    %v3475 = vmul.f32 %v3092, %v3474
    %vm3476 = vcmp.eq.f32.partialorder %v3092, inf
    %v3477 = vsel %vm3476, %v3092, %v3475
    %vm3478 = vcmp.eq.f32.partialorder %v3092, 0.0
    %v3479 = vand.u32 %v3092, 2147483648
    %v3480 = vsel %vm3478, %v3479, %v3477
    %v3481 = vrsqrt.pop %v3093
    %v3482 = vmul.f32 %v3093, %v3481
    %vm3483 = vcmp.eq.f32.partialorder %v3093, inf
    %v3484 = vsel %vm3483, %v3093, %v3482
    %vm3485 = vcmp.eq.f32.partialorder %v3093, 0.0
    %v3486 = vand.u32 %v3093, 2147483648
    %v3487 = vsel %vm3485, %v3486, %v3484
    %v3488 = vrsqrt.pop %v3094
    %v3489 = vmul.f32 %v3094, %v3488
    %vm3490 = vcmp.eq.f32.partialorder %v3094, inf
    %v3491 = vsel %vm3490, %v3094, %v3489
    %vm3492 = vcmp.eq.f32.partialorder %v3094, 0.0
    %v3493 = vand.u32 %v3094, 2147483648
    %v3494 = vsel %vm3492, %v3493, %v3491
    %v3495 = vrsqrt.pop %v3095
    %v3496 = vmul.f32 %v3095, %v3495
    %vm3497 = vcmp.eq.f32.partialorder %v3095, inf
    %v3498 = vsel %vm3497, %v3095, %v3496
    %vm3499 = vcmp.eq.f32.partialorder %v3095, 0.0
    %v3500 = vand.u32 %v3095, 2147483648
    %v3501 = vsel %vm3499, %v3500, %v3498
    %v3502 = vrsqrt.pop %v3096
    %v3503 = vmul.f32 %v3096, %v3502
    %vm3504 = vcmp.eq.f32.partialorder %v3096, inf
    %v3505 = vsel %vm3504, %v3096, %v3503
    %vm3506 = vcmp.eq.f32.partialorder %v3096, 0.0
    %v3507 = vand.u32 %v3096, 2147483648
    %v3508 = vsel %vm3506, %v3507, %v3505
    %v3509 = vrsqrt.pop %v3097
    %v3510 = vmul.f32 %v3097, %v3509
    %vm3511 = vcmp.eq.f32.partialorder %v3097, inf
    %v3512 = vsel %vm3511, %v3097, %v3510
    %vm3513 = vcmp.eq.f32.partialorder %v3097, 0.0
    %v3514 = vand.u32 %v3097, 2147483648
    %v3515 = vsel %vm3513, %v3514, %v3512
    %v3516 = vrsqrt.pop %v3098
    %v3517 = vmul.f32 %v3098, %v3516
    %vm3518 = vcmp.eq.f32.partialorder %v3098, inf
    %v3519 = vsel %vm3518, %v3098, %v3517
    %vm3520 = vcmp.eq.f32.partialorder %v3098, 0.0
    %v3521 = vand.u32 %v3098, 2147483648
    %v3522 = vsel %vm3520, %v3521, %v3519
    %v3523 = vrsqrt.pop %v3099
    %v3524 = vmul.f32 %v3099, %v3523
    %vm3525 = vcmp.eq.f32.partialorder %v3099, inf
    %v3526 = vsel %vm3525, %v3099, %v3524
    %vm3527 = vcmp.eq.f32.partialorder %v3099, 0.0
    %v3528 = vand.u32 %v3099, 2147483648
    %v3529 = vsel %vm3527, %v3528, %v3526
    %v3530 = vrsqrt.pop %v3100
    %v3531 = vmul.f32 %v3100, %v3530
    %vm3532 = vcmp.eq.f32.partialorder %v3100, inf
    %v3533 = vsel %vm3532, %v3100, %v3531
    %vm3534 = vcmp.eq.f32.partialorder %v3100, 0.0
    %v3535 = vand.u32 %v3100, 2147483648
    %v3536 = vsel %vm3534, %v3535, %v3533
    %v3537 = vrsqrt.pop %v3101
    %v3538 = vmul.f32 %v3101, %v3537
    %vm3539 = vcmp.eq.f32.partialorder %v3101, inf
    %v3540 = vsel %vm3539, %v3101, %v3538
    %vm3541 = vcmp.eq.f32.partialorder %v3101, 0.0
    %v3542 = vand.u32 %v3101, 2147483648
    %v3543 = vsel %vm3541, %v3542, %v3540
    %v3544 = vrsqrt.pop %v3102
    %v3545 = vmul.f32 %v3102, %v3544
    %vm3546 = vcmp.eq.f32.partialorder %v3102, inf
    %v3547 = vsel %vm3546, %v3102, %v3545
    %vm3548 = vcmp.eq.f32.partialorder %v3102, 0.0
    %v3549 = vand.u32 %v3102, 2147483648
    %v3550 = vsel %vm3548, %v3549, %v3547
    %3551 = vst [vmem:[#allocation2] sm:$0xff] %v3109
    %3552 = vst [vmem:[#allocation2 + $0x8] sm:$0xff] %v3116
    %3553 = vst [vmem:[#allocation2 + $0x10] sm:$0xff] %v3123
    %3554 = vst [vmem:[#allocation2 + $0x18] sm:$0xff] %v3130
    %3555 = vst [vmem:[#allocation2 + $0x20] sm:$0xff] %v3137
    %3556 = vst [vmem:[#allocation2 + $0x28] sm:$0xff] %v3144
    %3557 = vst [vmem:[#allocation2 + $0x30] sm:$0xff] %v3151
    %3558 = vst [vmem:[#allocation2 + $0x38] sm:$0xff] %v3158
    %3559 = vst [vmem:[#allocation2 + $0x40] sm:$0xff] %v3165
    %3560 = vst [vmem:[#allocation2 + $0x48] sm:$0xff] %v3172
    %3561 = vst [vmem:[#allocation2 + $0x50] sm:$0xff] %v3179
    %3562 = vst [vmem:[#allocation2 + $0x58] sm:$0xff] %v3186
    %3563 = vst [vmem:[#allocation2 + $0x60] sm:$0xff] %v3193
    %3564 = vst [vmem:[#allocation2 + $0x68] sm:$0xff] %v3200
    %3565 = vst [vmem:[#allocation2 + $0x70] sm:$0xff] %v3207
    %3566 = vst [vmem:[#allocation2 + $0x78] sm:$0xff] %v3214
    %3567 = vst [vmem:[#allocation2 + $0x80] sm:$0xff] %v3221
    %3568 = vst [vmem:[#allocation2 + $0x88] sm:$0xff] %v3228
    %3569 = vst [vmem:[#allocation2 + $0x90] sm:$0xff] %v3235
    %3570 = vst [vmem:[#allocation2 + $0x98] sm:$0xff] %v3242
    %3571 = vst [vmem:[#allocation2 + $0xa0] sm:$0xff] %v3249
    %3572 = vst [vmem:[#allocation2 + $0xa8] sm:$0xff] %v3256
    %3573 = vst [vmem:[#allocation2 + $0xb0] sm:$0xff] %v3263
    %3574 = vst [vmem:[#allocation2 + $0xb8] sm:$0xff] %v3270
    %3575 = vst [vmem:[#allocation2 + $0xc0] sm:$0xff] %v3277
    %3576 = vst [vmem:[#allocation2 + $0xc8] sm:$0xff] %v3284
    %3577 = vst [vmem:[#allocation2 + $0xd0] sm:$0xff] %v3291
    %3578 = vst [vmem:[#allocation2 + $0xd8] sm:$0xff] %v3298
    %3579 = vst [vmem:[#allocation2 + $0xe0] sm:$0xff] %v3305
    %3580 = vst [vmem:[#allocation2 + $0xe8] sm:$0xff] %v3312
    %3581 = vst [vmem:[#allocation2 + $0xf0] sm:$0xff] %v3319
    %3582 = vst [vmem:[#allocation2 + $0xf8] sm:$0xff] %v3326
    %3583 = vst [vmem:[#allocation2 + $0x100] sm:$0xff] %v3333
    %3584 = vst [vmem:[#allocation2 + $0x108] sm:$0xff] %v3340
    %3585 = vst [vmem:[#allocation2 + $0x110] sm:$0xff] %v3347
    %3586 = vst [vmem:[#allocation2 + $0x118] sm:$0xff] %v3354
    %3587 = vst [vmem:[#allocation2 + $0x120] sm:$0xff] %v3361
    %3588 = vst [vmem:[#allocation2 + $0x128] sm:$0xff] %v3368
    %3589 = vst [vmem:[#allocation2 + $0x130] sm:$0xff] %v3375
    %3590 = vst [vmem:[#allocation2 + $0x138] sm:$0xff] %v3382
    %3591 = vst [vmem:[#allocation2 + $0x140] sm:$0xff] %v3389
    %3592 = vst [vmem:[#allocation2 + $0x148] sm:$0xff] %v3396
    %3593 = vst [vmem:[#allocation2 + $0x150] sm:$0xff] %v3403
    %3594 = vst [vmem:[#allocation2 + $0x158] sm:$0xff] %v3410
    %3595 = vst [vmem:[#allocation2 + $0x160] sm:$0xff] %v3417
    %3596 = vst [vmem:[#allocation2 + $0x168] sm:$0xff] %v3424
    %3597 = vst [vmem:[#allocation2 + $0x170] sm:$0xff] %v3431
    %3598 = vst [vmem:[#allocation2 + $0x178] sm:$0xff] %v3438
    %3599 = vst [vmem:[#allocation2 + $0x180] sm:$0xff] %v3445
    %3600 = vst [vmem:[#allocation2 + $0x188] sm:$0xff] %v3452
    %3601 = vst [vmem:[#allocation2 + $0x190] sm:$0xff] %v3459
    %3602 = vst [vmem:[#allocation2 + $0x198] sm:$0xff] %v3466
    %3603 = vst [vmem:[#allocation2 + $0x1a0] sm:$0xff] %v3473
    %3604 = vst [vmem:[#allocation2 + $0x1a8] sm:$0xff] %v3480
    %3605 = vst [vmem:[#allocation2 + $0x1b0] sm:$0xff] %v3487
    %3606 = vst [vmem:[#allocation2 + $0x1b8] sm:$0xff] %v3494
    %3607 = vst [vmem:[#allocation2 + $0x1c0] sm:$0xff] %v3501
    %3608 = vst [vmem:[#allocation2 + $0x1c8] sm:$0xff] %v3508
    %3609 = vst [vmem:[#allocation2 + $0x1d0] sm:$0xff] %v3515
    %3610 = vst [vmem:[#allocation2 + $0x1d8] sm:$0xff] %v3522
    %3611 = vst [vmem:[#allocation2 + $0x1e0] sm:$0xff] %v3529
    %3612 = vst [vmem:[#allocation2 + $0x1e8] sm:$0xff] %v3536
    %3613 = vst [vmem:[#allocation2 + $0x1f0] sm:$0xff] %v3543
    %3614 = vst [vmem:[#allocation2 + $0x1f8] sm:$0xff] %v3550
    // Predicated region
    $region14: #{tpu_custom_call.1} parent=1 // pred_check
      _
    $region15: #{tpu_custom_call.1} parent=1 // pred_check_branch
      %3616 = sbr.rel (0) target = $region17
    $region16: #{tpu_custom_call.1} parent=1 // pred_region
      _
    $region17: #{tpu_custom_call.1} parent=1 // pred_fallthru
      _
    // Predicated region
    $region18: #{tpu_custom_call.1} parent=1 // pred_check
      _
    $region19: #{tpu_custom_call.1} parent=1 // pred_check_branch
      %3618 = sbr.rel (0) target = $region21
    $region20: #{tpu_custom_call.1} parent=1 // pred_region
      _
    $region21: #{tpu_custom_call.1} parent=1 // pred_fallthru
      _
    // Predicated region
    $region22: #{tpu_custom_call.1} parent=1 // pred_check
      _
    $region23: #{tpu_custom_call.1} parent=1 // pred_check_branch
      %3620 = sbr.rel (0) target = $region25
    $region24: #{tpu_custom_call.1} parent=1 // pred_region
      %s3622 = ssub.s32 8192, 8192
      %3623 = vsyncadd [#allocation3], %s3622
      %s3624 = sshll.u32 [#allocation2], 4
      %s3625 = int_to_ptr.vmem [resolvable:$true] %s3624
      %3630 = dma.vmem_to_hbm [thread:$0]  %s3625, 8192, %s5, [#allocation3], 128, 128, 8
    $region25: #{tpu_custom_call.1} parent=1 // pred_fallthru
      _
    // Predicated region
    $region26: #{tpu_custom_call.1} parent=1 // pred_check
      _
    $region27: #{tpu_custom_call.1} parent=1 // pred_check_branch
      %3632 = sbr.rel (0) target = $region29
    $region28: #{tpu_custom_call.1} parent=1 // pred_region
      _
    $region29: #{tpu_custom_call.1} parent=1 // pred_fallthru
      _
    // Predicated region
    $region30: #{tpu_custom_call.1} parent=1 // pred_check
      _
    $region31: #{tpu_custom_call.1} parent=1 // pred_check_branch
      %3634 = sbr.rel (0) target = $region33
    $region32: #{tpu_custom_call.1} parent=1 // pred_region
      _
    $region33: #{tpu_custom_call.1} parent=1 // pred_fallthru
      _
    // Predicated region
    $region34: #{tpu_custom_call.1} parent=1 // pred_check
      _
    $region35: #{tpu_custom_call.1} parent=1 // pred_check_branch
      %3636 = sbr.rel (0) target = $region37
    $region36: #{tpu_custom_call.1} parent=1 // pred_region
      %3637 = dma.done [#allocation3], 8192
    $region37: #{tpu_custom_call.1} parent=1 // pred_fallthru
      _
    %3638 = vsyncpa [#allocation3], 1

</llo_original>
